<compile_context>
chip_gen: v5e
topology: v5e:2x2
jax: 0.10.0
libtpu: 0.0.40
codegen_flags: <defaults>
</compile_context>

<pallas_src>
import jax
import jax.numpy as jnp
from jax.experimental import pallas as pl
from jax.experimental.pallas import tpu as pltpu


_FULL_UNROLL_MAX_T = 16        # beyond this, use lax.fori_loop(unroll=4)


def _round_up(x, m):
    return ((x + m - 1) // m) * m


# ----------------------------------------------------------------------------
# Fused kernel: L x (bi)LSTM over the (gathered) embeddings -> classifier logits
# ----------------------------------------------------------------------------
def _make_fused_kernel(*, T, Bp, H, num_layers, nd, Cp):
    SH = nd * H          # state width  [h_f | h_b]
    G = 4 * H * nd       # gate slab width (gate-major, direction-interleaved)
    use_fori = T > _FULL_UNROLL_MAX_T

    def kernel(*refs):
        len_ref, x_ref = refs[0], refs[1]
        k = 2 + 3 * num_layers
        clsw_ref, clsb_ref = refs[k], refs[k + 1]
        out_ref = refs[k + 2]
        proj_ref, ybuf_ref = refs[k + 3], refs[k + 4]

        seqlen = len_ref[...]                                   # (Bp,1) i32, hoisted

        # Constant lane maps (hoisted out of all loops).
        if nd == 2:
            state_lane = jax.lax.broadcasted_iota(jnp.int32, (Bp, SH), 1)
            col_lane = jax.lax.broadcasted_iota(jnp.int32, (Bp, G), 1)
            fwd_col = (col_lane % (2 * H)) < H                  # fwd gate columns

        x = x_ref[...]                                          # (T*Bp, E_in) bf16
        h_cat = None

        for layer in range(num_layers):
            base = 2 + 3 * layer
            wih = refs[base][...]                               # (E_in, G) bf16
            wblk = refs[base + 1][...]                          # (SH, G)  bf16 block-diag
            bias = refs[base + 2][...]                          # (1, G)   f32
            last = layer == num_layers - 1

            # Hoisted input projection: one big matmul for all timesteps and
            # both directions, bias folded in, stored bf16 (feedback item 4/5).
            proj_ref[...] = (
                jnp.dot(x, wih, preferred_element_type=jnp.float32) + bias
            ).astype(jnp.bfloat16).reshape(T, Bp, G)

            def step(i, carry):
                h_c, c_c = carry                                # (Bp, SH) f32 each
                tf = i
                tb = T - 1 - i

                # One block-diagonal recurrent matmul for both directions.
                rec = jnp.dot(h_c.astype(jnp.bfloat16), wblk,
                              preferred_element_type=jnp.float32)   # (Bp, G)

                if nd == 2:
                    proj_t = jnp.where(fwd_col, proj_ref[tf], proj_ref[tb])
                    valid = jnp.where(state_lane < H, tf, tb) < seqlen   # (Bp, SH)
                else:
                    proj_t = proj_ref[tf]
                    valid = tf < seqlen                               # (Bp, 1)

                gates = rec + proj_t.astype(jnp.float32)              # (Bp, G)

                # 2 transcendental slab passes instead of 4 per direction.
                sig = jax.nn.sigmoid(gates)
                th = jnp.tanh(gates)
                i_g = sig[:, 0 * SH:1 * SH]
                f_g = sig[:, 1 * SH:2 * SH]
                g_g = th[:, 2 * SH:3 * SH]
                o_g = sig[:, 3 * SH:4 * SH]

                c_new = f_g * c_c + i_g * g_g
                h_new = o_g * jnp.tanh(c_new)
                h_nxt = jnp.where(valid, h_new, h_c)
                c_nxt = jnp.where(valid, c_new, c_c)

                if not last:                                    # bf16 inter-layer acts
                    ybuf_ref[tf, :, 0:H] = h_nxt[:, 0:H].astype(jnp.bfloat16)
                    if nd == 2:
                        ybuf_ref[tb, :, H:2 * H] = h_nxt[:, H:2 * H].astype(jnp.bfloat16)
                return h_nxt, c_nxt

            zeros = jnp.zeros((Bp, SH), jnp.float32)
            carry = (zeros, zeros)
            if use_fori:
                carry = jax.lax.fori_loop(0, T, step, carry, unroll=4)
            else:
                for i in range(T):                              # static T, fully unrolled
                    carry = step(i, carry)
            h_cat = carry[0]

            if not last:
                x = ybuf_ref[...].reshape(T * Bp, SH)           # bf16, next layer input

        # Classifier epilogue: one MXU dot against the pre-permuted weight
        # (rows already match the [h_f | h_b] state layout).
        logits = (jnp.dot(h_cat.astype(jnp.bfloat16), clsw_ref[...],
                          preferred_element_type=jnp.float32) + clsb_ref[...])
        out_ref[...] = logits                                   # (Bp, Cp) lane-dense

    return kernel


# ----------------------------------------------------------------------------
# Parameter construction (mirrors nn.Embedding / nn.LSTM / nn.Linear layouts).
# Gate columns are reordered to gate-major, direction-interleaved:
#   [i_f, i_b, f_f, f_b, g_f, g_b, o_f, o_b]   (each block of width H)
# so in-kernel gate slices are contiguous and match the [h_f | h_b] state layout.
# ----------------------------------------------------------------------------
def init_params(key, vocab, embed_dim, hidden, num_layers, bidirectional,
                num_class):
    nd = 2 if bidirectional else 1
    H = hidden
    Cp = _round_up(num_class, 128)

    def _u(k, shape, scale=0.1):
        return jax.random.uniform(k, shape, jnp.float32, -scale, scale)

    keys = iter(jax.random.split(key, 1 + num_layers * nd * 4 + 2))
    emb = _u(next(keys), (vocab, embed_dim), 1.0)        # stays f32, gathered from HBM

    layers = []
    for layer in range(num_layers):
        in_size = embed_dim if layer == 0 else H * nd
        wih_dirs, whh_dirs, b_dirs = [], [], []
        for _d in range(nd):
            # PyTorch shapes: W_ih (4H, in), W_hh (4H, H), b_ih / b_hh (4H,),
            # gate row order (i, f, g, o).
            w_ih = _u(next(keys), (4 * H, in_size))
            w_hh = _u(next(keys), (4 * H, H))
            b_ih = _u(next(keys), (4 * H,))
            b_hh = _u(next(keys), (4 * H,))
            wih_dirs.append(jnp.transpose(w_ih))          # (in, 4H) gate order i,f,g,o
            whh_dirs.append(jnp.transpose(w_hh))          # (H, 4H)
            b_dirs.append(b_ih + b_hh)                    # (4H,)

        if bidirectional:
            # Fused input projection weight, gate-major / direction-interleaved.
            wih = jnp.stack([w.reshape(in_size, 4, H) for w in wih_dirs],
                            axis=2).reshape(in_size, 8 * H)
            bias = jnp.stack([b.reshape(4, H) for b in b_dirs],
                             axis=1).reshape(1, 8 * H)
            # Block-diagonal recurrent weight: rows 0:H (h_f) feed only fwd gate
            # columns, rows H:2H (h_b) feed only bwd gate columns.
            blk = jnp.zeros((2, H, 4, 2, H), jnp.float32)
            blk = blk.at[0, :, :, 0, :].set(whh_dirs[0].reshape(H, 4, H))
            blk = blk.at[1, :, :, 1, :].set(whh_dirs[1].reshape(H, 4, H))
            wblk = blk.reshape(2 * H, 8 * H)
        else:
            wih = wih_dirs[0]
            bias = b_dirs[0].reshape(1, 4 * H)
            wblk = whh_dirs[0]

        layers.append({"wih": wih.astype(jnp.bfloat16),
                       "wblk": wblk.astype(jnp.bfloat16),
                       "b": bias})

    enc = H * nd
    cls_w = _u(next(keys), (num_class, enc))              # torch Linear (C, D)
    cls_b = _u(next(keys), (num_class,))
    # Reference feature order is cat(h[-1], h[-2]) = [h_bwd | h_fwd]; permute the
    # transposed weight rows so logits = [h_f | h_b] @ W_k in one dot.
    cls_w_t = jnp.transpose(cls_w)                        # (enc, C)
    if bidirectional:
        cls_w_t = jnp.concatenate([cls_w_t[H:], cls_w_t[:H]], axis=0)
    cls_w_p = jnp.zeros((enc, Cp), jnp.float32).at[:, :num_class].set(cls_w_t)
    cls_b_p = jnp.zeros((1, Cp), jnp.float32).at[0, :num_class].set(cls_b)

    return {"emb": emb, "lstm": layers,
            "cls_w": cls_w_p.astype(jnp.bfloat16), "cls_b": cls_b_p,
            "num_class": num_class, "hidden": H}


# ----------------------------------------------------------------------------
# Forward pass: HBM gather for the embedding, one fused pallas_call for the
# encoder + classifier, argmax / CE loss / accuracy on the lane-dense logits.
# ----------------------------------------------------------------------------
def seq_classifier_forward(params, batch, *, num_layers, bidirectional,
                           testing=False):
    nd = 2 if bidirectional else 1
    x_ids = jnp.asarray(batch["text"], jnp.int32)          # (B, T)
    seq_len = jnp.asarray(batch["seq_len"], jnp.int32)     # (B,)
    B, T = x_ids.shape
    H = params["hidden"]
    Cp = params["cls_w"].shape[1]
    num_class = params["num_class"]

    Bp = max(8, _round_up(B, 8))                           # full sublane group
    ids_p = jnp.zeros((Bp, T), jnp.int32).at[:B].set(x_ids)
    ids_tm = jnp.transpose(ids_p).reshape(T * Bp)          # time-major, flat
    # Real gather from the HBM-resident table (O(T*B*E) bytes, no MXU, no table
    # in VMEM), cast to bf16 for the fused input projection.
    x_emb = jnp.take(params["emb"], ids_tm, axis=0).astype(jnp.bfloat16)
    len_col = jnp.zeros((Bp, 1), jnp.int32).at[:B, 0].set(seq_len)

    flat_inputs = [len_col, x_emb]
    for lp in params["lstm"]:
        flat_inputs += [lp["wih"], lp["wblk"], lp["b"]]
    flat_inputs += [params["cls_w"], params["cls_b"]]

    SH = nd * H
    G = 4 * H * nd
    scratch_shapes = [
        pltpu.VMEM((T, Bp, G), jnp.bfloat16),              # fused input projection
        pltpu.VMEM((T, Bp, SH), jnp.bfloat16),             # inter-layer activations
    ]

    # Scoped-VMEM limit sized from the actual footprint (weights + activations
    # + scratch), with headroom; clipped to sane bounds.
    in_out_bytes = sum(int(a.size) * a.dtype.itemsize for a in flat_inputs)
    in_out_bytes += Bp * Cp * 4
    scratch_bytes = (T * Bp * G + T * Bp * SH) * 2
    vmem_limit = int(min(100 << 20,
                         max(16 << 20, 2 * (in_out_bytes + scratch_bytes) + (2 << 20))))

    kernel = _make_fused_kernel(T=T, Bp=Bp, H=H, num_layers=num_layers,
                                nd=nd, Cp=Cp)
    vmem = pl.BlockSpec(memory_space=pltpu.MemorySpace.VMEM)
    out_p = pl.pallas_call(
        kernel,
        out_shape=jax.ShapeDtypeStruct((Bp, Cp), jnp.float32),   # lane-dense logits
        in_specs=[vmem] * len(flat_inputs),
        out_specs=vmem,
        scratch_shapes=scratch_shapes,
        compiler_params=pltpu.CompilerParams(vmem_limit_bytes=vmem_limit),
    )(*flat_inputs)

    # Epilogue in the wrapper (feedback: keep the kernel tail lane-dense).
    out = out_p[:B, :num_class]
    pred = jnp.argmax(out, axis=1).astype(jnp.int32)
    res = {"out": out, "pred": pred}
    if not testing:
        y = jnp.asarray(batch["intent"], jnp.int32)
        lse = jax.scipy.special.logsumexp(out, axis=1)
        tgt = jnp.take_along_axis(out, y[:, None], axis=1)[:, 0]
        res["loss"] = jnp.mean(lse - tgt)                  # nn.CrossEntropyLoss (mean)
        res["ok"] = jnp.sum((pred == y).astype(jnp.int32))
        res["overall"] = B
    return res


# ----------------------------------------------------------------------------
if __name__ == "__main__":
    VOCAB, EMBED, HIDDEN, LAYERS, NUM_CLASS = 20, 32, 32, 2, 8
    BIDIR = True
    B, T = 2, 8

    root = jax.random.PRNGKey(0)
    k_params, k_text, k_intent = jax.random.split(root, 3)
    params = init_params(k_params, VOCAB, EMBED, HIDDEN, LAYERS, BIDIR,
                         NUM_CLASS)

    batch = {
        "text": jax.random.randint(k_text, (B, T), 0, VOCAB, dtype=jnp.int32),
        "seq_len": jnp.array([8, 5], dtype=jnp.int32),     # sorted desc (packed)
        "intent": jax.random.randint(k_intent, (B,), 0, NUM_CLASS,
                                     dtype=jnp.int32),
    }

    res = seq_classifier_forward(params, batch, num_layers=LAYERS,
                                 bidirectional=BIDIR)
    jax.block_until_ready((res["out"], res["pred"], res["loss"], res["ok"]))

    assert res["out"].shape == (B, NUM_CLASS)
    assert res["pred"].shape == (B,)
    assert res["overall"] == B
    assert bool(jnp.all(jnp.isfinite(res["out"])))
    assert bool(jnp.isfinite(res["loss"]))
    assert 0 <= int(res["ok"]) <= B
    print("KERNEL_OK")
</pallas_src>

<mosaic_0001>
module attributes {stable_mosaic.version = 11 : i64} {
  func.func @kernel(%arg0: memref<8x1xi32, #tpu.memory_space<vmem>>, %arg1: memref<64x32xbf16, #tpu.memory_space<vmem>>, %arg2: memref<32x256xbf16, #tpu.memory_space<vmem>>, %arg3: memref<64x256xbf16, #tpu.memory_space<vmem>>, %arg4: memref<1x256xf32, #tpu.memory_space<vmem>>, %arg5: memref<64x256xbf16, #tpu.memory_space<vmem>>, %arg6: memref<64x256xbf16, #tpu.memory_space<vmem>>, %arg7: memref<1x256xf32, #tpu.memory_space<vmem>>, %arg8: memref<64x128xbf16, #tpu.memory_space<vmem>>, %arg9: memref<1x128xf32, #tpu.memory_space<vmem>>, %arg10: memref<8x128xf32, #tpu.memory_space<vmem>>, %arg11: memref<8x8x256xbf16, #tpu.memory_space<vmem>>, %arg12: memref<8x8x64xbf16, #tpu.memory_space<vmem>>) attributes {dimension_semantics = [], scalar_prefetch = 0 : i64, scratch_operands = 2 : i64, tpu.core_type = #tpu.core_type<tc>} {
    %c0 = arith.constant 0 : index
    %c0_0 = arith.constant 0 : index
    %0 = vector.load %arg0[%c0, %c0_0] : memref<8x1xi32, #tpu.memory_space<vmem>>, vector<8x1xi32>
    %1 = tpu.iota {dimensions = array<i32: 1>} : vector<8x64xi32>
    %2 = tpu.iota {dimensions = array<i32: 1>} : vector<8x256xi32>
    %c64_i32 = arith.constant 64 : i32
    %c0_i32 = arith.constant 0 : i32
    %3 = arith.cmpi eq, %c64_i32, %c0_i32 : i32
    %c1_i32 = arith.constant 1 : i32
    %4 = arith.select %3, %c1_i32, %c64_i32 : i32
    %5 = vector.broadcast %4 : i32 to vector<8x256xi32>
    %6 = arith.remsi %2, %5 : vector<8x256xi32>
    %c0_i32_1 = arith.constant 0 : i32
    %7 = vector.broadcast %c0_i32_1 : i32 to vector<8x256xi32>
    %8 = arith.cmpi ne, %6, %7 : vector<8x256xi32>
    %c0_i32_2 = arith.constant 0 : i32
    %9 = vector.broadcast %c0_i32_2 : i32 to vector<8x256xi32>
    %10 = arith.cmpi slt, %6, %9 : vector<8x256xi32>
    %c0_i32_3 = arith.constant 0 : i32
    %11 = arith.cmpi slt, %4, %c0_i32_3 : i32
    %12 = vector.broadcast %11 : i1 to vector<8x256xi1>
    %13 = vector.broadcast %12 : vector<8x256xi1> to vector<8x256xi1>
    %14 = arith.xori %10, %13 : vector<8x256xi1>
    %15 = arith.andi %14, %8 : vector<8x256xi1>
    %16 = vector.broadcast %4 : i32 to vector<8x256xi32>
    %17 = arith.addi %6, %16 : vector<8x256xi32>
    %18 = arith.select %15, %17, %6 : vector<8x256xi1>, vector<8x256xi32>
    %c32_i32 = arith.constant 32 : i32
    %19 = vector.broadcast %c32_i32 : i32 to vector<8x256xi32>
    %20 = arith.cmpi slt, %18, %19 : vector<8x256xi32>
    %c0_4 = arith.constant 0 : index
    %c0_5 = arith.constant 0 : index
    %21 = vector.load %arg1[%c0_4, %c0_5] : memref<64x32xbf16, #tpu.memory_space<vmem>>, vector<64x32xbf16>
    %c0_6 = arith.constant 0 : index
    %c0_7 = arith.constant 0 : index
    %22 = vector.load %arg2[%c0_6, %c0_7] : memref<32x256xbf16, #tpu.memory_space<vmem>>, vector<32x256xbf16>
    %c0_8 = arith.constant 0 : index
    %c0_9 = arith.constant 0 : index
    %23 = vector.load %arg3[%c0_8, %c0_9] : memref<64x256xbf16, #tpu.memory_space<vmem>>, vector<64x256xbf16>
    %c0_10 = arith.constant 0 : index
    %c0_11 = arith.constant 0 : index
    %24 = vector.load %arg4[%c0_10, %c0_11] : memref<1x256xf32, #tpu.memory_space<vmem>>, vector<1x256xf32>
    %cst = arith.constant dense<0.000000e+00> : vector<64x256xf32>
    %25 = tpu.matmul %21, %22, %cst {dimension_numbers = #tpu.dot_dimension_numbers<[1], [0], [0], [1], [0, 0, 1, 1], [], []>} : vector<64x32xbf16>, vector<32x256xbf16>, vector<64x256xf32> -> vector<64x256xf32>
    %26 = vector.broadcast %24 : vector<1x256xf32> to vector<64x256xf32>
    %27 = arith.addf %25, %26 : vector<64x256xf32>
    %28 = arith.truncf %27 : vector<64x256xf32> to vector<64x256xbf16>
    %29 = vector.shape_cast %28 : vector<64x256xbf16> to vector<8x8x256xbf16>
    %c0_12 = arith.constant 0 : index
    %c0_13 = arith.constant 0 : index
    %c0_14 = arith.constant 0 : index
    %30 = vector.load %arg11[%c0_12, %c0_13, %c0_14] : memref<8x8x256xbf16, #tpu.memory_space<vmem>>, vector<8x8x256xbf16>
    tpu.vector_store %arg11[%c0_12, %c0_13, %c0_14], %29 {strides = array<i32>} : memref<8x8x256xbf16, #tpu.memory_space<vmem>>, vector<8x8x256xbf16>,
    %cst_15 = arith.constant 0.000000e+00 : f32
    %31 = vector.broadcast %cst_15 : f32 to vector<8x64xf32>
    %32 = arith.truncf %31 : vector<8x64xf32> to vector<8x64xbf16>
    %cst_16 = arith.constant dense<0.000000e+00> : vector<8x256xf32>
    %33 = tpu.matmul %32, %23, %cst_16 {dimension_numbers = #tpu.dot_dimension_numbers<[1], [0], [0], [1], [0, 0, 1, 1], [], []>} : vector<8x64xbf16>, vector<64x256xbf16>, vector<8x256xf32> -> vector<8x256xf32>
    %c0_17 = arith.constant 0 : index
    %c0_18 = arith.constant 0 : index
    %c0_19 = arith.constant 0 : index
    %34 = vector.load %arg11[%c0_17, %c0_18, %c0_19] : memref<8x8x256xbf16, #tpu.memory_space<vmem>>, vector<1x8x256xbf16>
    %35 = vector.shape_cast %34 : vector<1x8x256xbf16> to vector<8x256xbf16>
    %c7 = arith.constant 7 : index
    %c0_20 = arith.constant 0 : index
    %c0_21 = arith.constant 0 : index
    %36 = vector.load %arg11[%c7, %c0_20, %c0_21] : memref<8x8x256xbf16, #tpu.memory_space<vmem>>, vector<1x8x256xbf16>
    %37 = vector.shape_cast %36 : vector<1x8x256xbf16> to vector<8x256xbf16>
    %38 = arith.select %20, %35, %37 : vector<8x256xi1>, vector<8x256xbf16>
    %c32_i32_22 = arith.constant 32 : i32
    %39 = vector.broadcast %c32_i32_22 : i32 to vector<8x64xi32>
    %40 = arith.cmpi slt, %1, %39 : vector<8x64xi32>
    %c0_i32_23 = arith.constant 0 : i32
    %c7_i32 = arith.constant 7 : i32
    %41 = vector.broadcast %c0_i32_23 : i32 to vector<8x64xi32>
    %42 = vector.broadcast %c7_i32 : i32 to vector<8x64xi32>
    %43 = arith.select %40, %41, %42 : vector<8x64xi1>, vector<8x64xi32>
    %44 = vector.broadcast %0 : vector<8x1xi32> to vector<8x64xi32>
    %45 = arith.cmpi slt, %43, %44 : vector<8x64xi32>
    %46 = arith.extf %38 : vector<8x256xbf16> to vector<8x256xf32>
    %47 = arith.addf %33, %46 : vector<8x256xf32>
    %48 = arith.negf %47 : vector<8x256xf32>
    %49 = math.exp %48 : vector<8x256xf32>
    %cst_24 = arith.constant 1.000000e+00 : f32
    %50 = vector.broadcast %cst_24 : f32 to vector<8x256xf32>
    %51 = arith.addf %50, %49 : vector<8x256xf32>
    %52 = arith.divf %50, %51 : vector<8x256xf32>
    %53 = math.tanh %47 : vector<8x256xf32>
    %54 = vector.extract_strided_slice %52 {offsets = [0, 0], sizes = [8, 64], strides = [1, 1]} : vector<8x256xf32> to vector<8x64xf32>
    %55 = vector.extract_strided_slice %52 {offsets = [0, 64], sizes = [8, 64], strides = [1, 1]} : vector<8x256xf32> to vector<8x64xf32>
    %56 = vector.extract_strided_slice %53 {offsets = [0, 128], sizes = [8, 64], strides = [1, 1]} : vector<8x256xf32> to vector<8x64xf32>
    %57 = vector.extract_strided_slice %52 {offsets = [0, 192], sizes = [8, 64], strides = [1, 1]} : vector<8x256xf32> to vector<8x64xf32>
    %58 = arith.mulf %55, %31 : vector<8x64xf32>
    %59 = arith.mulf %54, %56 : vector<8x64xf32>
    %60 = arith.addf %58, %59 : vector<8x64xf32>
    %61 = math.tanh %60 : vector<8x64xf32>
    %62 = arith.mulf %57, %61 : vector<8x64xf32>
    %63 = arith.select %45, %62, %31 : vector<8x64xi1>, vector<8x64xf32>
    %64 = arith.select %45, %60, %31 : vector<8x64xi1>, vector<8x64xf32>
    %65 = vector.extract_strided_slice %63 {offsets = [0, 0], sizes = [8, 32], strides = [1, 1]} : vector<8x64xf32> to vector<8x32xf32>
    %66 = arith.truncf %65 : vector<8x32xf32> to vector<8x32xbf16>
    %c0_25 = arith.constant 0 : index
    %c0_26 = arith.constant 0 : index
    %c0_27 = arith.constant 0 : index
    %67 = vector.load %arg12[%c0_25, %c0_26, %c0_27] : memref<8x8x64xbf16, #tpu.memory_space<vmem>>, vector<1x8x32xbf16>
    %68 = vector.shape_cast %67 : vector<1x8x32xbf16> to vector<8x32xbf16>
    %69 = vector.shape_cast %66 : vector<8x32xbf16> to vector<1x8x32xbf16>
    tpu.vector_store %arg12[%c0_25, %c0_26, %c0_27], %69 {strides = array<i32>} : memref<8x8x64xbf16, #tpu.memory_space<vmem>>, vector<1x8x32xbf16>,
    %70 = vector.extract_strided_slice %63 {offsets = [0, 32], sizes = [8, 32], strides = [1, 1]} : vector<8x64xf32> to vector<8x32xf32>
    %71 = arith.truncf %70 : vector<8x32xf32> to vector<8x32xbf16>
    %c7_28 = arith.constant 7 : index
    %c0_29 = arith.constant 0 : index
    %c32 = arith.constant 32 : index
    %72 = vector.load %arg12[%c7_28, %c0_29, %c32] : memref<8x8x64xbf16, #tpu.memory_space<vmem>>, vector<1x8x32xbf16>
    %73 = vector.shape_cast %72 : vector<1x8x32xbf16> to vector<8x32xbf16>
    %74 = vector.shape_cast %71 : vector<8x32xbf16> to vector<1x8x32xbf16>
    tpu.vector_store %arg12[%c7_28, %c0_29, %c32], %74 {strides = array<i32>} : memref<8x8x64xbf16, #tpu.memory_space<vmem>>, vector<1x8x32xbf16>,
    %75 = arith.truncf %63 : vector<8x64xf32> to vector<8x64xbf16>
    %cst_30 = arith.constant dense<0.000000e+00> : vector<8x256xf32>
    %76 = tpu.matmul %75, %23, %cst_30 {dimension_numbers = #tpu.dot_dimension_numbers<[1], [0], [0], [1], [0, 0, 1, 1], [], []>} : vector<8x64xbf16>, vector<64x256xbf16>, vector<8x256xf32> -> vector<8x256xf32>
    %c1 = arith.constant 1 : index
    %c0_31 = arith.constant 0 : index
    %c0_32 = arith.constant 0 : index
    %77 = vector.load %arg11[%c1, %c0_31, %c0_32] : memref<8x8x256xbf16, #tpu.memory_space<vmem>>, vector<1x8x256xbf16>
    %78 = vector.shape_cast %77 : vector<1x8x256xbf16> to vector<8x256xbf16>
    %c6 = arith.constant 6 : index
    %c0_33 = arith.constant 0 : index
    %c0_34 = arith.constant 0 : index
    %79 = vector.load %arg11[%c6, %c0_33, %c0_34] : memref<8x8x256xbf16, #tpu.memory_space<vmem>>, vector<1x8x256xbf16>
    %80 = vector.shape_cast %79 : vector<1x8x256xbf16> to vector<8x256xbf16>
    %81 = arith.select %20, %78, %80 : vector<8x256xi1>, vector<8x256xbf16>
    %c32_i32_35 = arith.constant 32 : i32
    %82 = vector.broadcast %c32_i32_35 : i32 to vector<8x64xi32>
    %83 = arith.cmpi slt, %1, %82 : vector<8x64xi32>
    %c1_i32_36 = arith.constant 1 : i32
    %c6_i32 = arith.constant 6 : i32
    %84 = vector.broadcast %c1_i32_36 : i32 to vector<8x64xi32>
    %85 = vector.broadcast %c6_i32 : i32 to vector<8x64xi32>
    %86 = arith.select %83, %84, %85 : vector<8x64xi1>, vector<8x64xi32>
    %87 = vector.broadcast %0 : vector<8x1xi32> to vector<8x64xi32>
    %88 = arith.cmpi slt, %86, %87 : vector<8x64xi32>
    %89 = arith.extf %81 : vector<8x256xbf16> to vector<8x256xf32>
    %90 = arith.addf %76, %89 : vector<8x256xf32>
    %91 = arith.negf %90 : vector<8x256xf32>
    %92 = math.exp %91 : vector<8x256xf32>
    %cst_37 = arith.constant 1.000000e+00 : f32
    %93 = vector.broadcast %cst_37 : f32 to vector<8x256xf32>
    %94 = arith.addf %93, %92 : vector<8x256xf32>
    %95 = arith.divf %93, %94 : vector<8x256xf32>
    %96 = math.tanh %90 : vector<8x256xf32>
    %97 = vector.extract_strided_slice %95 {offsets = [0, 0], sizes = [8, 64], strides = [1, 1]} : vector<8x256xf32> to vector<8x64xf32>
    %98 = vector.extract_strided_slice %95 {offsets = [0, 64], sizes = [8, 64], strides = [1, 1]} : vector<8x256xf32> to vector<8x64xf32>
    %99 = vector.extract_strided_slice %96 {offsets = [0, 128], sizes = [8, 64], strides = [1, 1]} : vector<8x256xf32> to vector<8x64xf32>
    %100 = vector.extract_strided_slice %95 {offsets = [0, 192], sizes = [8, 64], strides = [1, 1]} : vector<8x256xf32> to vector<8x64xf32>
    %101 = arith.mulf %98, %64 : vector<8x64xf32>
    %102 = arith.mulf %97, %99 : vector<8x64xf32>
    %103 = arith.addf %101, %102 : vector<8x64xf32>
    %104 = math.tanh %103 : vector<8x64xf32>
    %105 = arith.mulf %100, %104 : vector<8x64xf32>
    %106 = arith.select %88, %105, %63 : vector<8x64xi1>, vector<8x64xf32>
    %107 = arith.select %88, %103, %64 : vector<8x64xi1>, vector<8x64xf32>
    %108 = vector.extract_strided_slice %106 {offsets = [0, 0], sizes = [8, 32], strides = [1, 1]} : vector<8x64xf32> to vector<8x32xf32>
    %109 = arith.truncf %108 : vector<8x32xf32> to vector<8x32xbf16>
    %c1_38 = arith.constant 1 : index
    %c0_39 = arith.constant 0 : index
    %c0_40 = arith.constant 0 : index
    %110 = vector.load %arg12[%c1_38, %c0_39, %c0_40] : memref<8x8x64xbf16, #tpu.memory_space<vmem>>, vector<1x8x32xbf16>
    %111 = vector.shape_cast %110 : vector<1x8x32xbf16> to vector<8x32xbf16>
    %112 = vector.shape_cast %109 : vector<8x32xbf16> to vector<1x8x32xbf16>
    tpu.vector_store %arg12[%c1_38, %c0_39, %c0_40], %112 {strides = array<i32>} : memref<8x8x64xbf16, #tpu.memory_space<vmem>>, vector<1x8x32xbf16>,
    %113 = vector.extract_strided_slice %106 {offsets = [0, 32], sizes = [8, 32], strides = [1, 1]} : vector<8x64xf32> to vector<8x32xf32>
    %114 = arith.truncf %113 : vector<8x32xf32> to vector<8x32xbf16>
    %c6_41 = arith.constant 6 : index
    %c0_42 = arith.constant 0 : index
    %c32_43 = arith.constant 32 : index
    %115 = vector.load %arg12[%c6_41, %c0_42, %c32_43] : memref<8x8x64xbf16, #tpu.memory_space<vmem>>, vector<1x8x32xbf16>
    %116 = vector.shape_cast %115 : vector<1x8x32xbf16> to vector<8x32xbf16>
    %117 = vector.shape_cast %114 : vector<8x32xbf16> to vector<1x8x32xbf16>
    tpu.vector_store %arg12[%c6_41, %c0_42, %c32_43], %117 {strides = array<i32>} : memref<8x8x64xbf16, #tpu.memory_space<vmem>>, vector<1x8x32xbf16>,
    %118 = arith.truncf %106 : vector<8x64xf32> to vector<8x64xbf16>
    %cst_44 = arith.constant dense<0.000000e+00> : vector<8x256xf32>
    %119 = tpu.matmul %118, %23, %cst_44 {dimension_numbers = #tpu.dot_dimension_numbers<[1], [0], [0], [1], [0, 0, 1, 1], [], []>} : vector<8x64xbf16>, vector<64x256xbf16>, vector<8x256xf32> -> vector<8x256xf32>
    %c2 = arith.constant 2 : index
    %c0_45 = arith.constant 0 : index
    %c0_46 = arith.constant 0 : index
    %120 = vector.load %arg11[%c2, %c0_45, %c0_46] : memref<8x8x256xbf16, #tpu.memory_space<vmem>>, vector<1x8x256xbf16>
    %121 = vector.shape_cast %120 : vector<1x8x256xbf16> to vector<8x256xbf16>
    %c5 = arith.constant 5 : index
    %c0_47 = arith.constant 0 : index
    %c0_48 = arith.constant 0 : index
    %122 = vector.load %arg11[%c5, %c0_47, %c0_48] : memref<8x8x256xbf16, #tpu.memory_space<vmem>>, vector<1x8x256xbf16>
    %123 = vector.shape_cast %122 : vector<1x8x256xbf16> to vector<8x256xbf16>
    %124 = arith.select %20, %121, %123 : vector<8x256xi1>, vector<8x256xbf16>
    %c32_i32_49 = arith.constant 32 : i32
    %125 = vector.broadcast %c32_i32_49 : i32 to vector<8x64xi32>
    %126 = arith.cmpi slt, %1, %125 : vector<8x64xi32>
    %c2_i32 = arith.constant 2 : i32
    %c5_i32 = arith.constant 5 : i32
    %127 = vector.broadcast %c2_i32 : i32 to vector<8x64xi32>
    %128 = vector.broadcast %c5_i32 : i32 to vector<8x64xi32>
    %129 = arith.select %126, %127, %128 : vector<8x64xi1>, vector<8x64xi32>
    %130 = vector.broadcast %0 : vector<8x1xi32> to vector<8x64xi32>
    %131 = arith.cmpi slt, %129, %130 : vector<8x64xi32>
    %132 = arith.extf %124 : vector<8x256xbf16> to vector<8x256xf32>
    %133 = arith.addf %119, %132 : vector<8x256xf32>
    %134 = arith.negf %133 : vector<8x256xf32>
    %135 = math.exp %134 : vector<8x256xf32>
    %cst_50 = arith.constant 1.000000e+00 : f32
    %136 = vector.broadcast %cst_50 : f32 to vector<8x256xf32>
    %137 = arith.addf %136, %135 : vector<8x256xf32>
    %138 = arith.divf %136, %137 : vector<8x256xf32>
    %139 = math.tanh %133 : vector<8x256xf32>
    %140 = vector.extract_strided_slice %138 {offsets = [0, 0], sizes = [8, 64], strides = [1, 1]} : vector<8x256xf32> to vector<8x64xf32>
    %141 = vector.extract_strided_slice %138 {offsets = [0, 64], sizes = [8, 64], strides = [1, 1]} : vector<8x256xf32> to vector<8x64xf32>
    %142 = vector.extract_strided_slice %139 {offsets = [0, 128], sizes = [8, 64], strides = [1, 1]} : vector<8x256xf32> to vector<8x64xf32>
    %143 = vector.extract_strided_slice %138 {offsets = [0, 192], sizes = [8, 64], strides = [1, 1]} : vector<8x256xf32> to vector<8x64xf32>
    %144 = arith.mulf %141, %107 : vector<8x64xf32>
    %145 = arith.mulf %140, %142 : vector<8x64xf32>
    %146 = arith.addf %144, %145 : vector<8x64xf32>
    %147 = math.tanh %146 : vector<8x64xf32>
    %148 = arith.mulf %143, %147 : vector<8x64xf32>
    %149 = arith.select %131, %148, %106 : vector<8x64xi1>, vector<8x64xf32>
    %150 = arith.select %131, %146, %107 : vector<8x64xi1>, vector<8x64xf32>
    %151 = vector.extract_strided_slice %149 {offsets = [0, 0], sizes = [8, 32], strides = [1, 1]} : vector<8x64xf32> to vector<8x32xf32>
    %152 = arith.truncf %151 : vector<8x32xf32> to vector<8x32xbf16>
    %c2_51 = arith.constant 2 : index
    %c0_52 = arith.constant 0 : index
    %c0_53 = arith.constant 0 : index
    %153 = vector.load %arg12[%c2_51, %c0_52, %c0_53] : memref<8x8x64xbf16, #tpu.memory_space<vmem>>, vector<1x8x32xbf16>
    %154 = vector.shape_cast %153 : vector<1x8x32xbf16> to vector<8x32xbf16>
    %155 = vector.shape_cast %152 : vector<8x32xbf16> to vector<1x8x32xbf16>
    tpu.vector_store %arg12[%c2_51, %c0_52, %c0_53], %155 {strides = array<i32>} : memref<8x8x64xbf16, #tpu.memory_space<vmem>>, vector<1x8x32xbf16>,
    %156 = vector.extract_strided_slice %149 {offsets = [0, 32], sizes = [8, 32], strides = [1, 1]} : vector<8x64xf32> to vector<8x32xf32>
    %157 = arith.truncf %156 : vector<8x32xf32> to vector<8x32xbf16>
    %c5_54 = arith.constant 5 : index
    %c0_55 = arith.constant 0 : index
    %c32_56 = arith.constant 32 : index
    %158 = vector.load %arg12[%c5_54, %c0_55, %c32_56] : memref<8x8x64xbf16, #tpu.memory_space<vmem>>, vector<1x8x32xbf16>
    %159 = vector.shape_cast %158 : vector<1x8x32xbf16> to vector<8x32xbf16>
    %160 = vector.shape_cast %157 : vector<8x32xbf16> to vector<1x8x32xbf16>
    tpu.vector_store %arg12[%c5_54, %c0_55, %c32_56], %160 {strides = array<i32>} : memref<8x8x64xbf16, #tpu.memory_space<vmem>>, vector<1x8x32xbf16>,
    %161 = arith.truncf %149 : vector<8x64xf32> to vector<8x64xbf16>
    %cst_57 = arith.constant dense<0.000000e+00> : vector<8x256xf32>
    %162 = tpu.matmul %161, %23, %cst_57 {dimension_numbers = #tpu.dot_dimension_numbers<[1], [0], [0], [1], [0, 0, 1, 1], [], []>} : vector<8x64xbf16>, vector<64x256xbf16>, vector<8x256xf32> -> vector<8x256xf32>
    %c3 = arith.constant 3 : index
    %c0_58 = arith.constant 0 : index
    %c0_59 = arith.constant 0 : index
    %163 = vector.load %arg11[%c3, %c0_58, %c0_59] : memref<8x8x256xbf16, #tpu.memory_space<vmem>>, vector<1x8x256xbf16>
    %164 = vector.shape_cast %163 : vector<1x8x256xbf16> to vector<8x256xbf16>
    %c4 = arith.constant 4 : index
    %c0_60 = arith.constant 0 : index
    %c0_61 = arith.constant 0 : index
    %165 = vector.load %arg11[%c4, %c0_60, %c0_61] : memref<8x8x256xbf16, #tpu.memory_space<vmem>>, vector<1x8x256xbf16>
    %166 = vector.shape_cast %165 : vector<1x8x256xbf16> to vector<8x256xbf16>
    %167 = arith.select %20, %164, %166 : vector<8x256xi1>, vector<8x256xbf16>
    %c32_i32_62 = arith.constant 32 : i32
    %168 = vector.broadcast %c32_i32_62 : i32 to vector<8x64xi32>
    %169 = arith.cmpi slt, %1, %168 : vector<8x64xi32>
    %c3_i32 = arith.constant 3 : i32
    %c4_i32 = arith.constant 4 : i32
    %170 = vector.broadcast %c3_i32 : i32 to vector<8x64xi32>
    %171 = vector.broadcast %c4_i32 : i32 to vector<8x64xi32>
    %172 = arith.select %169, %170, %171 : vector<8x64xi1>, vector<8x64xi32>
    %173 = vector.broadcast %0 : vector<8x1xi32> to vector<8x64xi32>
    %174 = arith.cmpi slt, %172, %173 : vector<8x64xi32>
    %175 = arith.extf %167 : vector<8x256xbf16> to vector<8x256xf32>
    %176 = arith.addf %162, %175 : vector<8x256xf32>
    %177 = arith.negf %176 : vector<8x256xf32>
    %178 = math.exp %177 : vector<8x256xf32>
    %cst_63 = arith.constant 1.000000e+00 : f32
    %179 = vector.broadcast %cst_63 : f32 to vector<8x256xf32>
    %180 = arith.addf %179, %178 : vector<8x256xf32>
    %181 = arith.divf %179, %180 : vector<8x256xf32>
    %182 = math.tanh %176 : vector<8x256xf32>
    %183 = vector.extract_strided_slice %181 {offsets = [0, 0], sizes = [8, 64], strides = [1, 1]} : vector<8x256xf32> to vector<8x64xf32>
    %184 = vector.extract_strided_slice %181 {offsets = [0, 64], sizes = [8, 64], strides = [1, 1]} : vector<8x256xf32> to vector<8x64xf32>
    %185 = vector.extract_strided_slice %182 {offsets = [0, 128], sizes = [8, 64], strides = [1, 1]} : vector<8x256xf32> to vector<8x64xf32>
    %186 = vector.extract_strided_slice %181 {offsets = [0, 192], sizes = [8, 64], strides = [1, 1]} : vector<8x256xf32> to vector<8x64xf32>
    %187 = arith.mulf %184, %150 : vector<8x64xf32>
    %188 = arith.mulf %183, %185 : vector<8x64xf32>
    %189 = arith.addf %187, %188 : vector<8x64xf32>
    %190 = math.tanh %189 : vector<8x64xf32>
    %191 = arith.mulf %186, %190 : vector<8x64xf32>
    %192 = arith.select %174, %191, %149 : vector<8x64xi1>, vector<8x64xf32>
    %193 = arith.select %174, %189, %150 : vector<8x64xi1>, vector<8x64xf32>
    %194 = vector.extract_strided_slice %192 {offsets = [0, 0], sizes = [8, 32], strides = [1, 1]} : vector<8x64xf32> to vector<8x32xf32>
    %195 = arith.truncf %194 : vector<8x32xf32> to vector<8x32xbf16>
    %c3_64 = arith.constant 3 : index
    %c0_65 = arith.constant 0 : index
    %c0_66 = arith.constant 0 : index
    %196 = vector.load %arg12[%c3_64, %c0_65, %c0_66] : memref<8x8x64xbf16, #tpu.memory_space<vmem>>, vector<1x8x32xbf16>
    %197 = vector.shape_cast %196 : vector<1x8x32xbf16> to vector<8x32xbf16>
    %198 = vector.shape_cast %195 : vector<8x32xbf16> to vector<1x8x32xbf16>
    tpu.vector_store %arg12[%c3_64, %c0_65, %c0_66], %198 {strides = array<i32>} : memref<8x8x64xbf16, #tpu.memory_space<vmem>>, vector<1x8x32xbf16>,
    %199 = vector.extract_strided_slice %192 {offsets = [0, 32], sizes = [8, 32], strides = [1, 1]} : vector<8x64xf32> to vector<8x32xf32>
    %200 = arith.truncf %199 : vector<8x32xf32> to vector<8x32xbf16>
    %c4_67 = arith.constant 4 : index
    %c0_68 = arith.constant 0 : index
    %c32_69 = arith.constant 32 : index
    %201 = vector.load %arg12[%c4_67, %c0_68, %c32_69] : memref<8x8x64xbf16, #tpu.memory_space<vmem>>, vector<1x8x32xbf16>
    %202 = vector.shape_cast %201 : vector<1x8x32xbf16> to vector<8x32xbf16>
    %203 = vector.shape_cast %200 : vector<8x32xbf16> to vector<1x8x32xbf16>
    tpu.vector_store %arg12[%c4_67, %c0_68, %c32_69], %203 {strides = array<i32>} : memref<8x8x64xbf16, #tpu.memory_space<vmem>>, vector<1x8x32xbf16>,
    %204 = arith.truncf %192 : vector<8x64xf32> to vector<8x64xbf16>
    %cst_70 = arith.constant dense<0.000000e+00> : vector<8x256xf32>
    %205 = tpu.matmul %204, %23, %cst_70 {dimension_numbers = #tpu.dot_dimension_numbers<[1], [0], [0], [1], [0, 0, 1, 1], [], []>} : vector<8x64xbf16>, vector<64x256xbf16>, vector<8x256xf32> -> vector<8x256xf32>
    %c4_71 = arith.constant 4 : index
    %c0_72 = arith.constant 0 : index
    %c0_73 = arith.constant 0 : index
    %206 = vector.load %arg11[%c4_71, %c0_72, %c0_73] : memref<8x8x256xbf16, #tpu.memory_space<vmem>>, vector<1x8x256xbf16>
    %207 = vector.shape_cast %206 : vector<1x8x256xbf16> to vector<8x256xbf16>
    %c3_74 = arith.constant 3 : index
    %c0_75 = arith.constant 0 : index
    %c0_76 = arith.constant 0 : index
    %208 = vector.load %arg11[%c3_74, %c0_75, %c0_76] : memref<8x8x256xbf16, #tpu.memory_space<vmem>>, vector<1x8x256xbf16>
    %209 = vector.shape_cast %208 : vector<1x8x256xbf16> to vector<8x256xbf16>
    %210 = arith.select %20, %207, %209 : vector<8x256xi1>, vector<8x256xbf16>
    %c32_i32_77 = arith.constant 32 : i32
    %211 = vector.broadcast %c32_i32_77 : i32 to vector<8x64xi32>
    %212 = arith.cmpi slt, %1, %211 : vector<8x64xi32>
    %c4_i32_78 = arith.constant 4 : i32
    %c3_i32_79 = arith.constant 3 : i32
    %213 = vector.broadcast %c4_i32_78 : i32 to vector<8x64xi32>
    %214 = vector.broadcast %c3_i32_79 : i32 to vector<8x64xi32>
    %215 = arith.select %212, %213, %214 : vector<8x64xi1>, vector<8x64xi32>
    %216 = vector.broadcast %0 : vector<8x1xi32> to vector<8x64xi32>
    %217 = arith.cmpi slt, %215, %216 : vector<8x64xi32>
    %218 = arith.extf %210 : vector<8x256xbf16> to vector<8x256xf32>
    %219 = arith.addf %205, %218 : vector<8x256xf32>
    %220 = arith.negf %219 : vector<8x256xf32>
    %221 = math.exp %220 : vector<8x256xf32>
    %cst_80 = arith.constant 1.000000e+00 : f32
    %222 = vector.broadcast %cst_80 : f32 to vector<8x256xf32>
    %223 = arith.addf %222, %221 : vector<8x256xf32>
    %224 = arith.divf %222, %223 : vector<8x256xf32>
    %225 = math.tanh %219 : vector<8x256xf32>
    %226 = vector.extract_strided_slice %224 {offsets = [0, 0], sizes = [8, 64], strides = [1, 1]} : vector<8x256xf32> to vector<8x64xf32>
    %227 = vector.extract_strided_slice %224 {offsets = [0, 64], sizes = [8, 64], strides = [1, 1]} : vector<8x256xf32> to vector<8x64xf32>
    %228 = vector.extract_strided_slice %225 {offsets = [0, 128], sizes = [8, 64], strides = [1, 1]} : vector<8x256xf32> to vector<8x64xf32>
    %229 = vector.extract_strided_slice %224 {offsets = [0, 192], sizes = [8, 64], strides = [1, 1]} : vector<8x256xf32> to vector<8x64xf32>
    %230 = arith.mulf %227, %193 : vector<8x64xf32>
    %231 = arith.mulf %226, %228 : vector<8x64xf32>
    %232 = arith.addf %230, %231 : vector<8x64xf32>
    %233 = math.tanh %232 : vector<8x64xf32>
    %234 = arith.mulf %229, %233 : vector<8x64xf32>
    %235 = arith.select %217, %234, %192 : vector<8x64xi1>, vector<8x64xf32>
    %236 = arith.select %217, %232, %193 : vector<8x64xi1>, vector<8x64xf32>
    %237 = vector.extract_strided_slice %235 {offsets = [0, 0], sizes = [8, 32], strides = [1, 1]} : vector<8x64xf32> to vector<8x32xf32>
    %238 = arith.truncf %237 : vector<8x32xf32> to vector<8x32xbf16>
    %c4_81 = arith.constant 4 : index
    %c0_82 = arith.constant 0 : index
    %c0_83 = arith.constant 0 : index
    %239 = vector.load %arg12[%c4_81, %c0_82, %c0_83] : memref<8x8x64xbf16, #tpu.memory_space<vmem>>, vector<1x8x32xbf16>
    %240 = vector.shape_cast %239 : vector<1x8x32xbf16> to vector<8x32xbf16>
    %241 = vector.shape_cast %238 : vector<8x32xbf16> to vector<1x8x32xbf16>
    tpu.vector_store %arg12[%c4_81, %c0_82, %c0_83], %241 {strides = array<i32>} : memref<8x8x64xbf16, #tpu.memory_space<vmem>>, vector<1x8x32xbf16>,
    %242 = vector.extract_strided_slice %235 {offsets = [0, 32], sizes = [8, 32], strides = [1, 1]} : vector<8x64xf32> to vector<8x32xf32>
    %243 = arith.truncf %242 : vector<8x32xf32> to vector<8x32xbf16>
    %c3_84 = arith.constant 3 : index
    %c0_85 = arith.constant 0 : index
    %c32_86 = arith.constant 32 : index
    %244 = vector.load %arg12[%c3_84, %c0_85, %c32_86] : memref<8x8x64xbf16, #tpu.memory_space<vmem>>, vector<1x8x32xbf16>
    %245 = vector.shape_cast %244 : vector<1x8x32xbf16> to vector<8x32xbf16>
    %246 = vector.shape_cast %243 : vector<8x32xbf16> to vector<1x8x32xbf16>
    tpu.vector_store %arg12[%c3_84, %c0_85, %c32_86], %246 {strides = array<i32>} : memref<8x8x64xbf16, #tpu.memory_space<vmem>>, vector<1x8x32xbf16>,
    %247 = arith.truncf %235 : vector<8x64xf32> to vector<8x64xbf16>
    %cst_87 = arith.constant dense<0.000000e+00> : vector<8x256xf32>
    %248 = tpu.matmul %247, %23, %cst_87 {dimension_numbers = #tpu.dot_dimension_numbers<[1], [0], [0], [1], [0, 0, 1, 1], [], []>} : vector<8x64xbf16>, vector<64x256xbf16>, vector<8x256xf32> -> vector<8x256xf32>
    %c5_88 = arith.constant 5 : index
    %c0_89 = arith.constant 0 : index
    %c0_90 = arith.constant 0 : index
    %249 = vector.load %arg11[%c5_88, %c0_89, %c0_90] : memref<8x8x256xbf16, #tpu.memory_space<vmem>>, vector<1x8x256xbf16>
    %250 = vector.shape_cast %249 : vector<1x8x256xbf16> to vector<8x256xbf16>
    %c2_91 = arith.constant 2 : index
    %c0_92 = arith.constant 0 : index
    %c0_93 = arith.constant 0 : index
    %251 = vector.load %arg11[%c2_91, %c0_92, %c0_93] : memref<8x8x256xbf16, #tpu.memory_space<vmem>>, vector<1x8x256xbf16>
    %252 = vector.shape_cast %251 : vector<1x8x256xbf16> to vector<8x256xbf16>
    %253 = arith.select %20, %250, %252 : vector<8x256xi1>, vector<8x256xbf16>
    %c32_i32_94 = arith.constant 32 : i32
    %254 = vector.broadcast %c32_i32_94 : i32 to vector<8x64xi32>
    %255 = arith.cmpi slt, %1, %254 : vector<8x64xi32>
    %c5_i32_95 = arith.constant 5 : i32
    %c2_i32_96 = arith.constant 2 : i32
    %256 = vector.broadcast %c5_i32_95 : i32 to vector<8x64xi32>
    %257 = vector.broadcast %c2_i32_96 : i32 to vector<8x64xi32>
    %258 = arith.select %255, %256, %257 : vector<8x64xi1>, vector<8x64xi32>
    %259 = vector.broadcast %0 : vector<8x1xi32> to vector<8x64xi32>
    %260 = arith.cmpi slt, %258, %259 : vector<8x64xi32>
    %261 = arith.extf %253 : vector<8x256xbf16> to vector<8x256xf32>
    %262 = arith.addf %248, %261 : vector<8x256xf32>
    %263 = arith.negf %262 : vector<8x256xf32>
    %264 = math.exp %263 : vector<8x256xf32>
    %cst_97 = arith.constant 1.000000e+00 : f32
    %265 = vector.broadcast %cst_97 : f32 to vector<8x256xf32>
    %266 = arith.addf %265, %264 : vector<8x256xf32>
    %267 = arith.divf %265, %266 : vector<8x256xf32>
    %268 = math.tanh %262 : vector<8x256xf32>
    %269 = vector.extract_strided_slice %267 {offsets = [0, 0], sizes = [8, 64], strides = [1, 1]} : vector<8x256xf32> to vector<8x64xf32>
    %270 = vector.extract_strided_slice %267 {offsets = [0, 64], sizes = [8, 64], strides = [1, 1]} : vector<8x256xf32> to vector<8x64xf32>
    %271 = vector.extract_strided_slice %268 {offsets = [0, 128], sizes = [8, 64], strides = [1, 1]} : vector<8x256xf32> to vector<8x64xf32>
    %272 = vector.extract_strided_slice %267 {offsets = [0, 192], sizes = [8, 64], strides = [1, 1]} : vector<8x256xf32> to vector<8x64xf32>
    %273 = arith.mulf %270, %236 : vector<8x64xf32>
    %274 = arith.mulf %269, %271 : vector<8x64xf32>
    %275 = arith.addf %273, %274 : vector<8x64xf32>
    %276 = math.tanh %275 : vector<8x64xf32>
    %277 = arith.mulf %272, %276 : vector<8x64xf32>
    %278 = arith.select %260, %277, %235 : vector<8x64xi1>, vector<8x64xf32>
    %279 = arith.select %260, %275, %236 : vector<8x64xi1>, vector<8x64xf32>
    %280 = vector.extract_strided_slice %278 {offsets = [0, 0], sizes = [8, 32], strides = [1, 1]} : vector<8x64xf32> to vector<8x32xf32>
    %281 = arith.truncf %280 : vector<8x32xf32> to vector<8x32xbf16>
    %c5_98 = arith.constant 5 : index
    %c0_99 = arith.constant 0 : index
    %c0_100 = arith.constant 0 : index
    %282 = vector.load %arg12[%c5_98, %c0_99, %c0_100] : memref<8x8x64xbf16, #tpu.memory_space<vmem>>, vector<1x8x32xbf16>
    %283 = vector.shape_cast %282 : vector<1x8x32xbf16> to vector<8x32xbf16>
    %284 = vector.shape_cast %281 : vector<8x32xbf16> to vector<1x8x32xbf16>
    tpu.vector_store %arg12[%c5_98, %c0_99, %c0_100], %284 {strides = array<i32>} : memref<8x8x64xbf16, #tpu.memory_space<vmem>>, vector<1x8x32xbf16>,
    %285 = vector.extract_strided_slice %278 {offsets = [0, 32], sizes = [8, 32], strides = [1, 1]} : vector<8x64xf32> to vector<8x32xf32>
    %286 = arith.truncf %285 : vector<8x32xf32> to vector<8x32xbf16>
    %c2_101 = arith.constant 2 : index
    %c0_102 = arith.constant 0 : index
    %c32_103 = arith.constant 32 : index
    %287 = vector.load %arg12[%c2_101, %c0_102, %c32_103] : memref<8x8x64xbf16, #tpu.memory_space<vmem>>, vector<1x8x32xbf16>
    %288 = vector.shape_cast %287 : vector<1x8x32xbf16> to vector<8x32xbf16>
    %289 = vector.shape_cast %286 : vector<8x32xbf16> to vector<1x8x32xbf16>
    tpu.vector_store %arg12[%c2_101, %c0_102, %c32_103], %289 {strides = array<i32>} : memref<8x8x64xbf16, #tpu.memory_space<vmem>>, vector<1x8x32xbf16>,
    %290 = arith.truncf %278 : vector<8x64xf32> to vector<8x64xbf16>
    %cst_104 = arith.constant dense<0.000000e+00> : vector<8x256xf32>
    %291 = tpu.matmul %290, %23, %cst_104 {dimension_numbers = #tpu.dot_dimension_numbers<[1], [0], [0], [1], [0, 0, 1, 1], [], []>} : vector<8x64xbf16>, vector<64x256xbf16>, vector<8x256xf32> -> vector<8x256xf32>
    %c6_105 = arith.constant 6 : index
    %c0_106 = arith.constant 0 : index
    %c0_107 = arith.constant 0 : index
    %292 = vector.load %arg11[%c6_105, %c0_106, %c0_107] : memref<8x8x256xbf16, #tpu.memory_space<vmem>>, vector<1x8x256xbf16>
    %293 = vector.shape_cast %292 : vector<1x8x256xbf16> to vector<8x256xbf16>
    %c1_108 = arith.constant 1 : index
    %c0_109 = arith.constant 0 : index
    %c0_110 = arith.constant 0 : index
    %294 = vector.load %arg11[%c1_108, %c0_109, %c0_110] : memref<8x8x256xbf16, #tpu.memory_space<vmem>>, vector<1x8x256xbf16>
    %295 = vector.shape_cast %294 : vector<1x8x256xbf16> to vector<8x256xbf16>
    %296 = arith.select %20, %293, %295 : vector<8x256xi1>, vector<8x256xbf16>
    %c32_i32_111 = arith.constant 32 : i32
    %297 = vector.broadcast %c32_i32_111 : i32 to vector<8x64xi32>
    %298 = arith.cmpi slt, %1, %297 : vector<8x64xi32>
    %c6_i32_112 = arith.constant 6 : i32
    %c1_i32_113 = arith.constant 1 : i32
    %299 = vector.broadcast %c6_i32_112 : i32 to vector<8x64xi32>
    %300 = vector.broadcast %c1_i32_113 : i32 to vector<8x64xi32>
    %301 = arith.select %298, %299, %300 : vector<8x64xi1>, vector<8x64xi32>
    %302 = vector.broadcast %0 : vector<8x1xi32> to vector<8x64xi32>
    %303 = arith.cmpi slt, %301, %302 : vector<8x64xi32>
    %304 = arith.extf %296 : vector<8x256xbf16> to vector<8x256xf32>
    %305 = arith.addf %291, %304 : vector<8x256xf32>
    %306 = arith.negf %305 : vector<8x256xf32>
    %307 = math.exp %306 : vector<8x256xf32>
    %cst_114 = arith.constant 1.000000e+00 : f32
    %308 = vector.broadcast %cst_114 : f32 to vector<8x256xf32>
    %309 = arith.addf %308, %307 : vector<8x256xf32>
    %310 = arith.divf %308, %309 : vector<8x256xf32>
    %311 = math.tanh %305 : vector<8x256xf32>
    %312 = vector.extract_strided_slice %310 {offsets = [0, 0], sizes = [8, 64], strides = [1, 1]} : vector<8x256xf32> to vector<8x64xf32>
    %313 = vector.extract_strided_slice %310 {offsets = [0, 64], sizes = [8, 64], strides = [1, 1]} : vector<8x256xf32> to vector<8x64xf32>
    %314 = vector.extract_strided_slice %311 {offsets = [0, 128], sizes = [8, 64], strides = [1, 1]} : vector<8x256xf32> to vector<8x64xf32>
    %315 = vector.extract_strided_slice %310 {offsets = [0, 192], sizes = [8, 64], strides = [1, 1]} : vector<8x256xf32> to vector<8x64xf32>
    %316 = arith.mulf %313, %279 : vector<8x64xf32>
    %317 = arith.mulf %312, %314 : vector<8x64xf32>
    %318 = arith.addf %316, %317 : vector<8x64xf32>
    %319 = math.tanh %318 : vector<8x64xf32>
    %320 = arith.mulf %315, %319 : vector<8x64xf32>
    %321 = arith.select %303, %320, %278 : vector<8x64xi1>, vector<8x64xf32>
    %322 = arith.select %303, %318, %279 : vector<8x64xi1>, vector<8x64xf32>
    %323 = vector.extract_strided_slice %321 {offsets = [0, 0], sizes = [8, 32], strides = [1, 1]} : vector<8x64xf32> to vector<8x32xf32>
    %324 = arith.truncf %323 : vector<8x32xf32> to vector<8x32xbf16>
    %c6_115 = arith.constant 6 : index
    %c0_116 = arith.constant 0 : index
    %c0_117 = arith.constant 0 : index
    %325 = vector.load %arg12[%c6_115, %c0_116, %c0_117] : memref<8x8x64xbf16, #tpu.memory_space<vmem>>, vector<1x8x32xbf16>
    %326 = vector.shape_cast %325 : vector<1x8x32xbf16> to vector<8x32xbf16>
    %327 = vector.shape_cast %324 : vector<8x32xbf16> to vector<1x8x32xbf16>
    tpu.vector_store %arg12[%c6_115, %c0_116, %c0_117], %327 {strides = array<i32>} : memref<8x8x64xbf16, #tpu.memory_space<vmem>>, vector<1x8x32xbf16>,
    %328 = vector.extract_strided_slice %321 {offsets = [0, 32], sizes = [8, 32], strides = [1, 1]} : vector<8x64xf32> to vector<8x32xf32>
    %329 = arith.truncf %328 : vector<8x32xf32> to vector<8x32xbf16>
    %c1_118 = arith.constant 1 : index
    %c0_119 = arith.constant 0 : index
    %c32_120 = arith.constant 32 : index
    %330 = vector.load %arg12[%c1_118, %c0_119, %c32_120] : memref<8x8x64xbf16, #tpu.memory_space<vmem>>, vector<1x8x32xbf16>
    %331 = vector.shape_cast %330 : vector<1x8x32xbf16> to vector<8x32xbf16>
    %332 = vector.shape_cast %329 : vector<8x32xbf16> to vector<1x8x32xbf16>
    tpu.vector_store %arg12[%c1_118, %c0_119, %c32_120], %332 {strides = array<i32>} : memref<8x8x64xbf16, #tpu.memory_space<vmem>>, vector<1x8x32xbf16>,
    %333 = arith.truncf %321 : vector<8x64xf32> to vector<8x64xbf16>
    %cst_121 = arith.constant dense<0.000000e+00> : vector<8x256xf32>
    %334 = tpu.matmul %333, %23, %cst_121 {dimension_numbers = #tpu.dot_dimension_numbers<[1], [0], [0], [1], [0, 0, 1, 1], [], []>} : vector<8x64xbf16>, vector<64x256xbf16>, vector<8x256xf32> -> vector<8x256xf32>
    %c7_122 = arith.constant 7 : index
    %c0_123 = arith.constant 0 : index
    %c0_124 = arith.constant 0 : index
    %335 = vector.load %arg11[%c7_122, %c0_123, %c0_124] : memref<8x8x256xbf16, #tpu.memory_space<vmem>>, vector<1x8x256xbf16>
    %336 = vector.shape_cast %335 : vector<1x8x256xbf16> to vector<8x256xbf16>
    %c0_125 = arith.constant 0 : index
    %c0_126 = arith.constant 0 : index
    %c0_127 = arith.constant 0 : index
    %337 = vector.load %arg11[%c0_125, %c0_126, %c0_127] : memref<8x8x256xbf16, #tpu.memory_space<vmem>>, vector<1x8x256xbf16>
    %338 = vector.shape_cast %337 : vector<1x8x256xbf16> to vector<8x256xbf16>
    %339 = arith.select %20, %336, %338 : vector<8x256xi1>, vector<8x256xbf16>
    %c32_i32_128 = arith.constant 32 : i32
    %340 = vector.broadcast %c32_i32_128 : i32 to vector<8x64xi32>
    %341 = arith.cmpi slt, %1, %340 : vector<8x64xi32>
    %c7_i32_129 = arith.constant 7 : i32
    %c0_i32_130 = arith.constant 0 : i32
    %342 = vector.broadcast %c7_i32_129 : i32 to vector<8x64xi32>
    %343 = vector.broadcast %c0_i32_130 : i32 to vector<8x64xi32>
    %344 = arith.select %341, %342, %343 : vector<8x64xi1>, vector<8x64xi32>
    %345 = vector.broadcast %0 : vector<8x1xi32> to vector<8x64xi32>
    %346 = arith.cmpi slt, %344, %345 : vector<8x64xi32>
    %347 = arith.extf %339 : vector<8x256xbf16> to vector<8x256xf32>
    %348 = arith.addf %334, %347 : vector<8x256xf32>
    %349 = arith.negf %348 : vector<8x256xf32>
    %350 = math.exp %349 : vector<8x256xf32>
    %cst_131 = arith.constant 1.000000e+00 : f32
    %351 = vector.broadcast %cst_131 : f32 to vector<8x256xf32>
    %352 = arith.addf %351, %350 : vector<8x256xf32>
    %353 = arith.divf %351, %352 : vector<8x256xf32>
    %354 = math.tanh %348 : vector<8x256xf32>
    %355 = vector.extract_strided_slice %353 {offsets = [0, 0], sizes = [8, 64], strides = [1, 1]} : vector<8x256xf32> to vector<8x64xf32>
    %356 = vector.extract_strided_slice %353 {offsets = [0, 64], sizes = [8, 64], strides = [1, 1]} : vector<8x256xf32> to vector<8x64xf32>
    %357 = vector.extract_strided_slice %354 {offsets = [0, 128], sizes = [8, 64], strides = [1, 1]} : vector<8x256xf32> to vector<8x64xf32>
    %358 = vector.extract_strided_slice %353 {offsets = [0, 192], sizes = [8, 64], strides = [1, 1]} : vector<8x256xf32> to vector<8x64xf32>
    %359 = arith.mulf %356, %322 : vector<8x64xf32>
    %360 = arith.mulf %355, %357 : vector<8x64xf32>
    %361 = arith.addf %359, %360 : vector<8x64xf32>
    %362 = math.tanh %361 : vector<8x64xf32>
    %363 = arith.mulf %358, %362 : vector<8x64xf32>
    %364 = arith.select %346, %363, %321 : vector<8x64xi1>, vector<8x64xf32>
    %365 = vector.extract_strided_slice %364 {offsets = [0, 0], sizes = [8, 32], strides = [1, 1]} : vector<8x64xf32> to vector<8x32xf32>
    %366 = arith.truncf %365 : vector<8x32xf32> to vector<8x32xbf16>
    %c7_132 = arith.constant 7 : index
    %c0_133 = arith.constant 0 : index
    %c0_134 = arith.constant 0 : index
    %367 = vector.load %arg12[%c7_132, %c0_133, %c0_134] : memref<8x8x64xbf16, #tpu.memory_space<vmem>>, vector<1x8x32xbf16>
    %368 = vector.shape_cast %367 : vector<1x8x32xbf16> to vector<8x32xbf16>
    %369 = vector.shape_cast %366 : vector<8x32xbf16> to vector<1x8x32xbf16>
    tpu.vector_store %arg12[%c7_132, %c0_133, %c0_134], %369 {strides = array<i32>} : memref<8x8x64xbf16, #tpu.memory_space<vmem>>, vector<1x8x32xbf16>,
    %370 = vector.extract_strided_slice %364 {offsets = [0, 32], sizes = [8, 32], strides = [1, 1]} : vector<8x64xf32> to vector<8x32xf32>
    %371 = arith.truncf %370 : vector<8x32xf32> to vector<8x32xbf16>
    %c0_135 = arith.constant 0 : index
    %c0_136 = arith.constant 0 : index
    %c32_137 = arith.constant 32 : index
    %372 = vector.load %arg12[%c0_135, %c0_136, %c32_137] : memref<8x8x64xbf16, #tpu.memory_space<vmem>>, vector<1x8x32xbf16>
    %373 = vector.shape_cast %372 : vector<1x8x32xbf16> to vector<8x32xbf16>
    %374 = vector.shape_cast %371 : vector<8x32xbf16> to vector<1x8x32xbf16>
    tpu.vector_store %arg12[%c0_135, %c0_136, %c32_137], %374 {strides = array<i32>} : memref<8x8x64xbf16, #tpu.memory_space<vmem>>, vector<1x8x32xbf16>,
    %c0_138 = arith.constant 0 : index
    %c0_139 = arith.constant 0 : index
    %c0_140 = arith.constant 0 : index
    %375 = vector.load %arg12[%c0_138, %c0_139, %c0_140] : memref<8x8x64xbf16, #tpu.memory_space<vmem>>, vector<8x8x64xbf16>
    %376 = vector.shape_cast %375 : vector<8x8x64xbf16> to vector<64x64xbf16>
    %c0_141 = arith.constant 0 : index
    %c0_142 = arith.constant 0 : index
    %377 = vector.load %arg5[%c0_141, %c0_142] : memref<64x256xbf16, #tpu.memory_space<vmem>>, vector<64x256xbf16>
    %c0_143 = arith.constant 0 : index
    %c0_144 = arith.constant 0 : index
    %378 = vector.load %arg6[%c0_143, %c0_144] : memref<64x256xbf16, #tpu.memory_space<vmem>>, vector<64x256xbf16>
    %c0_145 = arith.constant 0 : index
    %c0_146 = arith.constant 0 : index
    %379 = vector.load %arg7[%c0_145, %c0_146] : memref<1x256xf32, #tpu.memory_space<vmem>>, vector<1x256xf32>
    %cst_147 = arith.constant dense<0.000000e+00> : vector<64x256xf32>
    %380 = tpu.matmul %376, %377, %cst_147 {dimension_numbers = #tpu.dot_dimension_numbers<[1], [0], [0], [1], [0, 0, 1, 1], [], []>} : vector<64x64xbf16>, vector<64x256xbf16>, vector<64x256xf32> -> vector<64x256xf32>
    %381 = vector.broadcast %379 : vector<1x256xf32> to vector<64x256xf32>
    %382 = arith.addf %380, %381 : vector<64x256xf32>
    %383 = arith.truncf %382 : vector<64x256xf32> to vector<64x256xbf16>
    %384 = vector.shape_cast %383 : vector<64x256xbf16> to vector<8x8x256xbf16>
    %c0_148 = arith.constant 0 : index
    %c0_149 = arith.constant 0 : index
    %c0_150 = arith.constant 0 : index
    %385 = vector.load %arg11[%c0_148, %c0_149, %c0_150] : memref<8x8x256xbf16, #tpu.memory_space<vmem>>, vector<8x8x256xbf16>
    tpu.vector_store %arg11[%c0_148, %c0_149, %c0_150], %384 {strides = array<i32>} : memref<8x8x256xbf16, #tpu.memory_space<vmem>>, vector<8x8x256xbf16>,
    %cst_151 = arith.constant 0.000000e+00 : f32
    %386 = vector.broadcast %cst_151 : f32 to vector<8x64xf32>
    %387 = arith.truncf %386 : vector<8x64xf32> to vector<8x64xbf16>
    %cst_152 = arith.constant dense<0.000000e+00> : vector<8x256xf32>
    %388 = tpu.matmul %387, %378, %cst_152 {dimension_numbers = #tpu.dot_dimension_numbers<[1], [0], [0], [1], [0, 0, 1, 1], [], []>} : vector<8x64xbf16>, vector<64x256xbf16>, vector<8x256xf32> -> vector<8x256xf32>
    %c0_153 = arith.constant 0 : index
    %c0_154 = arith.constant 0 : index
    %c0_155 = arith.constant 0 : index
    %389 = vector.load %arg11[%c0_153, %c0_154, %c0_155] : memref<8x8x256xbf16, #tpu.memory_space<vmem>>, vector<1x8x256xbf16>
    %390 = vector.shape_cast %389 : vector<1x8x256xbf16> to vector<8x256xbf16>
    %c7_156 = arith.constant 7 : index
    %c0_157 = arith.constant 0 : index
    %c0_158 = arith.constant 0 : index
    %391 = vector.load %arg11[%c7_156, %c0_157, %c0_158] : memref<8x8x256xbf16, #tpu.memory_space<vmem>>, vector<1x8x256xbf16>
    %392 = vector.shape_cast %391 : vector<1x8x256xbf16> to vector<8x256xbf16>
    %393 = arith.select %20, %390, %392 : vector<8x256xi1>, vector<8x256xbf16>
    %c32_i32_159 = arith.constant 32 : i32
    %394 = vector.broadcast %c32_i32_159 : i32 to vector<8x64xi32>
    %395 = arith.cmpi slt, %1, %394 : vector<8x64xi32>
    %c0_i32_160 = arith.constant 0 : i32
    %c7_i32_161 = arith.constant 7 : i32
    %396 = vector.broadcast %c0_i32_160 : i32 to vector<8x64xi32>
    %397 = vector.broadcast %c7_i32_161 : i32 to vector<8x64xi32>
    %398 = arith.select %395, %396, %397 : vector<8x64xi1>, vector<8x64xi32>
    %399 = vector.broadcast %0 : vector<8x1xi32> to vector<8x64xi32>
    %400 = arith.cmpi slt, %398, %399 : vector<8x64xi32>
    %401 = arith.extf %393 : vector<8x256xbf16> to vector<8x256xf32>
    %402 = arith.addf %388, %401 : vector<8x256xf32>
    %403 = arith.negf %402 : vector<8x256xf32>
    %404 = math.exp %403 : vector<8x256xf32>
    %cst_162 = arith.constant 1.000000e+00 : f32
    %405 = vector.broadcast %cst_162 : f32 to vector<8x256xf32>
    %406 = arith.addf %405, %404 : vector<8x256xf32>
    %407 = arith.divf %405, %406 : vector<8x256xf32>
    %408 = math.tanh %402 : vector<8x256xf32>
    %409 = vector.extract_strided_slice %407 {offsets = [0, 0], sizes = [8, 64], strides = [1, 1]} : vector<8x256xf32> to vector<8x64xf32>
    %410 = vector.extract_strided_slice %407 {offsets = [0, 64], sizes = [8, 64], strides = [1, 1]} : vector<8x256xf32> to vector<8x64xf32>
    %411 = vector.extract_strided_slice %408 {offsets = [0, 128], sizes = [8, 64], strides = [1, 1]} : vector<8x256xf32> to vector<8x64xf32>
    %412 = vector.extract_strided_slice %407 {offsets = [0, 192], sizes = [8, 64], strides = [1, 1]} : vector<8x256xf32> to vector<8x64xf32>
    %413 = arith.mulf %410, %386 : vector<8x64xf32>
    %414 = arith.mulf %409, %411 : vector<8x64xf32>
    %415 = arith.addf %413, %414 : vector<8x64xf32>
    %416 = math.tanh %415 : vector<8x64xf32>
    %417 = arith.mulf %412, %416 : vector<8x64xf32>
    %418 = arith.select %400, %417, %386 : vector<8x64xi1>, vector<8x64xf32>
    %419 = arith.select %400, %415, %386 : vector<8x64xi1>, vector<8x64xf32>
    %420 = arith.truncf %418 : vector<8x64xf32> to vector<8x64xbf16>
    %cst_163 = arith.constant dense<0.000000e+00> : vector<8x256xf32>
    %421 = tpu.matmul %420, %378, %cst_163 {dimension_numbers = #tpu.dot_dimension_numbers<[1], [0], [0], [1], [0, 0, 1, 1], [], []>} : vector<8x64xbf16>, vector<64x256xbf16>, vector<8x256xf32> -> vector<8x256xf32>
    %c1_164 = arith.constant 1 : index
    %c0_165 = arith.constant 0 : index
    %c0_166 = arith.constant 0 : index
    %422 = vector.load %arg11[%c1_164, %c0_165, %c0_166] : memref<8x8x256xbf16, #tpu.memory_space<vmem>>, vector<1x8x256xbf16>
    %423 = vector.shape_cast %422 : vector<1x8x256xbf16> to vector<8x256xbf16>
    %c6_167 = arith.constant 6 : index
    %c0_168 = arith.constant 0 : index
    %c0_169 = arith.constant 0 : index
    %424 = vector.load %arg11[%c6_167, %c0_168, %c0_169] : memref<8x8x256xbf16, #tpu.memory_space<vmem>>, vector<1x8x256xbf16>
    %425 = vector.shape_cast %424 : vector<1x8x256xbf16> to vector<8x256xbf16>
    %426 = arith.select %20, %423, %425 : vector<8x256xi1>, vector<8x256xbf16>
    %c32_i32_170 = arith.constant 32 : i32
    %427 = vector.broadcast %c32_i32_170 : i32 to vector<8x64xi32>
    %428 = arith.cmpi slt, %1, %427 : vector<8x64xi32>
    %c1_i32_171 = arith.constant 1 : i32
    %c6_i32_172 = arith.constant 6 : i32
    %429 = vector.broadcast %c1_i32_171 : i32 to vector<8x64xi32>
    %430 = vector.broadcast %c6_i32_172 : i32 to vector<8x64xi32>
    %431 = arith.select %428, %429, %430 : vector<8x64xi1>, vector<8x64xi32>
    %432 = vector.broadcast %0 : vector<8x1xi32> to vector<8x64xi32>
    %433 = arith.cmpi slt, %431, %432 : vector<8x64xi32>
    %434 = arith.extf %426 : vector<8x256xbf16> to vector<8x256xf32>
    %435 = arith.addf %421, %434 : vector<8x256xf32>
    %436 = arith.negf %435 : vector<8x256xf32>
    %437 = math.exp %436 : vector<8x256xf32>
    %cst_173 = arith.constant 1.000000e+00 : f32
    %438 = vector.broadcast %cst_173 : f32 to vector<8x256xf32>
    %439 = arith.addf %438, %437 : vector<8x256xf32>
    %440 = arith.divf %438, %439 : vector<8x256xf32>
    %441 = math.tanh %435 : vector<8x256xf32>
    %442 = vector.extract_strided_slice %440 {offsets = [0, 0], sizes = [8, 64], strides = [1, 1]} : vector<8x256xf32> to vector<8x64xf32>
    %443 = vector.extract_strided_slice %440 {offsets = [0, 64], sizes = [8, 64], strides = [1, 1]} : vector<8x256xf32> to vector<8x64xf32>
    %444 = vector.extract_strided_slice %441 {offsets = [0, 128], sizes = [8, 64], strides = [1, 1]} : vector<8x256xf32> to vector<8x64xf32>
    %445 = vector.extract_strided_slice %440 {offsets = [0, 192], sizes = [8, 64], strides = [1, 1]} : vector<8x256xf32> to vector<8x64xf32>
    %446 = arith.mulf %443, %419 : vector<8x64xf32>
    %447 = arith.mulf %442, %444 : vector<8x64xf32>
    %448 = arith.addf %446, %447 : vector<8x64xf32>
    %449 = math.tanh %448 : vector<8x64xf32>
    %450 = arith.mulf %445, %449 : vector<8x64xf32>
    %451 = arith.select %433, %450, %418 : vector<8x64xi1>, vector<8x64xf32>
    %452 = arith.select %433, %448, %419 : vector<8x64xi1>, vector<8x64xf32>
    %453 = arith.truncf %451 : vector<8x64xf32> to vector<8x64xbf16>
    %cst_174 = arith.constant dense<0.000000e+00> : vector<8x256xf32>
    %454 = tpu.matmul %453, %378, %cst_174 {dimension_numbers = #tpu.dot_dimension_numbers<[1], [0], [0], [1], [0, 0, 1, 1], [], []>} : vector<8x64xbf16>, vector<64x256xbf16>, vector<8x256xf32> -> vector<8x256xf32>
    %c2_175 = arith.constant 2 : index
    %c0_176 = arith.constant 0 : index
    %c0_177 = arith.constant 0 : index
    %455 = vector.load %arg11[%c2_175, %c0_176, %c0_177] : memref<8x8x256xbf16, #tpu.memory_space<vmem>>, vector<1x8x256xbf16>
    %456 = vector.shape_cast %455 : vector<1x8x256xbf16> to vector<8x256xbf16>
    %c5_178 = arith.constant 5 : index
    %c0_179 = arith.constant 0 : index
    %c0_180 = arith.constant 0 : index
    %457 = vector.load %arg11[%c5_178, %c0_179, %c0_180] : memref<8x8x256xbf16, #tpu.memory_space<vmem>>, vector<1x8x256xbf16>
    %458 = vector.shape_cast %457 : vector<1x8x256xbf16> to vector<8x256xbf16>
    %459 = arith.select %20, %456, %458 : vector<8x256xi1>, vector<8x256xbf16>
    %c32_i32_181 = arith.constant 32 : i32
    %460 = vector.broadcast %c32_i32_181 : i32 to vector<8x64xi32>
    %461 = arith.cmpi slt, %1, %460 : vector<8x64xi32>
    %c2_i32_182 = arith.constant 2 : i32
    %c5_i32_183 = arith.constant 5 : i32
    %462 = vector.broadcast %c2_i32_182 : i32 to vector<8x64xi32>
    %463 = vector.broadcast %c5_i32_183 : i32 to vector<8x64xi32>
    %464 = arith.select %461, %462, %463 : vector<8x64xi1>, vector<8x64xi32>
    %465 = vector.broadcast %0 : vector<8x1xi32> to vector<8x64xi32>
    %466 = arith.cmpi slt, %464, %465 : vector<8x64xi32>
    %467 = arith.extf %459 : vector<8x256xbf16> to vector<8x256xf32>
    %468 = arith.addf %454, %467 : vector<8x256xf32>
    %469 = arith.negf %468 : vector<8x256xf32>
    %470 = math.exp %469 : vector<8x256xf32>
    %cst_184 = arith.constant 1.000000e+00 : f32
    %471 = vector.broadcast %cst_184 : f32 to vector<8x256xf32>
    %472 = arith.addf %471, %470 : vector<8x256xf32>
    %473 = arith.divf %471, %472 : vector<8x256xf32>
    %474 = math.tanh %468 : vector<8x256xf32>
    %475 = vector.extract_strided_slice %473 {offsets = [0, 0], sizes = [8, 64], strides = [1, 1]} : vector<8x256xf32> to vector<8x64xf32>
    %476 = vector.extract_strided_slice %473 {offsets = [0, 64], sizes = [8, 64], strides = [1, 1]} : vector<8x256xf32> to vector<8x64xf32>
    %477 = vector.extract_strided_slice %474 {offsets = [0, 128], sizes = [8, 64], strides = [1, 1]} : vector<8x256xf32> to vector<8x64xf32>
    %478 = vector.extract_strided_slice %473 {offsets = [0, 192], sizes = [8, 64], strides = [1, 1]} : vector<8x256xf32> to vector<8x64xf32>
    %479 = arith.mulf %476, %452 : vector<8x64xf32>
    %480 = arith.mulf %475, %477 : vector<8x64xf32>
    %481 = arith.addf %479, %480 : vector<8x64xf32>
    %482 = math.tanh %481 : vector<8x64xf32>
    %483 = arith.mulf %478, %482 : vector<8x64xf32>
    %484 = arith.select %466, %483, %451 : vector<8x64xi1>, vector<8x64xf32>
    %485 = arith.select %466, %481, %452 : vector<8x64xi1>, vector<8x64xf32>
    %486 = arith.truncf %484 : vector<8x64xf32> to vector<8x64xbf16>
    %cst_185 = arith.constant dense<0.000000e+00> : vector<8x256xf32>
    %487 = tpu.matmul %486, %378, %cst_185 {dimension_numbers = #tpu.dot_dimension_numbers<[1], [0], [0], [1], [0, 0, 1, 1], [], []>} : vector<8x64xbf16>, vector<64x256xbf16>, vector<8x256xf32> -> vector<8x256xf32>
    %c3_186 = arith.constant 3 : index
    %c0_187 = arith.constant 0 : index
    %c0_188 = arith.constant 0 : index
    %488 = vector.load %arg11[%c3_186, %c0_187, %c0_188] : memref<8x8x256xbf16, #tpu.memory_space<vmem>>, vector<1x8x256xbf16>
    %489 = vector.shape_cast %488 : vector<1x8x256xbf16> to vector<8x256xbf16>
    %c4_189 = arith.constant 4 : index
    %c0_190 = arith.constant 0 : index
    %c0_191 = arith.constant 0 : index
    %490 = vector.load %arg11[%c4_189, %c0_190, %c0_191] : memref<8x8x256xbf16, #tpu.memory_space<vmem>>, vector<1x8x256xbf16>
    %491 = vector.shape_cast %490 : vector<1x8x256xbf16> to vector<8x256xbf16>
    %492 = arith.select %20, %489, %491 : vector<8x256xi1>, vector<8x256xbf16>
    %c32_i32_192 = arith.constant 32 : i32
    %493 = vector.broadcast %c32_i32_192 : i32 to vector<8x64xi32>
    %494 = arith.cmpi slt, %1, %493 : vector<8x64xi32>
    %c3_i32_193 = arith.constant 3 : i32
    %c4_i32_194 = arith.constant 4 : i32
    %495 = vector.broadcast %c3_i32_193 : i32 to vector<8x64xi32>
    %496 = vector.broadcast %c4_i32_194 : i32 to vector<8x64xi32>
    %497 = arith.select %494, %495, %496 : vector<8x64xi1>, vector<8x64xi32>
    %498 = vector.broadcast %0 : vector<8x1xi32> to vector<8x64xi32>
    %499 = arith.cmpi slt, %497, %498 : vector<8x64xi32>
    %500 = arith.extf %492 : vector<8x256xbf16> to vector<8x256xf32>
    %501 = arith.addf %487, %500 : vector<8x256xf32>
    %502 = arith.negf %501 : vector<8x256xf32>
    %503 = math.exp %502 : vector<8x256xf32>
    %cst_195 = arith.constant 1.000000e+00 : f32
    %504 = vector.broadcast %cst_195 : f32 to vector<8x256xf32>
    %505 = arith.addf %504, %503 : vector<8x256xf32>
    %506 = arith.divf %504, %505 : vector<8x256xf32>
    %507 = math.tanh %501 : vector<8x256xf32>
    %508 = vector.extract_strided_slice %506 {offsets = [0, 0], sizes = [8, 64], strides = [1, 1]} : vector<8x256xf32> to vector<8x64xf32>
    %509 = vector.extract_strided_slice %506 {offsets = [0, 64], sizes = [8, 64], strides = [1, 1]} : vector<8x256xf32> to vector<8x64xf32>
    %510 = vector.extract_strided_slice %507 {offsets = [0, 128], sizes = [8, 64], strides = [1, 1]} : vector<8x256xf32> to vector<8x64xf32>
    %511 = vector.extract_strided_slice %506 {offsets = [0, 192], sizes = [8, 64], strides = [1, 1]} : vector<8x256xf32> to vector<8x64xf32>
    %512 = arith.mulf %509, %485 : vector<8x64xf32>
    %513 = arith.mulf %508, %510 : vector<8x64xf32>
    %514 = arith.addf %512, %513 : vector<8x64xf32>
    %515 = math.tanh %514 : vector<8x64xf32>
    %516 = arith.mulf %511, %515 : vector<8x64xf32>
    %517 = arith.select %499, %516, %484 : vector<8x64xi1>, vector<8x64xf32>
    %518 = arith.select %499, %514, %485 : vector<8x64xi1>, vector<8x64xf32>
    %519 = arith.truncf %517 : vector<8x64xf32> to vector<8x64xbf16>
    %cst_196 = arith.constant dense<0.000000e+00> : vector<8x256xf32>
    %520 = tpu.matmul %519, %378, %cst_196 {dimension_numbers = #tpu.dot_dimension_numbers<[1], [0], [0], [1], [0, 0, 1, 1], [], []>} : vector<8x64xbf16>, vector<64x256xbf16>, vector<8x256xf32> -> vector<8x256xf32>
    %c4_197 = arith.constant 4 : index
    %c0_198 = arith.constant 0 : index
    %c0_199 = arith.constant 0 : index
    %521 = vector.load %arg11[%c4_197, %c0_198, %c0_199] : memref<8x8x256xbf16, #tpu.memory_space<vmem>>, vector<1x8x256xbf16>
    %522 = vector.shape_cast %521 : vector<1x8x256xbf16> to vector<8x256xbf16>
    %c3_200 = arith.constant 3 : index
    %c0_201 = arith.constant 0 : index
    %c0_202 = arith.constant 0 : index
    %523 = vector.load %arg11[%c3_200, %c0_201, %c0_202] : memref<8x8x256xbf16, #tpu.memory_space<vmem>>, vector<1x8x256xbf16>
    %524 = vector.shape_cast %523 : vector<1x8x256xbf16> to vector<8x256xbf16>
    %525 = arith.select %20, %522, %524 : vector<8x256xi1>, vector<8x256xbf16>
    %c32_i32_203 = arith.constant 32 : i32
    %526 = vector.broadcast %c32_i32_203 : i32 to vector<8x64xi32>
    %527 = arith.cmpi slt, %1, %526 : vector<8x64xi32>
    %c4_i32_204 = arith.constant 4 : i32
    %c3_i32_205 = arith.constant 3 : i32
    %528 = vector.broadcast %c4_i32_204 : i32 to vector<8x64xi32>
    %529 = vector.broadcast %c3_i32_205 : i32 to vector<8x64xi32>
    %530 = arith.select %527, %528, %529 : vector<8x64xi1>, vector<8x64xi32>
    %531 = vector.broadcast %0 : vector<8x1xi32> to vector<8x64xi32>
    %532 = arith.cmpi slt, %530, %531 : vector<8x64xi32>
    %533 = arith.extf %525 : vector<8x256xbf16> to vector<8x256xf32>
    %534 = arith.addf %520, %533 : vector<8x256xf32>
    %535 = arith.negf %534 : vector<8x256xf32>
    %536 = math.exp %535 : vector<8x256xf32>
    %cst_206 = arith.constant 1.000000e+00 : f32
    %537 = vector.broadcast %cst_206 : f32 to vector<8x256xf32>
    %538 = arith.addf %537, %536 : vector<8x256xf32>
    %539 = arith.divf %537, %538 : vector<8x256xf32>
    %540 = math.tanh %534 : vector<8x256xf32>
    %541 = vector.extract_strided_slice %539 {offsets = [0, 0], sizes = [8, 64], strides = [1, 1]} : vector<8x256xf32> to vector<8x64xf32>
    %542 = vector.extract_strided_slice %539 {offsets = [0, 64], sizes = [8, 64], strides = [1, 1]} : vector<8x256xf32> to vector<8x64xf32>
    %543 = vector.extract_strided_slice %540 {offsets = [0, 128], sizes = [8, 64], strides = [1, 1]} : vector<8x256xf32> to vector<8x64xf32>
    %544 = vector.extract_strided_slice %539 {offsets = [0, 192], sizes = [8, 64], strides = [1, 1]} : vector<8x256xf32> to vector<8x64xf32>
    %545 = arith.mulf %542, %518 : vector<8x64xf32>
    %546 = arith.mulf %541, %543 : vector<8x64xf32>
    %547 = arith.addf %545, %546 : vector<8x64xf32>
    %548 = math.tanh %547 : vector<8x64xf32>
    %549 = arith.mulf %544, %548 : vector<8x64xf32>
    %550 = arith.select %532, %549, %517 : vector<8x64xi1>, vector<8x64xf32>
    %551 = arith.select %532, %547, %518 : vector<8x64xi1>, vector<8x64xf32>
    %552 = arith.truncf %550 : vector<8x64xf32> to vector<8x64xbf16>
    %cst_207 = arith.constant dense<0.000000e+00> : vector<8x256xf32>
    %553 = tpu.matmul %552, %378, %cst_207 {dimension_numbers = #tpu.dot_dimension_numbers<[1], [0], [0], [1], [0, 0, 1, 1], [], []>} : vector<8x64xbf16>, vector<64x256xbf16>, vector<8x256xf32> -> vector<8x256xf32>
    %c5_208 = arith.constant 5 : index
    %c0_209 = arith.constant 0 : index
    %c0_210 = arith.constant 0 : index
    %554 = vector.load %arg11[%c5_208, %c0_209, %c0_210] : memref<8x8x256xbf16, #tpu.memory_space<vmem>>, vector<1x8x256xbf16>
    %555 = vector.shape_cast %554 : vector<1x8x256xbf16> to vector<8x256xbf16>
    %c2_211 = arith.constant 2 : index
    %c0_212 = arith.constant 0 : index
    %c0_213 = arith.constant 0 : index
    %556 = vector.load %arg11[%c2_211, %c0_212, %c0_213] : memref<8x8x256xbf16, #tpu.memory_space<vmem>>, vector<1x8x256xbf16>
    %557 = vector.shape_cast %556 : vector<1x8x256xbf16> to vector<8x256xbf16>
    %558 = arith.select %20, %555, %557 : vector<8x256xi1>, vector<8x256xbf16>
    %c32_i32_214 = arith.constant 32 : i32
    %559 = vector.broadcast %c32_i32_214 : i32 to vector<8x64xi32>
    %560 = arith.cmpi slt, %1, %559 : vector<8x64xi32>
    %c5_i32_215 = arith.constant 5 : i32
    %c2_i32_216 = arith.constant 2 : i32
    %561 = vector.broadcast %c5_i32_215 : i32 to vector<8x64xi32>
    %562 = vector.broadcast %c2_i32_216 : i32 to vector<8x64xi32>
    %563 = arith.select %560, %561, %562 : vector<8x64xi1>, vector<8x64xi32>
    %564 = vector.broadcast %0 : vector<8x1xi32> to vector<8x64xi32>
    %565 = arith.cmpi slt, %563, %564 : vector<8x64xi32>
    %566 = arith.extf %558 : vector<8x256xbf16> to vector<8x256xf32>
    %567 = arith.addf %553, %566 : vector<8x256xf32>
    %568 = arith.negf %567 : vector<8x256xf32>
    %569 = math.exp %568 : vector<8x256xf32>
    %cst_217 = arith.constant 1.000000e+00 : f32
    %570 = vector.broadcast %cst_217 : f32 to vector<8x256xf32>
    %571 = arith.addf %570, %569 : vector<8x256xf32>
    %572 = arith.divf %570, %571 : vector<8x256xf32>
    %573 = math.tanh %567 : vector<8x256xf32>
    %574 = vector.extract_strided_slice %572 {offsets = [0, 0], sizes = [8, 64], strides = [1, 1]} : vector<8x256xf32> to vector<8x64xf32>
    %575 = vector.extract_strided_slice %572 {offsets = [0, 64], sizes = [8, 64], strides = [1, 1]} : vector<8x256xf32> to vector<8x64xf32>
    %576 = vector.extract_strided_slice %573 {offsets = [0, 128], sizes = [8, 64], strides = [1, 1]} : vector<8x256xf32> to vector<8x64xf32>
    %577 = vector.extract_strided_slice %572 {offsets = [0, 192], sizes = [8, 64], strides = [1, 1]} : vector<8x256xf32> to vector<8x64xf32>
    %578 = arith.mulf %575, %551 : vector<8x64xf32>
    %579 = arith.mulf %574, %576 : vector<8x64xf32>
    %580 = arith.addf %578, %579 : vector<8x64xf32>
    %581 = math.tanh %580 : vector<8x64xf32>
    %582 = arith.mulf %577, %581 : vector<8x64xf32>
    %583 = arith.select %565, %582, %550 : vector<8x64xi1>, vector<8x64xf32>
    %584 = arith.select %565, %580, %551 : vector<8x64xi1>, vector<8x64xf32>
    %585 = arith.truncf %583 : vector<8x64xf32> to vector<8x64xbf16>
    %cst_218 = arith.constant dense<0.000000e+00> : vector<8x256xf32>
    %586 = tpu.matmul %585, %378, %cst_218 {dimension_numbers = #tpu.dot_dimension_numbers<[1], [0], [0], [1], [0, 0, 1, 1], [], []>} : vector<8x64xbf16>, vector<64x256xbf16>, vector<8x256xf32> -> vector<8x256xf32>
    %c6_219 = arith.constant 6 : index
    %c0_220 = arith.constant 0 : index
    %c0_221 = arith.constant 0 : index
    %587 = vector.load %arg11[%c6_219, %c0_220, %c0_221] : memref<8x8x256xbf16, #tpu.memory_space<vmem>>, vector<1x8x256xbf16>
    %588 = vector.shape_cast %587 : vector<1x8x256xbf16> to vector<8x256xbf16>
    %c1_222 = arith.constant 1 : index
    %c0_223 = arith.constant 0 : index
    %c0_224 = arith.constant 0 : index
    %589 = vector.load %arg11[%c1_222, %c0_223, %c0_224] : memref<8x8x256xbf16, #tpu.memory_space<vmem>>, vector<1x8x256xbf16>
    %590 = vector.shape_cast %589 : vector<1x8x256xbf16> to vector<8x256xbf16>
    %591 = arith.select %20, %588, %590 : vector<8x256xi1>, vector<8x256xbf16>
    %c32_i32_225 = arith.constant 32 : i32
    %592 = vector.broadcast %c32_i32_225 : i32 to vector<8x64xi32>
    %593 = arith.cmpi slt, %1, %592 : vector<8x64xi32>
    %c6_i32_226 = arith.constant 6 : i32
    %c1_i32_227 = arith.constant 1 : i32
    %594 = vector.broadcast %c6_i32_226 : i32 to vector<8x64xi32>
    %595 = vector.broadcast %c1_i32_227 : i32 to vector<8x64xi32>
    %596 = arith.select %593, %594, %595 : vector<8x64xi1>, vector<8x64xi32>
    %597 = vector.broadcast %0 : vector<8x1xi32> to vector<8x64xi32>
    %598 = arith.cmpi slt, %596, %597 : vector<8x64xi32>
    %599 = arith.extf %591 : vector<8x256xbf16> to vector<8x256xf32>
    %600 = arith.addf %586, %599 : vector<8x256xf32>
    %601 = arith.negf %600 : vector<8x256xf32>
    %602 = math.exp %601 : vector<8x256xf32>
    %cst_228 = arith.constant 1.000000e+00 : f32
    %603 = vector.broadcast %cst_228 : f32 to vector<8x256xf32>
    %604 = arith.addf %603, %602 : vector<8x256xf32>
    %605 = arith.divf %603, %604 : vector<8x256xf32>
    %606 = math.tanh %600 : vector<8x256xf32>
    %607 = vector.extract_strided_slice %605 {offsets = [0, 0], sizes = [8, 64], strides = [1, 1]} : vector<8x256xf32> to vector<8x64xf32>
    %608 = vector.extract_strided_slice %605 {offsets = [0, 64], sizes = [8, 64], strides = [1, 1]} : vector<8x256xf32> to vector<8x64xf32>
    %609 = vector.extract_strided_slice %606 {offsets = [0, 128], sizes = [8, 64], strides = [1, 1]} : vector<8x256xf32> to vector<8x64xf32>
    %610 = vector.extract_strided_slice %605 {offsets = [0, 192], sizes = [8, 64], strides = [1, 1]} : vector<8x256xf32> to vector<8x64xf32>
    %611 = arith.mulf %608, %584 : vector<8x64xf32>
    %612 = arith.mulf %607, %609 : vector<8x64xf32>
    %613 = arith.addf %611, %612 : vector<8x64xf32>
    %614 = math.tanh %613 : vector<8x64xf32>
    %615 = arith.mulf %610, %614 : vector<8x64xf32>
    %616 = arith.select %598, %615, %583 : vector<8x64xi1>, vector<8x64xf32>
    %617 = arith.select %598, %613, %584 : vector<8x64xi1>, vector<8x64xf32>
    %618 = arith.truncf %616 : vector<8x64xf32> to vector<8x64xbf16>
    %cst_229 = arith.constant dense<0.000000e+00> : vector<8x256xf32>
    %619 = tpu.matmul %618, %378, %cst_229 {dimension_numbers = #tpu.dot_dimension_numbers<[1], [0], [0], [1], [0, 0, 1, 1], [], []>} : vector<8x64xbf16>, vector<64x256xbf16>, vector<8x256xf32> -> vector<8x256xf32>
    %c7_230 = arith.constant 7 : index
    %c0_231 = arith.constant 0 : index
    %c0_232 = arith.constant 0 : index
    %620 = vector.load %arg11[%c7_230, %c0_231, %c0_232] : memref<8x8x256xbf16, #tpu.memory_space<vmem>>, vector<1x8x256xbf16>
    %621 = vector.shape_cast %620 : vector<1x8x256xbf16> to vector<8x256xbf16>
    %c0_233 = arith.constant 0 : index
    %c0_234 = arith.constant 0 : index
    %c0_235 = arith.constant 0 : index
    %622 = vector.load %arg11[%c0_233, %c0_234, %c0_235] : memref<8x8x256xbf16, #tpu.memory_space<vmem>>, vector<1x8x256xbf16>
    %623 = vector.shape_cast %622 : vector<1x8x256xbf16> to vector<8x256xbf16>
    %624 = arith.select %20, %621, %623 : vector<8x256xi1>, vector<8x256xbf16>
    %c32_i32_236 = arith.constant 32 : i32
    %625 = vector.broadcast %c32_i32_236 : i32 to vector<8x64xi32>
    %626 = arith.cmpi slt, %1, %625 : vector<8x64xi32>
    %c7_i32_237 = arith.constant 7 : i32
    %c0_i32_238 = arith.constant 0 : i32
    %627 = vector.broadcast %c7_i32_237 : i32 to vector<8x64xi32>
    %628 = vector.broadcast %c0_i32_238 : i32 to vector<8x64xi32>
    %629 = arith.select %626, %627, %628 : vector<8x64xi1>, vector<8x64xi32>
    %630 = vector.broadcast %0 : vector<8x1xi32> to vector<8x64xi32>
    %631 = arith.cmpi slt, %629, %630 : vector<8x64xi32>
    %632 = arith.extf %624 : vector<8x256xbf16> to vector<8x256xf32>
    %633 = arith.addf %619, %632 : vector<8x256xf32>
    %634 = arith.negf %633 : vector<8x256xf32>
    %635 = math.exp %634 : vector<8x256xf32>
    %cst_239 = arith.constant 1.000000e+00 : f32
    %636 = vector.broadcast %cst_239 : f32 to vector<8x256xf32>
    %637 = arith.addf %636, %635 : vector<8x256xf32>
    %638 = arith.divf %636, %637 : vector<8x256xf32>
    %639 = math.tanh %633 : vector<8x256xf32>
    %640 = vector.extract_strided_slice %638 {offsets = [0, 0], sizes = [8, 64], strides = [1, 1]} : vector<8x256xf32> to vector<8x64xf32>
    %641 = vector.extract_strided_slice %638 {offsets = [0, 64], sizes = [8, 64], strides = [1, 1]} : vector<8x256xf32> to vector<8x64xf32>
    %642 = vector.extract_strided_slice %639 {offsets = [0, 128], sizes = [8, 64], strides = [1, 1]} : vector<8x256xf32> to vector<8x64xf32>
    %643 = vector.extract_strided_slice %638 {offsets = [0, 192], sizes = [8, 64], strides = [1, 1]} : vector<8x256xf32> to vector<8x64xf32>
    %644 = arith.mulf %641, %617 : vector<8x64xf32>
    %645 = arith.mulf %640, %642 : vector<8x64xf32>
    %646 = arith.addf %644, %645 : vector<8x64xf32>
    %647 = math.tanh %646 : vector<8x64xf32>
    %648 = arith.mulf %643, %647 : vector<8x64xf32>
    %649 = arith.select %631, %648, %616 : vector<8x64xi1>, vector<8x64xf32>
    %650 = arith.truncf %649 : vector<8x64xf32> to vector<8x64xbf16>
    %c0_240 = arith.constant 0 : index
    %c0_241 = arith.constant 0 : index
    %651 = vector.load %arg8[%c0_240, %c0_241] : memref<64x128xbf16, #tpu.memory_space<vmem>>, vector<64x128xbf16>
    %cst_242 = arith.constant dense<0.000000e+00> : vector<8x128xf32>
    %652 = tpu.matmul %650, %651, %cst_242 {dimension_numbers = #tpu.dot_dimension_numbers<[1], [0], [0], [1], [0, 0, 1, 1], [], []>} : vector<8x64xbf16>, vector<64x128xbf16>, vector<8x128xf32> -> vector<8x128xf32>
    %c0_243 = arith.constant 0 : index
    %c0_244 = arith.constant 0 : index
    %653 = vector.load %arg9[%c0_243, %c0_244] : memref<1x128xf32, #tpu.memory_space<vmem>>, vector<1x128xf32>
    %654 = vector.broadcast %653 : vector<1x128xf32> to vector<8x128xf32>
    %655 = arith.addf %652, %654 : vector<8x128xf32>
    %c0_245 = arith.constant 0 : index
    %c0_246 = arith.constant 0 : index
    %656 = vector.load %arg10[%c0_245, %c0_246] : memref<8x128xf32, #tpu.memory_space<vmem>>, vector<8x128xf32>
    tpu.vector_store %arg10[%c0_245, %c0_246], %655 {strides = array<i32>} : memref<8x128xf32, #tpu.memory_space<vmem>>, vector<8x128xf32>,
    return
  }
}

</mosaic_0001>

<llo_original>
// kernel: tpu_custom_call.1
$region0: #{tpu_custom_call.1}
  #allocation0 [shape = 'u32[]', space=smem, size = 0x4, offset = 0x4, fixed_abs, tag = 'smem constant byte address 0x4 - core index']
  #allocation1 [shape = 'u32[72,128]{1,0:T(1,128)}', space=vmem, size = 0x9000, scoped, tag = 'internal scratch']
  #allocation2 [shape = 'bf16[8,8,256]{2,1,0:T(8,128)(2,1)}', space=vmem, size = 0x8000, scoped, tag = 'scratch operand']
  #allocation3 [shape = 'bf16[8,8,64]{2,1,0:T(8,128)(2,1)}', space=vmem, size = 0x4000, scoped, tag = 'scratch operand']
  %s0 = inlined_call_operand.vmem [shape: s32[8,1], index: 0, kind: input, shape index: {}]
  %s1 = inlined_call_operand.vmem [shape: bf16[64,32], index: 1, kind: input, shape index: {}]
  %s2 = inlined_call_operand.vmem [shape: bf16[32,256], index: 2, kind: input, shape index: {}]
  %s3 = inlined_call_operand.hbm [shape: bf16[64,256], index: 3, kind: input, shape index: {}]
  %s4 = inlined_call_operand.hbm [shape: f32[1,256], index: 4, kind: input, shape index: {}]
  %s5 = inlined_call_operand.hbm [shape: bf16[64,256], index: 5, kind: input, shape index: {}]
  %s6 = inlined_call_operand.hbm [shape: bf16[64,256], index: 6, kind: input, shape index: {}]
  %s7 = inlined_call_operand.hbm [shape: f32[1,256], index: 7, kind: input, shape index: {}]
  %s8 = inlined_call_operand.vmem [shape: bf16[64,128], index: 8, kind: input, shape index: {}]
  %s9 = inlined_call_operand.vmem [shape: f32[1,128], index: 9, kind: input, shape index: {}]
  %s10 = inlined_call_operand.hbm [shape: f32[8,128], index: 10, kind: output, shape index: {}]
  %s11 = sld [smem:[#allocation0]]
  $region70: #{tpu_custom_call.1} parent=0
    _
  %s13 = ssub.s32 1, %s11
  %s14 = scalar_select 0, %s13, %s11
  $region1: #{tpu_custom_call.1} parent=0
    #allocation4 [shape = 'u8[32768]{0}', space=vmem, size = 0x8000, scoped, tag = 'input window, operand 3, single buffered']
    #allocation5 [shape = 's32[1]{0}', space=sflag, size = 0x4, scoped, tag = 'scoped memory for tpu_custom_call.1']
    #allocation6 [shape = 's32[1]{0}', space=sflag, size = 0x4, scoped, tag = 'scoped memory for tpu_custom_call.1']
    #allocation7 [shape = 'u8[1024]{0}', space=vmem, size = 0x400, scoped, tag = 'input window, operand 4, single buffered']
    #allocation8 [shape = 's32[1]{0}', space=sflag, size = 0x4, scoped, tag = 'scoped memory for tpu_custom_call.1']
    #allocation9 [shape = 'u8[32768]{0}', space=vmem, size = 0x8000, scoped, tag = 'input window, operand 5, single buffered']
    #allocation10 [shape = 'u8[32768]{0}', space=vmem, size = 0x8000, scoped, tag = 'input window, operand 6, single buffered']
    #allocation11 [shape = 's32[1]{0}', space=sflag, size = 0x4, scoped, tag = 'scoped memory for tpu_custom_call.1']
    #allocation12 [shape = 'u8[1024]{0}', space=vmem, size = 0x400, scoped, tag = 'input window, operand 7, single buffered']
    #allocation13 [shape = 'u8[4096]{0}', space=vmem, size = 0x1000, scoped, tag = 'output window, operand 0, single buffered']
    %15 = vsyncpa [#allocation5], 0
    %16 = vsyncpa [#allocation8], 0
    %17 = vsyncpa [#allocation11], 0
    %18 = vsyncpa [#allocation6], 0
    // Predicated region
    $region2: #{tpu_custom_call.1} parent=1 // pred_check
      _
    $region3: #{tpu_custom_call.1} parent=1 // pred_check_branch
      %20 = sbr.rel (0) target = $region5
    $region4: #{tpu_custom_call.1} parent=1 // pred_region
      _
    $region5: #{tpu_custom_call.1} parent=1 // pred_fallthru
      _
    // Predicated region
    $region6: #{tpu_custom_call.1} parent=1 // pred_check
      _
    $region7: #{tpu_custom_call.1} parent=1 // pred_check_branch
      %22 = sbr.rel (0) target = $region9
    $region8: #{tpu_custom_call.1} parent=1 // pred_region
      _
    $region9: #{tpu_custom_call.1} parent=1 // pred_fallthru
      _
    // Predicated region
    $region10: #{tpu_custom_call.1} parent=1 // pred_check
      _
    $region11: #{tpu_custom_call.1} parent=1 // pred_check_branch
      %24 = sbr.rel (0) target = $region13
    $region12: #{tpu_custom_call.1} parent=1 // pred_region
      _
    $region13: #{tpu_custom_call.1} parent=1 // pred_fallthru
      _
    // Predicated region
    $region14: #{tpu_custom_call.1} parent=1 // pred_check
      _
    $region15: #{tpu_custom_call.1} parent=1 // pred_check_branch
      %26 = sbr.rel (0) target = $region17
    $region16: #{tpu_custom_call.1} parent=1 // pred_region
      %28 = vsyncadd [#allocation5], 0
      %s29 = sshll.u32 %s3, 4
      %s30 = int_to_ptr.hbm [resolvable:$true] %s29
      %s31 = sshll.u32 [#allocation4], 4
      %s32 = int_to_ptr.vmem [resolvable:$true] %s31
      %37 = dma.hbm_to_vmem [thread:$0]  %s30, 1024, %s32, [#allocation5], 128, 128, 8
    $region17: #{tpu_custom_call.1} parent=1 // pred_fallthru
      _
    // Predicated region
    $region18: #{tpu_custom_call.1} parent=1 // pred_check
      _
    $region19: #{tpu_custom_call.1} parent=1 // pred_check_branch
      %39 = sbr.rel (0) target = $region21
    $region20: #{tpu_custom_call.1} parent=1 // pred_region
      %41 = vsyncadd [#allocation8], 0
      %s43 = sshll.u32 %s4, 4
      %s44 = int_to_ptr.hbm [resolvable:$true] %s43
      %s45 = sshll.u32 [#allocation7], 4
      %s46 = int_to_ptr.vmem [resolvable:$true] %s45
      %48 = dma.hbm_to_vmem [thread:$0]  %s44, 32, %s46, [#allocation8]
    $region21: #{tpu_custom_call.1} parent=1 // pred_fallthru
      _
    // Predicated region
    $region22: #{tpu_custom_call.1} parent=1 // pred_check
      _
    $region23: #{tpu_custom_call.1} parent=1 // pred_check_branch
      %50 = sbr.rel (0) target = $region25
    $region24: #{tpu_custom_call.1} parent=1 // pred_region
      %52 = vsyncadd [#allocation8], 0
      %s53 = sshll.u32 %s5, 4
      %s54 = int_to_ptr.hbm [resolvable:$true] %s53
      %s55 = sshll.u32 [#allocation9], 4
      %s56 = int_to_ptr.vmem [resolvable:$true] %s55
      %61 = dma.hbm_to_vmem [thread:$0]  %s54, 1024, %s56, [#allocation8], 128, 128, 8
    $region25: #{tpu_custom_call.1} parent=1 // pred_fallthru
      _
    // Predicated region
    $region26: #{tpu_custom_call.1} parent=1 // pred_check
      _
    $region27: #{tpu_custom_call.1} parent=1 // pred_check_branch
      %63 = sbr.rel (0) target = $region29
    $region28: #{tpu_custom_call.1} parent=1 // pred_region
      %65 = vsyncadd [#allocation11], 0
      %s66 = sshll.u32 %s6, 4
      %s67 = int_to_ptr.hbm [resolvable:$true] %s66
      %s68 = sshll.u32 [#allocation10], 4
      %s69 = int_to_ptr.vmem [resolvable:$true] %s68
      %74 = dma.hbm_to_vmem [thread:$0]  %s67, 1024, %s69, [#allocation11], 128, 128, 8
    $region29: #{tpu_custom_call.1} parent=1 // pred_fallthru
      _
    // Predicated region
    $region30: #{tpu_custom_call.1} parent=1 // pred_check
      _
    $region31: #{tpu_custom_call.1} parent=1 // pred_check_branch
      %76 = sbr.rel (0) target = $region33
    $region32: #{tpu_custom_call.1} parent=1 // pred_region
      %78 = vsyncadd [#allocation11], 0
      %s80 = sshll.u32 %s7, 4
      %s81 = int_to_ptr.hbm [resolvable:$true] %s80
      %s82 = sshll.u32 [#allocation12], 4
      %s83 = int_to_ptr.vmem [resolvable:$true] %s82
      %85 = dma.hbm_to_vmem [thread:$0]  %s81, 32, %s83, [#allocation11]
    $region33: #{tpu_custom_call.1} parent=1 // pred_fallthru
      _
    // Predicated region
    $region34: #{tpu_custom_call.1} parent=1 // pred_check
      _
    $region35: #{tpu_custom_call.1} parent=1 // pred_check_branch
      %87 = sbr.rel (0) target = $region37
    $region36: #{tpu_custom_call.1} parent=1 // pred_region
      _
    $region37: #{tpu_custom_call.1} parent=1 // pred_fallthru
      _
    // Predicated region
    $region38: #{tpu_custom_call.1} parent=1 // pred_check
      _
    $region39: #{tpu_custom_call.1} parent=1 // pred_check_branch
      %89 = sbr.rel (0) target = $region41
    $region40: #{tpu_custom_call.1} parent=1 // pred_region
      _
    $region41: #{tpu_custom_call.1} parent=1 // pred_fallthru
      _
    // Predicated region
    $region42: #{tpu_custom_call.1} parent=1 // pred_check
      _
    $region43: #{tpu_custom_call.1} parent=1 // pred_check_branch
      %91 = sbr.rel (0) target = $region45
    $region44: #{tpu_custom_call.1} parent=1 // pred_region
      %93 = dma.done [#allocation5], 1024
    $region45: #{tpu_custom_call.1} parent=1 // pred_fallthru
      _
    // Predicated region
    $region46: #{tpu_custom_call.1} parent=1 // pred_check
      _
    $region47: #{tpu_custom_call.1} parent=1 // pred_check_branch
      %95 = sbr.rel (0) target = $region49
    $region48: #{tpu_custom_call.1} parent=1 // pred_region
      %97 = dma.done [#allocation8], 32
    $region49: #{tpu_custom_call.1} parent=1 // pred_fallthru
      _
    // Predicated region
    $region50: #{tpu_custom_call.1} parent=1 // pred_check
      _
    $region51: #{tpu_custom_call.1} parent=1 // pred_check_branch
      %99 = sbr.rel (0) target = $region53
    $region52: #{tpu_custom_call.1} parent=1 // pred_region
      %101 = dma.done [#allocation8], 1024
    $region53: #{tpu_custom_call.1} parent=1 // pred_fallthru
      _
    // Predicated region
    $region54: #{tpu_custom_call.1} parent=1 // pred_check
      _
    $region55: #{tpu_custom_call.1} parent=1 // pred_check_branch
      %103 = sbr.rel (0) target = $region57
    $region56: #{tpu_custom_call.1} parent=1 // pred_region
      %105 = dma.done [#allocation11], 1024
    $region57: #{tpu_custom_call.1} parent=1 // pred_fallthru
      _
    // Predicated region
    $region58: #{tpu_custom_call.1} parent=1 // pred_check
      _
    $region59: #{tpu_custom_call.1} parent=1 // pred_check_branch
      %107 = sbr.rel (0) target = $region61
    $region60: #{tpu_custom_call.1} parent=1 // pred_region
      %109 = dma.done [#allocation11], 32
    $region61: #{tpu_custom_call.1} parent=1 // pred_fallthru
      _
    %v111 = vld [vmem:[%s0] sm:$0xff]
    %v112 = vlaneseq
    %v113 = vand.u32 %v112, 127
    %v114 = vadd.s32 %v113, 128
    %vm115 = vcmp.lt.s32.totalorder %v113, 0
    %v116 = vsub.s32 0, %v113
    %v117 = vsel %vm115, %v116, %v113
    %v118 = vshrl.u32 %v117, 6
    %v119 = vand.u32 %v117, 63
    %v120 = vsub.s32 0, %v119
    %v121 = vsel %vm115, %v120, %v119
    %vm122 = vcmp.lt.s32.totalorder %v114, 0
    %v123 = vsub.s32 0, %v114
    %v124 = vsel %vm122, %v123, %v114
    %v125 = vshrl.u32 %v124, 6
    %v126 = vand.u32 %v124, 63
    %v127 = vsub.s32 0, %v126
    %v128 = vsel %vm122, %v127, %v126
    %vm129 = vcmp.ne.s32.totalorder %v121, 0
    %vm130 = vcmp.ne.s32.totalorder %v128, 0
    %vm131 = vcmp.lt.s32.totalorder %v121, 0
    %vm132 = vcmp.lt.s32.totalorder %v128, 0
    %vm133 = vmand %vm131, %vm129
    %vm134 = vmand %vm132, %vm130
    %v135 = vadd.s32 %v121, 64
    %v136 = vadd.s32 %v128, 64
    %v137 = vsel %vm133, %v135, %v121
    %v138 = vsel %vm134, %v136, %v128
    %vm139 = vcmp.lt.s32.totalorder %v137, 32
    %vm140 = vcmp.lt.s32.totalorder %v138, 32
    %v141 = vld [vmem:[%s1] sm:$0xf]
    %v142 = vld [vmem:[%s1 + $0x4] sm:$0xf]
    %v143 = vld [vmem:[%s1 + $0x8] sm:$0xf]
    %v144 = vld [vmem:[%s1 + $0xc] sm:$0xf]
    %v145 = vld [vmem:[%s1 + $0x10] sm:$0xf]
    %v146 = vld [vmem:[%s1 + $0x14] sm:$0xf]
    %v147 = vld [vmem:[%s1 + $0x18] sm:$0xf]
    %v148 = vld [vmem:[%s1 + $0x1c] sm:$0xf]
    %v149 = vld [vmem:[%s2] sm:$0xff]
    %v150 = vld [vmem:[%s2 + $0x8] sm:$0xff]
    %v151 = vld [vmem:[%s2 + $0x10] sm:$0xff]
    %v152 = vld [vmem:[%s2 + $0x18] sm:$0xff]
    %v153 = vld [vmem:[#allocation4] sm:$0xff]
    %v154 = vld [vmem:[#allocation4 + $0x8] sm:$0xff]
    %v155 = vld [vmem:[#allocation4 + $0x10] sm:$0xff]
    %v156 = vld [vmem:[#allocation4 + $0x18] sm:$0xff]
    %v157 = vld [vmem:[#allocation4 + $0x20] sm:$0xff]
    %v158 = vld [vmem:[#allocation4 + $0x28] sm:$0xff]
    %v159 = vld [vmem:[#allocation4 + $0x30] sm:$0xff]
    %v160 = vld [vmem:[#allocation4 + $0x38] sm:$0xff]
    %v161 = vld [vmem:[#allocation7] sm:$0x3]
    %v163 = vperm.slane %v161, 0
    %v164 = vperm.slane %v161, 1
    %v175 = vunpack.c.l.b16 %v141
    %v176 = vunpack.c.l.b16 %v142
    %v177 = vunpack.c.l.b16 %v143
    %v178 = vunpack.c.l.b16 %v144
    %v179 = vunpack.c.l.b16 %v145
    %v180 = vunpack.c.l.b16 %v146
    %v181 = vunpack.c.l.b16 %v147
    %v182 = vunpack.c.l.b16 %v148
    %v183 = vpack.c.b16 %v176, %v175
    %v184 = vpack.c.b16 %v178, %v177
    %v185 = vpack.c.b16 %v180, %v179
    %v186 = vpack.c.b16 %v182, %v181
    %v191 = vunpack.c.l.b16 %v149
    %v192 = vunpack.c.h.b16 %v149
    %v193 = vunpack.c.l.b16 %v150
    %v194 = vunpack.c.h.b16 %v150
    %v195 = vunpack.c.l.b16 %v151
    %v196 = vunpack.c.h.b16 %v151
    %v197 = vunpack.c.l.b16 %v152
    %v198 = vunpack.c.h.b16 %v152
    %v199 = vpack.c.b16 %v193, %v191
    %v200 = vpack.c.b16 %v194, %v192
    %v201 = vpack.c.b16 %v197, %v195
    %v202 = vpack.c.b16 %v198, %v196
    %vm207 = vcmask 261120
    %v209 = vsel %vm207, %v183, 0
    %v212 = vsel %vm207, %v184, 0
    %v215 = vsel %vm207, %v185, 0
    %v218 = vsel %vm207, %v186, 0
    %220 = vmatpush.bf16.msra.mxu0 0
    %221 = vmatpush.bf16.msra.mxu0 0
    %222 = vmatpush.bf16.msra.mxu0 0
    %223 = vmatpush.bf16.msra.mxu0 0
    %224 = vmatpush.bf16.msra.mxu0 0
    %225 = vmatpush.bf16.msra.mxu0 0
    %226 = vmatpush.bf16.msra.mxu0 %v201
    %227 = vmatpush.bf16.msra.mxu0 %v199
    %228 = vmatmul.bf16.gmra.mxu0 %v209
    %v229 = vpop.f32.mrf.mxu0
    %v230 = vadd.f32 %v163, %v229
    %v231 = vpop.f32.mrf.mxu0
    %v232 = vadd.f32 %v163, %v231
    %233 = vmatmul.bf16.gmra.mxu0 %v212
    %v234 = vpop.f32.mrf.mxu0
    %v235 = vadd.f32 %v163, %v234
    %v236 = vpop.f32.mrf.mxu0
    %v237 = vadd.f32 %v163, %v236
    %238 = vmatmul.bf16.gmra.mxu0 %v215
    %v239 = vpop.f32.mrf.mxu0
    %v240 = vadd.f32 %v163, %v239
    %v241 = vpop.f32.mrf.mxu0
    %v242 = vadd.f32 %v163, %v241
    %243 = vmatmul.bf16.gmra.mxu0 %v218
    %v244 = vpop.f32.mrf.mxu0
    %v245 = vadd.f32 %v163, %v244
    %v246 = vpop.f32.mrf.mxu0
    %v247 = vadd.f32 %v163, %v246
    %248 = vdwg.mxu0
    %249 = vmatpush.bf16.msra.mxu0 0
    %250 = vmatpush.bf16.msra.mxu0 0
    %251 = vmatpush.bf16.msra.mxu0 0
    %252 = vmatpush.bf16.msra.mxu0 0
    %253 = vmatpush.bf16.msra.mxu0 0
    %254 = vmatpush.bf16.msra.mxu0 0
    %255 = vmatpush.bf16.msra.mxu0 %v202
    %256 = vmatpush.bf16.msra.mxu0 %v200
    %257 = vmatmul.bf16.gmra.mxu0 %v209
    %v258 = vpop.f32.mrf.mxu0
    %v259 = vadd.f32 %v164, %v258
    %v260 = vpop.f32.mrf.mxu0
    %v261 = vadd.f32 %v164, %v260
    %262 = vmatmul.bf16.gmra.mxu0 %v212
    %v263 = vpop.f32.mrf.mxu0
    %v264 = vadd.f32 %v164, %v263
    %v265 = vpop.f32.mrf.mxu0
    %v266 = vadd.f32 %v164, %v265
    %267 = vmatmul.bf16.gmra.mxu0 %v215
    %v268 = vpop.f32.mrf.mxu0
    %v269 = vadd.f32 %v164, %v268
    %v270 = vpop.f32.mrf.mxu0
    %v271 = vadd.f32 %v164, %v270
    %272 = vmatmul.bf16.gmra.mxu0 %v218
    %v273 = vpop.f32.mrf.mxu0
    %v274 = vadd.f32 %v164, %v273
    %v275 = vpop.f32.mrf.mxu0
    %v276 = vadd.f32 %v164, %v275
    %277 = vdwg.mxu0
    %v278 = vpack.c.bf16 %v259, %v230
    %v279 = vpack.c.bf16 %v261, %v232
    %v280 = vpack.c.bf16 %v264, %v235
    %v281 = vpack.c.bf16 %v266, %v237
    %v282 = vpack.c.bf16 %v269, %v240
    %v283 = vpack.c.bf16 %v271, %v242
    %v284 = vpack.c.bf16 %v274, %v245
    %v285 = vpack.c.bf16 %v276, %v247
    %286 = vst [vmem:[#allocation2] sm:$0xff] %v278
    %287 = vst [vmem:[#allocation2 + $0x8] sm:$0xff] %v279
    %288 = vst [vmem:[#allocation2 + $0x10] sm:$0xff] %v280
    %289 = vst [vmem:[#allocation2 + $0x18] sm:$0xff] %v281
    %290 = vst [vmem:[#allocation2 + $0x20] sm:$0xff] %v282
    %291 = vst [vmem:[#allocation2 + $0x28] sm:$0xff] %v283
    %292 = vst [vmem:[#allocation2 + $0x30] sm:$0xff] %v284
    %293 = vst [vmem:[#allocation2 + $0x38] sm:$0xff] %v285
    %v294 = vld [vmem:[#allocation2] sm:$0xff]
    %s295 = scalar_lea.vmem [#allocation2], 56
    %v296 = vld [vmem:[%s295] sm:$0xff]
    %vm297 = vmpackc.low %vm140, %vm139
    %v298 = vsel %vm297, %v294, %v296
    %vm299 = vcmp.lt.s32.totalorder %v113, 32
    %v300 = vsel %vm299, 0, 7
    %301 = vset.pattern.permute.xlu0 0
    %302 = vperm.xlu0 %301, %v111
    %v303 = vpop.permute.xlu0 %302
    %vm304 = vcmp.lt.s32.totalorder %v300, %v303
    %v305 = vunpack.c.l.bf16 %v298
    %v306 = vunpack.c.h.bf16 %v298
    %v315 = vunpack.c.l.b16 %v153
    %v316 = vunpack.c.h.b16 %v153
    %v317 = vunpack.c.l.b16 %v154
    %v318 = vunpack.c.h.b16 %v154
    %v319 = vunpack.c.l.b16 %v155
    %v320 = vunpack.c.h.b16 %v155
    %v321 = vunpack.c.l.b16 %v156
    %v322 = vunpack.c.h.b16 %v156
    %v323 = vunpack.c.l.b16 %v157
    %v324 = vunpack.c.h.b16 %v157
    %v325 = vunpack.c.l.b16 %v158
    %v326 = vunpack.c.h.b16 %v158
    %v327 = vunpack.c.l.b16 %v159
    %v328 = vunpack.c.h.b16 %v159
    %v329 = vunpack.c.l.b16 %v160
    %v330 = vunpack.c.h.b16 %v160
    %v331 = vpack.c.b16 %v317, %v315
    %v332 = vpack.c.b16 %v318, %v316
    %v333 = vpack.c.b16 %v321, %v319
    %v334 = vpack.c.b16 %v322, %v320
    %v335 = vpack.c.b16 %v325, %v323
    %v336 = vpack.c.b16 %v326, %v324
    %v337 = vpack.c.b16 %v329, %v327
    %v338 = vpack.c.b16 %v330, %v328
    %vm347 = vcmask 523264
    %v349 = vsel %vm347, 0, 0
    %351 = vmatpush.bf16.msra.mxu0 0
    %352 = vmatpush.bf16.msra.mxu0 0
    %353 = vmatpush.bf16.msra.mxu0 0
    %354 = vmatpush.bf16.msra.mxu0 0
    %355 = vmatpush.bf16.msra.mxu0 %v337
    %356 = vmatpush.bf16.msra.mxu0 %v335
    %357 = vmatpush.bf16.msra.mxu0 %v333
    %358 = vmatpush.bf16.msra.mxu0 %v331
    %359 = vmatmul.bf16.gmra.mxu0 %v349
    %v360 = vpop.f32.mrf.mxu0
    %v361 = vadd.f32 %v305, %v360
    %v362 = vpop.f32.mrf.mxu0
    %363 = vdwg.mxu0
    %364 = vmatpush.bf16.msra.mxu0 0
    %365 = vmatpush.bf16.msra.mxu0 0
    %366 = vmatpush.bf16.msra.mxu0 0
    %367 = vmatpush.bf16.msra.mxu0 0
    %368 = vmatpush.bf16.msra.mxu0 %v338
    %369 = vmatpush.bf16.msra.mxu0 %v336
    %370 = vmatpush.bf16.msra.mxu0 %v334
    %371 = vmatpush.bf16.msra.mxu0 %v332
    %372 = vmatmul.bf16.gmra.mxu0 %v349
    %v373 = vpop.f32.mrf.mxu0
    %v374 = vadd.f32 %v306, %v373
    %v375 = vpop.f32.mrf.mxu0
    %376 = vdwg.mxu0
    %v377 = vxor.u32 %v361, 2147483648
    %v378 = vxor.u32 %v374, 2147483648
    %v379 = vmul.f32 %v377, 1.442695
    %v380 = vpow.pop %v379
    %v381 = vmul.f32 %v378, 1.442695
    %v382 = vpow.pop %v381
    %v383 = vadd.f32 %v380, 1.0
    %v384 = vadd.f32 %v382, 1.0
    %v385 = vrcp.pop %v383
    %v386 = vmul.f32 %v383, %v385
    %v387 = vsub.f32 1.0, %v386
    %v388 = vmul.f32 %v385, %v387
    %v389 = vadd.f32 %v385, %v388
    %vm390 = vweird.f32 %v383
    %vm391 = vweird.f32 %v385
    %vm392 = vmor %vm390, %vm391
    %v393 = vsel %vm392, %v385, %v389
    %v394 = vand.u32 2147483647, %v383
    %vm395 = vcmp.eq.f32.partialorder %v394, 8.507059e+37
    %v396 = vand.u32 %v383, 2147483648
    %v397 = vor.u32 1.1754944e-38, %v396
    %v398 = vsel %vm395, %v397, %v393
    %v399 = vmul.f32 1.0, %v398
    %v400 = vrcp.pop %v384
    %v401 = vmul.f32 %v384, %v400
    %v402 = vsub.f32 1.0, %v401
    %v403 = vmul.f32 %v400, %v402
    %v404 = vadd.f32 %v400, %v403
    %vm405 = vweird.f32 %v384
    %vm406 = vweird.f32 %v400
    %vm407 = vmor %vm405, %vm406
    %v408 = vsel %vm407, %v400, %v404
    %v409 = vand.u32 2147483647, %v384
    %vm410 = vcmp.eq.f32.partialorder %v409, 8.507059e+37
    %v411 = vand.u32 %v384, 2147483648
    %v412 = vor.u32 1.1754944e-38, %v411
    %v413 = vsel %vm410, %v412, %v408
    %v414 = vmul.f32 1.0, %v413
    %v415 = vtanh.pop %v374
    %v416 = vmul.f32 %v399, 0.0
    %v417 = vmul.f32 %v399, %v415
    %419 = vrot.lane.b32.xlu0 %v417, 64
    %v420 = vpop.permute.xlu0 %419
    %v422 = vadd.f32 %v416, %v420
    %v423 = vtanh.pop %v422
    %v424 = vmul.f32 %v414, %v423
    %426 = vrot.lane.b32.xlu0 %v424, 64
    %v427 = vpop.permute.xlu0 %426
    %v429 = vsel %vm304, %v427, 0.0
    %431 = vrot.lane.b32.xlu0 %v422, 64
    %v432 = vpop.permute.xlu0 %431
    %v434 = vsel %vm304, %v432, 0.0
    %v435 = vpack.c.bf16 %v429, %v429
    %vm436 = vcmask 257024
    %437 = vst.msk [vmem:[#allocation3] sm:$0xf] %vm436, %v435
    %s438 = scalar_lea.vmem [#allocation3], 28
    %vm439 = vcmask 519424
    %440 = vst.msk [vmem:[%s438] sm:$0xf] %vm439, %v435
    %s441 = scalar_lea.vmem [#allocation2], 8
    %v442 = vld [vmem:[%s441] sm:$0xff]
    %s443 = scalar_lea.vmem [#allocation2], 48
    %v444 = vld [vmem:[%s443] sm:$0xff]
    %v445 = vsel %vm297, %v442, %v444
    %v446 = vsel %vm299, 1, 6
    %vm447 = vcmp.lt.s32.totalorder %v446, %v303
    %v448 = vunpack.c.l.bf16 %v445
    %v449 = vunpack.c.h.bf16 %v445
    %v451 = vsel %vm347, %v435, 0
    %453 = vmatpush.bf16.msra.mxu0 0
    %454 = vmatpush.bf16.msra.mxu0 0
    %455 = vmatpush.bf16.msra.mxu0 0
    %456 = vmatpush.bf16.msra.mxu0 0
    %457 = vmatpush.bf16.msra.mxu0 %v337
    %458 = vmatpush.bf16.msra.mxu0 %v335
    %459 = vmatpush.bf16.msra.mxu0 %v333
    %460 = vmatpush.bf16.msra.mxu0 %v331
    %461 = vmatmul.bf16.gmra.mxu0 %v451
    %v462 = vpop.f32.mrf.mxu0
    %v463 = vadd.f32 %v448, %v462
    %v464 = vpop.f32.mrf.mxu0
    %465 = vdwg.mxu0
    %466 = vmatpush.bf16.msra.mxu0 0
    %467 = vmatpush.bf16.msra.mxu0 0
    %468 = vmatpush.bf16.msra.mxu0 0
    %469 = vmatpush.bf16.msra.mxu0 0
    %470 = vmatpush.bf16.msra.mxu0 %v338
    %471 = vmatpush.bf16.msra.mxu0 %v336
    %472 = vmatpush.bf16.msra.mxu0 %v334
    %473 = vmatpush.bf16.msra.mxu0 %v332
    %474 = vmatmul.bf16.gmra.mxu0 %v451
    %v475 = vpop.f32.mrf.mxu0
    %v476 = vadd.f32 %v449, %v475
    %v477 = vpop.f32.mrf.mxu0
    %478 = vdwg.mxu0
    %v479 = vxor.u32 %v463, 2147483648
    %v480 = vxor.u32 %v476, 2147483648
    %v481 = vmul.f32 %v479, 1.442695
    %v482 = vpow.pop %v481
    %v483 = vmul.f32 %v480, 1.442695
    %v484 = vpow.pop %v483
    %v485 = vadd.f32 %v482, 1.0
    %v486 = vadd.f32 %v484, 1.0
    %v487 = vrcp.pop %v485
    %v488 = vmul.f32 %v485, %v487
    %v489 = vsub.f32 1.0, %v488
    %v490 = vmul.f32 %v487, %v489
    %v491 = vadd.f32 %v487, %v490
    %vm492 = vweird.f32 %v485
    %vm493 = vweird.f32 %v487
    %vm494 = vmor %vm492, %vm493
    %v495 = vsel %vm494, %v487, %v491
    %v496 = vand.u32 2147483647, %v485
    %vm497 = vcmp.eq.f32.partialorder %v496, 8.507059e+37
    %v498 = vand.u32 %v485, 2147483648
    %v499 = vor.u32 1.1754944e-38, %v498
    %v500 = vsel %vm497, %v499, %v495
    %v501 = vmul.f32 1.0, %v500
    %v502 = vrcp.pop %v486
    %v503 = vmul.f32 %v486, %v502
    %v504 = vsub.f32 1.0, %v503
    %v505 = vmul.f32 %v502, %v504
    %v506 = vadd.f32 %v502, %v505
    %vm507 = vweird.f32 %v486
    %vm508 = vweird.f32 %v502
    %vm509 = vmor %vm507, %vm508
    %v510 = vsel %vm509, %v502, %v506
    %v511 = vand.u32 2147483647, %v486
    %vm512 = vcmp.eq.f32.partialorder %v511, 8.507059e+37
    %v513 = vand.u32 %v486, 2147483648
    %v514 = vor.u32 1.1754944e-38, %v513
    %v515 = vsel %vm512, %v514, %v510
    %v516 = vmul.f32 1.0, %v515
    %v517 = vtanh.pop %v476
    %519 = vrot.lane.b32.xlu0 %v434, 64
    %v520 = vpop.permute.xlu0 %519
    %v522 = vmul.f32 %v501, %v520
    %v523 = vmul.f32 %v501, %v517
    %525 = vrot.lane.b32.xlu0 %v523, 64
    %v526 = vpop.permute.xlu0 %525
    %v528 = vadd.f32 %v522, %v526
    %v529 = vtanh.pop %v528
    %v530 = vmul.f32 %v516, %v529
    %532 = vrot.lane.b32.xlu0 %v530, 64
    %v533 = vpop.permute.xlu0 %532
    %v535 = vsel %vm447, %v533, %v429
    %537 = vrot.lane.b32.xlu0 %v528, 64
    %v538 = vpop.permute.xlu0 %537
    %v540 = vsel %vm447, %v538, %v434
    %v541 = vpack.c.bf16 %v535, %v535
    %s542 = scalar_lea.vmem [#allocation3], 4
    %543 = vst.msk [vmem:[%s542] sm:$0xf] %vm436, %v541
    %s544 = scalar_lea.vmem [#allocation3], 24
    %545 = vst.msk [vmem:[%s544] sm:$0xf] %vm439, %v541
    %s546 = scalar_lea.vmem [#allocation2], 16
    %v547 = vld [vmem:[%s546] sm:$0xff]
    %s548 = scalar_lea.vmem [#allocation2], 40
    %v549 = vld [vmem:[%s548] sm:$0xff]
    %v550 = vsel %vm297, %v547, %v549
    %v551 = vsel %vm299, 2, 5
    %vm552 = vcmp.lt.s32.totalorder %v551, %v303
    %v553 = vunpack.c.l.bf16 %v550
    %v554 = vunpack.c.h.bf16 %v550
    %v556 = vsel %vm347, %v541, 0
    %558 = vmatpush.bf16.msra.mxu0 0
    %559 = vmatpush.bf16.msra.mxu0 0
    %560 = vmatpush.bf16.msra.mxu0 0
    %561 = vmatpush.bf16.msra.mxu0 0
    %562 = vmatpush.bf16.msra.mxu0 %v337
    %563 = vmatpush.bf16.msra.mxu0 %v335
    %564 = vmatpush.bf16.msra.mxu0 %v333
    %565 = vmatpush.bf16.msra.mxu0 %v331
    %566 = vmatmul.bf16.gmra.mxu0 %v556
    %v567 = vpop.f32.mrf.mxu0
    %v568 = vadd.f32 %v553, %v567
    %v569 = vpop.f32.mrf.mxu0
    %570 = vdwg.mxu0
    %571 = vmatpush.bf16.msra.mxu0 0
    %572 = vmatpush.bf16.msra.mxu0 0
    %573 = vmatpush.bf16.msra.mxu0 0
    %574 = vmatpush.bf16.msra.mxu0 0
    %575 = vmatpush.bf16.msra.mxu0 %v338
    %576 = vmatpush.bf16.msra.mxu0 %v336
    %577 = vmatpush.bf16.msra.mxu0 %v334
    %578 = vmatpush.bf16.msra.mxu0 %v332
    %579 = vmatmul.bf16.gmra.mxu0 %v556
    %v580 = vpop.f32.mrf.mxu0
    %v581 = vadd.f32 %v554, %v580
    %v582 = vpop.f32.mrf.mxu0
    %583 = vdwg.mxu0
    %v584 = vxor.u32 %v568, 2147483648
    %v585 = vxor.u32 %v581, 2147483648
    %v586 = vmul.f32 %v584, 1.442695
    %v587 = vpow.pop %v586
    %v588 = vmul.f32 %v585, 1.442695
    %v589 = vpow.pop %v588
    %v590 = vadd.f32 %v587, 1.0
    %v591 = vadd.f32 %v589, 1.0
    %v592 = vrcp.pop %v590
    %v593 = vmul.f32 %v590, %v592
    %v594 = vsub.f32 1.0, %v593
    %v595 = vmul.f32 %v592, %v594
    %v596 = vadd.f32 %v592, %v595
    %vm597 = vweird.f32 %v590
    %vm598 = vweird.f32 %v592
    %vm599 = vmor %vm597, %vm598
    %v600 = vsel %vm599, %v592, %v596
    %v601 = vand.u32 2147483647, %v590
    %vm602 = vcmp.eq.f32.partialorder %v601, 8.507059e+37
    %v603 = vand.u32 %v590, 2147483648
    %v604 = vor.u32 1.1754944e-38, %v603
    %v605 = vsel %vm602, %v604, %v600
    %v606 = vmul.f32 1.0, %v605
    %v607 = vrcp.pop %v591
    %v608 = vmul.f32 %v591, %v607
    %v609 = vsub.f32 1.0, %v608
    %v610 = vmul.f32 %v607, %v609
    %v611 = vadd.f32 %v607, %v610
    %vm612 = vweird.f32 %v591
    %vm613 = vweird.f32 %v607
    %vm614 = vmor %vm612, %vm613
    %v615 = vsel %vm614, %v607, %v611
    %v616 = vand.u32 2147483647, %v591
    %vm617 = vcmp.eq.f32.partialorder %v616, 8.507059e+37
    %v618 = vand.u32 %v591, 2147483648
    %v619 = vor.u32 1.1754944e-38, %v618
    %v620 = vsel %vm617, %v619, %v615
    %v621 = vmul.f32 1.0, %v620
    %v622 = vtanh.pop %v581
    %624 = vrot.lane.b32.xlu0 %v540, 64
    %v625 = vpop.permute.xlu0 %624
    %v627 = vmul.f32 %v606, %v625
    %v628 = vmul.f32 %v606, %v622
    %630 = vrot.lane.b32.xlu0 %v628, 64
    %v631 = vpop.permute.xlu0 %630
    %v633 = vadd.f32 %v627, %v631
    %v634 = vtanh.pop %v633
    %v635 = vmul.f32 %v621, %v634
    %637 = vrot.lane.b32.xlu0 %v635, 64
    %v638 = vpop.permute.xlu0 %637
    %v640 = vsel %vm552, %v638, %v535
    %642 = vrot.lane.b32.xlu0 %v633, 64
    %v643 = vpop.permute.xlu0 %642
    %v645 = vsel %vm552, %v643, %v540
    %v646 = vpack.c.bf16 %v640, %v640
    %s647 = scalar_lea.vmem [#allocation3], 8
    %648 = vst.msk [vmem:[%s647] sm:$0xf] %vm436, %v646
    %s649 = scalar_lea.vmem [#allocation3], 20
    %650 = vst.msk [vmem:[%s649] sm:$0xf] %vm439, %v646
    %s651 = scalar_lea.vmem [#allocation2], 24
    %v652 = vld [vmem:[%s651] sm:$0xff]
    %s653 = scalar_lea.vmem [#allocation2], 32
    %v654 = vld [vmem:[%s653] sm:$0xff]
    %v655 = vsel %vm297, %v652, %v654
    %v656 = vsel %vm299, 3, 4
    %vm657 = vcmp.lt.s32.totalorder %v656, %v303
    %v658 = vunpack.c.l.bf16 %v655
    %v659 = vunpack.c.h.bf16 %v655
    %v661 = vsel %vm347, %v646, 0
    %663 = vmatpush.bf16.msra.mxu0 0
    %664 = vmatpush.bf16.msra.mxu0 0
    %665 = vmatpush.bf16.msra.mxu0 0
    %666 = vmatpush.bf16.msra.mxu0 0
    %667 = vmatpush.bf16.msra.mxu0 %v337
    %668 = vmatpush.bf16.msra.mxu0 %v335
    %669 = vmatpush.bf16.msra.mxu0 %v333
    %670 = vmatpush.bf16.msra.mxu0 %v331
    %671 = vmatmul.bf16.gmra.mxu0 %v661
    %v672 = vpop.f32.mrf.mxu0
    %v673 = vadd.f32 %v658, %v672
    %v674 = vpop.f32.mrf.mxu0
    %675 = vdwg.mxu0
    %676 = vmatpush.bf16.msra.mxu0 0
    %677 = vmatpush.bf16.msra.mxu0 0
    %678 = vmatpush.bf16.msra.mxu0 0
    %679 = vmatpush.bf16.msra.mxu0 0
    %680 = vmatpush.bf16.msra.mxu0 %v338
    %681 = vmatpush.bf16.msra.mxu0 %v336
    %682 = vmatpush.bf16.msra.mxu0 %v334
    %683 = vmatpush.bf16.msra.mxu0 %v332
    %684 = vmatmul.bf16.gmra.mxu0 %v661
    %v685 = vpop.f32.mrf.mxu0
    %v686 = vadd.f32 %v659, %v685
    %v687 = vpop.f32.mrf.mxu0
    %688 = vdwg.mxu0
    %v689 = vxor.u32 %v673, 2147483648
    %v690 = vxor.u32 %v686, 2147483648
    %v691 = vmul.f32 %v689, 1.442695
    %v692 = vpow.pop %v691
    %v693 = vmul.f32 %v690, 1.442695
    %v694 = vpow.pop %v693
    %v695 = vadd.f32 %v692, 1.0
    %v696 = vadd.f32 %v694, 1.0
    %v697 = vrcp.pop %v695
    %v698 = vmul.f32 %v695, %v697
    %v699 = vsub.f32 1.0, %v698
    %v700 = vmul.f32 %v697, %v699
    %v701 = vadd.f32 %v697, %v700
    %vm702 = vweird.f32 %v695
    %vm703 = vweird.f32 %v697
    %vm704 = vmor %vm702, %vm703
    %v705 = vsel %vm704, %v697, %v701
    %v706 = vand.u32 2147483647, %v695
    %vm707 = vcmp.eq.f32.partialorder %v706, 8.507059e+37
    %v708 = vand.u32 %v695, 2147483648
    %v709 = vor.u32 1.1754944e-38, %v708
    %v710 = vsel %vm707, %v709, %v705
    %v711 = vmul.f32 1.0, %v710
    %v712 = vrcp.pop %v696
    %v713 = vmul.f32 %v696, %v712
    %v714 = vsub.f32 1.0, %v713
    %v715 = vmul.f32 %v712, %v714
    %v716 = vadd.f32 %v712, %v715
    %vm717 = vweird.f32 %v696
    %vm718 = vweird.f32 %v712
    %vm719 = vmor %vm717, %vm718
    %v720 = vsel %vm719, %v712, %v716
    %v721 = vand.u32 2147483647, %v696
    %vm722 = vcmp.eq.f32.partialorder %v721, 8.507059e+37
    %v723 = vand.u32 %v696, 2147483648
    %v724 = vor.u32 1.1754944e-38, %v723
    %v725 = vsel %vm722, %v724, %v720
    %v726 = vmul.f32 1.0, %v725
    %v727 = vtanh.pop %v686
    %729 = vrot.lane.b32.xlu0 %v645, 64
    %v730 = vpop.permute.xlu0 %729
    %v732 = vmul.f32 %v711, %v730
    %v733 = vmul.f32 %v711, %v727
    %735 = vrot.lane.b32.xlu0 %v733, 64
    %v736 = vpop.permute.xlu0 %735
    %v738 = vadd.f32 %v732, %v736
    %v739 = vtanh.pop %v738
    %v740 = vmul.f32 %v726, %v739
    %742 = vrot.lane.b32.xlu0 %v740, 64
    %v743 = vpop.permute.xlu0 %742
    %v745 = vsel %vm657, %v743, %v640
    %747 = vrot.lane.b32.xlu0 %v738, 64
    %v748 = vpop.permute.xlu0 %747
    %v750 = vsel %vm657, %v748, %v645
    %v751 = vpack.c.bf16 %v745, %v745
    %s752 = scalar_lea.vmem [#allocation3], 12
    %753 = vst.msk [vmem:[%s752] sm:$0xf] %vm436, %v751
    %s754 = scalar_lea.vmem [#allocation3], 16
    %755 = vst.msk [vmem:[%s754] sm:$0xf] %vm439, %v751
    %v756 = vld [vmem:[%s653] sm:$0xff]
    %v757 = vld [vmem:[%s651] sm:$0xff]
    %v758 = vsel %vm297, %v756, %v757
    %v759 = vsel %vm299, 4, 3
    %vm760 = vcmp.lt.s32.totalorder %v759, %v303
    %v761 = vunpack.c.l.bf16 %v758
    %v762 = vunpack.c.h.bf16 %v758
    %v764 = vsel %vm347, %v751, 0
    %766 = vmatpush.bf16.msra.mxu0 0
    %767 = vmatpush.bf16.msra.mxu0 0
    %768 = vmatpush.bf16.msra.mxu0 0
    %769 = vmatpush.bf16.msra.mxu0 0
    %770 = vmatpush.bf16.msra.mxu0 %v337
    %771 = vmatpush.bf16.msra.mxu0 %v335
    %772 = vmatpush.bf16.msra.mxu0 %v333
    %773 = vmatpush.bf16.msra.mxu0 %v331
    %774 = vmatmul.bf16.gmra.mxu0 %v764
    %v775 = vpop.f32.mrf.mxu0
    %v776 = vadd.f32 %v761, %v775
    %v777 = vpop.f32.mrf.mxu0
    %778 = vdwg.mxu0
    %779 = vmatpush.bf16.msra.mxu0 0
    %780 = vmatpush.bf16.msra.mxu0 0
    %781 = vmatpush.bf16.msra.mxu0 0
    %782 = vmatpush.bf16.msra.mxu0 0
    %783 = vmatpush.bf16.msra.mxu0 %v338
    %784 = vmatpush.bf16.msra.mxu0 %v336
    %785 = vmatpush.bf16.msra.mxu0 %v334
    %786 = vmatpush.bf16.msra.mxu0 %v332
    %787 = vmatmul.bf16.gmra.mxu0 %v764
    %v788 = vpop.f32.mrf.mxu0
    %v789 = vadd.f32 %v762, %v788
    %v790 = vpop.f32.mrf.mxu0
    %791 = vdwg.mxu0
    %v792 = vxor.u32 %v776, 2147483648
    %v793 = vxor.u32 %v789, 2147483648
    %v794 = vmul.f32 %v792, 1.442695
    %v795 = vpow.pop %v794
    %v796 = vmul.f32 %v793, 1.442695
    %v797 = vpow.pop %v796
    %v798 = vadd.f32 %v795, 1.0
    %v799 = vadd.f32 %v797, 1.0
    %v800 = vrcp.pop %v798
    %v801 = vmul.f32 %v798, %v800
    %v802 = vsub.f32 1.0, %v801
    %v803 = vmul.f32 %v800, %v802
    %v804 = vadd.f32 %v800, %v803
    %vm805 = vweird.f32 %v798
    %vm806 = vweird.f32 %v800
    %vm807 = vmor %vm805, %vm806
    %v808 = vsel %vm807, %v800, %v804
    %v809 = vand.u32 2147483647, %v798
    %vm810 = vcmp.eq.f32.partialorder %v809, 8.507059e+37
    %v811 = vand.u32 %v798, 2147483648
    %v812 = vor.u32 1.1754944e-38, %v811
    %v813 = vsel %vm810, %v812, %v808
    %v814 = vmul.f32 1.0, %v813
    %v815 = vrcp.pop %v799
    %v816 = vmul.f32 %v799, %v815
    %v817 = vsub.f32 1.0, %v816
    %v818 = vmul.f32 %v815, %v817
    %v819 = vadd.f32 %v815, %v818
    %vm820 = vweird.f32 %v799
    %vm821 = vweird.f32 %v815
    %vm822 = vmor %vm820, %vm821
    %v823 = vsel %vm822, %v815, %v819
    %v824 = vand.u32 2147483647, %v799
    %vm825 = vcmp.eq.f32.partialorder %v824, 8.507059e+37
    %v826 = vand.u32 %v799, 2147483648
    %v827 = vor.u32 1.1754944e-38, %v826
    %v828 = vsel %vm825, %v827, %v823
    %v829 = vmul.f32 1.0, %v828
    %v830 = vtanh.pop %v789
    %832 = vrot.lane.b32.xlu0 %v750, 64
    %v833 = vpop.permute.xlu0 %832
    %v835 = vmul.f32 %v814, %v833
    %v836 = vmul.f32 %v814, %v830
    %838 = vrot.lane.b32.xlu0 %v836, 64
    %v839 = vpop.permute.xlu0 %838
    %v841 = vadd.f32 %v835, %v839
    %v842 = vtanh.pop %v841
    %v843 = vmul.f32 %v829, %v842
    %845 = vrot.lane.b32.xlu0 %v843, 64
    %v846 = vpop.permute.xlu0 %845
    %v848 = vsel %vm760, %v846, %v745
    %850 = vrot.lane.b32.xlu0 %v841, 64
    %v851 = vpop.permute.xlu0 %850
    %v853 = vsel %vm760, %v851, %v750
    %v854 = vpack.c.bf16 %v848, %v848
    %855 = vst.msk [vmem:[%s754] sm:$0xf] %vm436, %v854
    %856 = vst.msk [vmem:[%s752] sm:$0xf] %vm439, %v854
    %v857 = vld [vmem:[%s548] sm:$0xff]
    %v858 = vld [vmem:[%s546] sm:$0xff]
    %v859 = vsel %vm297, %v857, %v858
    %v860 = vsel %vm299, 5, 2
    %vm861 = vcmp.lt.s32.totalorder %v860, %v303
    %v862 = vunpack.c.l.bf16 %v859
    %v863 = vunpack.c.h.bf16 %v859
    %v865 = vsel %vm347, %v854, 0
    %867 = vmatpush.bf16.msra.mxu0 0
    %868 = vmatpush.bf16.msra.mxu0 0
    %869 = vmatpush.bf16.msra.mxu0 0
    %870 = vmatpush.bf16.msra.mxu0 0
    %871 = vmatpush.bf16.msra.mxu0 %v337
    %872 = vmatpush.bf16.msra.mxu0 %v335
    %873 = vmatpush.bf16.msra.mxu0 %v333
    %874 = vmatpush.bf16.msra.mxu0 %v331
    %875 = vmatmul.bf16.gmra.mxu0 %v865
    %v876 = vpop.f32.mrf.mxu0
    %v877 = vadd.f32 %v862, %v876
    %v878 = vpop.f32.mrf.mxu0
    %879 = vdwg.mxu0
    %880 = vmatpush.bf16.msra.mxu0 0
    %881 = vmatpush.bf16.msra.mxu0 0
    %882 = vmatpush.bf16.msra.mxu0 0
    %883 = vmatpush.bf16.msra.mxu0 0
    %884 = vmatpush.bf16.msra.mxu0 %v338
    %885 = vmatpush.bf16.msra.mxu0 %v336
    %886 = vmatpush.bf16.msra.mxu0 %v334
    %887 = vmatpush.bf16.msra.mxu0 %v332
    %888 = vmatmul.bf16.gmra.mxu0 %v865
    %v889 = vpop.f32.mrf.mxu0
    %v890 = vadd.f32 %v863, %v889
    %v891 = vpop.f32.mrf.mxu0
    %892 = vdwg.mxu0
    %v893 = vxor.u32 %v877, 2147483648
    %v894 = vxor.u32 %v890, 2147483648
    %v895 = vmul.f32 %v893, 1.442695
    %v896 = vpow.pop %v895
    %v897 = vmul.f32 %v894, 1.442695
    %v898 = vpow.pop %v897
    %v899 = vadd.f32 %v896, 1.0
    %v900 = vadd.f32 %v898, 1.0
    %v901 = vrcp.pop %v899
    %v902 = vmul.f32 %v899, %v901
    %v903 = vsub.f32 1.0, %v902
    %v904 = vmul.f32 %v901, %v903
    %v905 = vadd.f32 %v901, %v904
    %vm906 = vweird.f32 %v899
    %vm907 = vweird.f32 %v901
    %vm908 = vmor %vm906, %vm907
    %v909 = vsel %vm908, %v901, %v905
    %v910 = vand.u32 2147483647, %v899
    %vm911 = vcmp.eq.f32.partialorder %v910, 8.507059e+37
    %v912 = vand.u32 %v899, 2147483648
    %v913 = vor.u32 1.1754944e-38, %v912
    %v914 = vsel %vm911, %v913, %v909
    %v915 = vmul.f32 1.0, %v914
    %v916 = vrcp.pop %v900
    %v917 = vmul.f32 %v900, %v916
    %v918 = vsub.f32 1.0, %v917
    %v919 = vmul.f32 %v916, %v918
    %v920 = vadd.f32 %v916, %v919
    %vm921 = vweird.f32 %v900
    %vm922 = vweird.f32 %v916
    %vm923 = vmor %vm921, %vm922
    %v924 = vsel %vm923, %v916, %v920
    %v925 = vand.u32 2147483647, %v900
    %vm926 = vcmp.eq.f32.partialorder %v925, 8.507059e+37
    %v927 = vand.u32 %v900, 2147483648
    %v928 = vor.u32 1.1754944e-38, %v927
    %v929 = vsel %vm926, %v928, %v924
    %v930 = vmul.f32 1.0, %v929
    %v931 = vtanh.pop %v890
    %933 = vrot.lane.b32.xlu0 %v853, 64
    %v934 = vpop.permute.xlu0 %933
    %v936 = vmul.f32 %v915, %v934
    %v937 = vmul.f32 %v915, %v931
    %939 = vrot.lane.b32.xlu0 %v937, 64
    %v940 = vpop.permute.xlu0 %939
    %v942 = vadd.f32 %v936, %v940
    %v943 = vtanh.pop %v942
    %v944 = vmul.f32 %v930, %v943
    %946 = vrot.lane.b32.xlu0 %v944, 64
    %v947 = vpop.permute.xlu0 %946
    %v949 = vsel %vm861, %v947, %v848
    %951 = vrot.lane.b32.xlu0 %v942, 64
    %v952 = vpop.permute.xlu0 %951
    %v954 = vsel %vm861, %v952, %v853
    %v955 = vpack.c.bf16 %v949, %v949
    %956 = vst.msk [vmem:[%s649] sm:$0xf] %vm436, %v955
    %957 = vst.msk [vmem:[%s647] sm:$0xf] %vm439, %v955
    %v958 = vld [vmem:[%s443] sm:$0xff]
    %v959 = vld [vmem:[%s441] sm:$0xff]
    %v960 = vsel %vm297, %v958, %v959
    %v961 = vsel %vm299, 6, 1
    %vm962 = vcmp.lt.s32.totalorder %v961, %v303
    %v963 = vunpack.c.l.bf16 %v960
    %v964 = vunpack.c.h.bf16 %v960
    %v966 = vsel %vm347, %v955, 0
    %968 = vmatpush.bf16.msra.mxu0 0
    %969 = vmatpush.bf16.msra.mxu0 0
    %970 = vmatpush.bf16.msra.mxu0 0
    %971 = vmatpush.bf16.msra.mxu0 0
    %972 = vmatpush.bf16.msra.mxu0 %v337
    %973 = vmatpush.bf16.msra.mxu0 %v335
    %974 = vmatpush.bf16.msra.mxu0 %v333
    %975 = vmatpush.bf16.msra.mxu0 %v331
    %976 = vmatmul.bf16.gmra.mxu0 %v966
    %v977 = vpop.f32.mrf.mxu0
    %v978 = vadd.f32 %v963, %v977
    %v979 = vpop.f32.mrf.mxu0
    %980 = vdwg.mxu0
    %981 = vmatpush.bf16.msra.mxu0 0
    %982 = vmatpush.bf16.msra.mxu0 0
    %983 = vmatpush.bf16.msra.mxu0 0
    %984 = vmatpush.bf16.msra.mxu0 0
    %985 = vmatpush.bf16.msra.mxu0 %v338
    %986 = vmatpush.bf16.msra.mxu0 %v336
    %987 = vmatpush.bf16.msra.mxu0 %v334
    %988 = vmatpush.bf16.msra.mxu0 %v332
    %989 = vmatmul.bf16.gmra.mxu0 %v966
    %v990 = vpop.f32.mrf.mxu0
    %v991 = vadd.f32 %v964, %v990
    %v992 = vpop.f32.mrf.mxu0
    %993 = vdwg.mxu0
    %v994 = vxor.u32 %v978, 2147483648
    %v995 = vxor.u32 %v991, 2147483648
    %v996 = vmul.f32 %v994, 1.442695
    %v997 = vpow.pop %v996
    %v998 = vmul.f32 %v995, 1.442695
    %v999 = vpow.pop %v998
    %v1000 = vadd.f32 %v997, 1.0
    %v1001 = vadd.f32 %v999, 1.0
    %v1002 = vrcp.pop %v1000
    %v1003 = vmul.f32 %v1000, %v1002
    %v1004 = vsub.f32 1.0, %v1003
    %v1005 = vmul.f32 %v1002, %v1004
    %v1006 = vadd.f32 %v1002, %v1005
    %vm1007 = vweird.f32 %v1000
    %vm1008 = vweird.f32 %v1002
    %vm1009 = vmor %vm1007, %vm1008
    %v1010 = vsel %vm1009, %v1002, %v1006
    %v1011 = vand.u32 2147483647, %v1000
    %vm1012 = vcmp.eq.f32.partialorder %v1011, 8.507059e+37
    %v1013 = vand.u32 %v1000, 2147483648
    %v1014 = vor.u32 1.1754944e-38, %v1013
    %v1015 = vsel %vm1012, %v1014, %v1010
    %v1016 = vmul.f32 1.0, %v1015
    %v1017 = vrcp.pop %v1001
    %v1018 = vmul.f32 %v1001, %v1017
    %v1019 = vsub.f32 1.0, %v1018
    %v1020 = vmul.f32 %v1017, %v1019
    %v1021 = vadd.f32 %v1017, %v1020
    %vm1022 = vweird.f32 %v1001
    %vm1023 = vweird.f32 %v1017
    %vm1024 = vmor %vm1022, %vm1023
    %v1025 = vsel %vm1024, %v1017, %v1021
    %v1026 = vand.u32 2147483647, %v1001
    %vm1027 = vcmp.eq.f32.partialorder %v1026, 8.507059e+37
    %v1028 = vand.u32 %v1001, 2147483648
    %v1029 = vor.u32 1.1754944e-38, %v1028
    %v1030 = vsel %vm1027, %v1029, %v1025
    %v1031 = vmul.f32 1.0, %v1030
    %v1032 = vtanh.pop %v991
    %1034 = vrot.lane.b32.xlu0 %v954, 64
    %v1035 = vpop.permute.xlu0 %1034
    %v1037 = vmul.f32 %v1016, %v1035
    %v1038 = vmul.f32 %v1016, %v1032
    %1040 = vrot.lane.b32.xlu0 %v1038, 64
    %v1041 = vpop.permute.xlu0 %1040
    %v1043 = vadd.f32 %v1037, %v1041
    %v1044 = vtanh.pop %v1043
    %v1045 = vmul.f32 %v1031, %v1044
    %1047 = vrot.lane.b32.xlu0 %v1045, 64
    %v1048 = vpop.permute.xlu0 %1047
    %v1050 = vsel %vm962, %v1048, %v949
    %1052 = vrot.lane.b32.xlu0 %v1043, 64
    %v1053 = vpop.permute.xlu0 %1052
    %v1055 = vsel %vm962, %v1053, %v954
    %v1056 = vpack.c.bf16 %v1050, %v1050
    %1057 = vst.msk [vmem:[%s544] sm:$0xf] %vm436, %v1056
    %1058 = vst.msk [vmem:[%s542] sm:$0xf] %vm439, %v1056
    %v1059 = vld [vmem:[%s295] sm:$0xff]
    %v1060 = vld [vmem:[#allocation2] sm:$0xff]
    %v1061 = vsel %vm297, %v1059, %v1060
    %v1062 = vsel %vm299, 7, 0
    %vm1063 = vcmp.lt.s32.totalorder %v1062, %v303
    %v1064 = vunpack.c.l.bf16 %v1061
    %v1065 = vunpack.c.h.bf16 %v1061
    %v1067 = vsel %vm347, %v1056, 0
    %1069 = vmatpush.bf16.msra.mxu0 0
    %1070 = vmatpush.bf16.msra.mxu0 0
    %1071 = vmatpush.bf16.msra.mxu0 0
    %1072 = vmatpush.bf16.msra.mxu0 0
    %1073 = vmatpush.bf16.msra.mxu0 %v337
    %1074 = vmatpush.bf16.msra.mxu0 %v335
    %1075 = vmatpush.bf16.msra.mxu0 %v333
    %1076 = vmatpush.bf16.msra.mxu0 %v331
    %1077 = vmatmul.bf16.gmra.mxu0 %v1067
    %v1078 = vpop.f32.mrf.mxu0
    %v1079 = vadd.f32 %v1064, %v1078
    %v1080 = vpop.f32.mrf.mxu0
    %1081 = vdwg.mxu0
    %1082 = vmatpush.bf16.msra.mxu0 0
    %1083 = vmatpush.bf16.msra.mxu0 0
    %1084 = vmatpush.bf16.msra.mxu0 0
    %1085 = vmatpush.bf16.msra.mxu0 0
    %1086 = vmatpush.bf16.msra.mxu0 %v338
    %1087 = vmatpush.bf16.msra.mxu0 %v336
    %1088 = vmatpush.bf16.msra.mxu0 %v334
    %1089 = vmatpush.bf16.msra.mxu0 %v332
    %1090 = vmatmul.bf16.gmra.mxu0 %v1067
    %v1091 = vpop.f32.mrf.mxu0
    %v1092 = vadd.f32 %v1065, %v1091
    %v1093 = vpop.f32.mrf.mxu0
    %1094 = vdwg.mxu0
    %v1095 = vxor.u32 %v1079, 2147483648
    %v1096 = vxor.u32 %v1092, 2147483648
    %v1097 = vmul.f32 %v1095, 1.442695
    %v1098 = vpow.pop %v1097
    %v1099 = vmul.f32 %v1096, 1.442695
    %v1100 = vpow.pop %v1099
    %v1101 = vadd.f32 %v1098, 1.0
    %v1102 = vadd.f32 %v1100, 1.0
    %v1103 = vrcp.pop %v1101
    %v1104 = vmul.f32 %v1101, %v1103
    %v1105 = vsub.f32 1.0, %v1104
    %v1106 = vmul.f32 %v1103, %v1105
    %v1107 = vadd.f32 %v1103, %v1106
    %vm1108 = vweird.f32 %v1101
    %vm1109 = vweird.f32 %v1103
    %vm1110 = vmor %vm1108, %vm1109
    %v1111 = vsel %vm1110, %v1103, %v1107
    %v1112 = vand.u32 2147483647, %v1101
    %vm1113 = vcmp.eq.f32.partialorder %v1112, 8.507059e+37
    %v1114 = vand.u32 %v1101, 2147483648
    %v1115 = vor.u32 1.1754944e-38, %v1114
    %v1116 = vsel %vm1113, %v1115, %v1111
    %v1117 = vmul.f32 1.0, %v1116
    %v1118 = vrcp.pop %v1102
    %v1119 = vmul.f32 %v1102, %v1118
    %v1120 = vsub.f32 1.0, %v1119
    %v1121 = vmul.f32 %v1118, %v1120
    %v1122 = vadd.f32 %v1118, %v1121
    %vm1123 = vweird.f32 %v1102
    %vm1124 = vweird.f32 %v1118
    %vm1125 = vmor %vm1123, %vm1124
    %v1126 = vsel %vm1125, %v1118, %v1122
    %v1127 = vand.u32 2147483647, %v1102
    %vm1128 = vcmp.eq.f32.partialorder %v1127, 8.507059e+37
    %v1129 = vand.u32 %v1102, 2147483648
    %v1130 = vor.u32 1.1754944e-38, %v1129
    %v1131 = vsel %vm1128, %v1130, %v1126
    %v1132 = vmul.f32 1.0, %v1131
    %v1133 = vtanh.pop %v1092
    %1135 = vrot.lane.b32.xlu0 %v1055, 64
    %v1136 = vpop.permute.xlu0 %1135
    %v1138 = vmul.f32 %v1117, %v1136
    %v1139 = vmul.f32 %v1117, %v1133
    %1141 = vrot.lane.b32.xlu0 %v1139, 64
    %v1142 = vpop.permute.xlu0 %1141
    %v1144 = vadd.f32 %v1138, %v1142
    %v1145 = vtanh.pop %v1144
    %v1146 = vmul.f32 %v1132, %v1145
    %1148 = vrot.lane.b32.xlu0 %v1146, 64
    %v1149 = vpop.permute.xlu0 %1148
    %v1151 = vsel %vm1063, %v1149, %v1050
    %v1152 = vpack.c.bf16 %v1151, %v1151
    %1153 = vst.msk [vmem:[%s438] sm:$0xf] %vm436, %v1152
    %1154 = vst.msk [vmem:[#allocation3] sm:$0xf] %vm439, %v1152
    %v1155 = vld [vmem:[#allocation3] sm:$0xf]
    %v1156 = vld [vmem:[#allocation3 + $0x4] sm:$0xf]
    %v1157 = vld [vmem:[#allocation3 + $0x8] sm:$0xf]
    %v1158 = vld [vmem:[#allocation3 + $0xc] sm:$0xf]
    %v1159 = vld [vmem:[#allocation3 + $0x10] sm:$0xf]
    %v1160 = vld [vmem:[#allocation3 + $0x14] sm:$0xf]
    %v1161 = vld [vmem:[#allocation3 + $0x18] sm:$0xf]
    %v1162 = vld [vmem:[#allocation3 + $0x1c] sm:$0xf]
    %v1163 = vld [vmem:[#allocation9] sm:$0xff]
    %v1164 = vld [vmem:[#allocation9 + $0x8] sm:$0xff]
    %v1165 = vld [vmem:[#allocation9 + $0x10] sm:$0xff]
    %v1166 = vld [vmem:[#allocation9 + $0x18] sm:$0xff]
    %v1167 = vld [vmem:[#allocation9 + $0x20] sm:$0xff]
    %v1168 = vld [vmem:[#allocation9 + $0x28] sm:$0xff]
    %v1169 = vld [vmem:[#allocation9 + $0x30] sm:$0xff]
    %v1170 = vld [vmem:[#allocation9 + $0x38] sm:$0xff]
    %v1171 = vld [vmem:[#allocation10] sm:$0xff]
    %v1172 = vld [vmem:[#allocation10 + $0x8] sm:$0xff]
    %v1173 = vld [vmem:[#allocation10 + $0x10] sm:$0xff]
    %v1174 = vld [vmem:[#allocation10 + $0x18] sm:$0xff]
    %v1175 = vld [vmem:[#allocation10 + $0x20] sm:$0xff]
    %v1176 = vld [vmem:[#allocation10 + $0x28] sm:$0xff]
    %v1177 = vld [vmem:[#allocation10 + $0x30] sm:$0xff]
    %v1178 = vld [vmem:[#allocation10 + $0x38] sm:$0xff]
    %v1179 = vld [vmem:[#allocation12] sm:$0x3]
    %v1181 = vperm.slane %v1179, 0
    %v1182 = vperm.slane %v1179, 1
    %v1193 = vunpack.c.l.b16 %v1155
    %v1194 = vunpack.c.l.b16 %v1156
    %v1195 = vunpack.c.l.b16 %v1157
    %v1196 = vunpack.c.l.b16 %v1158
    %v1197 = vunpack.c.l.b16 %v1159
    %v1198 = vunpack.c.l.b16 %v1160
    %v1199 = vunpack.c.l.b16 %v1161
    %v1200 = vunpack.c.l.b16 %v1162
    %v1201 = vpack.c.b16 %v1194, %v1193
    %v1202 = vpack.c.b16 %v1196, %v1195
    %v1203 = vpack.c.b16 %v1198, %v1197
    %v1204 = vpack.c.b16 %v1200, %v1199
    %v1213 = vunpack.c.l.b16 %v1163
    %v1214 = vunpack.c.h.b16 %v1163
    %v1215 = vunpack.c.l.b16 %v1164
    %v1216 = vunpack.c.h.b16 %v1164
    %v1217 = vunpack.c.l.b16 %v1165
    %v1218 = vunpack.c.h.b16 %v1165
    %v1219 = vunpack.c.l.b16 %v1166
    %v1220 = vunpack.c.h.b16 %v1166
    %v1221 = vunpack.c.l.b16 %v1167
    %v1222 = vunpack.c.h.b16 %v1167
    %v1223 = vunpack.c.l.b16 %v1168
    %v1224 = vunpack.c.h.b16 %v1168
    %v1225 = vunpack.c.l.b16 %v1169
    %v1226 = vunpack.c.h.b16 %v1169
    %v1227 = vunpack.c.l.b16 %v1170
    %v1228 = vunpack.c.h.b16 %v1170
    %v1229 = vpack.c.b16 %v1215, %v1213
    %v1230 = vpack.c.b16 %v1216, %v1214
    %v1231 = vpack.c.b16 %v1219, %v1217
    %v1232 = vpack.c.b16 %v1220, %v1218
    %v1233 = vpack.c.b16 %v1223, %v1221
    %v1234 = vpack.c.b16 %v1224, %v1222
    %v1235 = vpack.c.b16 %v1227, %v1225
    %v1236 = vpack.c.b16 %v1228, %v1226
    %v1246 = vsel %vm347, %v1201, 0
    %v1249 = vsel %vm347, %v1202, 0
    %v1252 = vsel %vm347, %v1203, 0
    %v1255 = vsel %vm347, %v1204, 0
    %1257 = vmatpush.bf16.msra.mxu0 0
    %1258 = vmatpush.bf16.msra.mxu0 0
    %1259 = vmatpush.bf16.msra.mxu0 0
    %1260 = vmatpush.bf16.msra.mxu0 0
    %1261 = vmatpush.bf16.msra.mxu0 %v1235
    %1262 = vmatpush.bf16.msra.mxu0 %v1233
    %1263 = vmatpush.bf16.msra.mxu0 %v1231
    %1264 = vmatpush.bf16.msra.mxu0 %v1229
    %1265 = vmatmul.bf16.gmra.mxu0 %v1246
    %v1266 = vpop.f32.mrf.mxu0
    %v1267 = vadd.f32 %v1181, %v1266
    %v1268 = vpop.f32.mrf.mxu0
    %v1269 = vadd.f32 %v1181, %v1268
    %1270 = vmatmul.bf16.gmra.mxu0 %v1249
    %v1271 = vpop.f32.mrf.mxu0
    %v1272 = vadd.f32 %v1181, %v1271
    %v1273 = vpop.f32.mrf.mxu0
    %v1274 = vadd.f32 %v1181, %v1273
    %1275 = vmatmul.bf16.gmra.mxu0 %v1252
    %v1276 = vpop.f32.mrf.mxu0
    %v1277 = vadd.f32 %v1181, %v1276
    %v1278 = vpop.f32.mrf.mxu0
    %v1279 = vadd.f32 %v1181, %v1278
    %1280 = vmatmul.bf16.gmra.mxu0 %v1255
    %v1281 = vpop.f32.mrf.mxu0
    %v1282 = vadd.f32 %v1181, %v1281
    %v1283 = vpop.f32.mrf.mxu0
    %v1284 = vadd.f32 %v1181, %v1283
    %1285 = vdwg.mxu0
    %1286 = vmatpush.bf16.msra.mxu0 0
    %1287 = vmatpush.bf16.msra.mxu0 0
    %1288 = vmatpush.bf16.msra.mxu0 0
    %1289 = vmatpush.bf16.msra.mxu0 0
    %1290 = vmatpush.bf16.msra.mxu0 %v1236
    %1291 = vmatpush.bf16.msra.mxu0 %v1234
    %1292 = vmatpush.bf16.msra.mxu0 %v1232
    %1293 = vmatpush.bf16.msra.mxu0 %v1230
    %1294 = vmatmul.bf16.gmra.mxu0 %v1246
    %v1295 = vpop.f32.mrf.mxu0
    %v1296 = vadd.f32 %v1182, %v1295
    %v1297 = vpop.f32.mrf.mxu0
    %v1298 = vadd.f32 %v1182, %v1297
    %1299 = vmatmul.bf16.gmra.mxu0 %v1249
    %v1300 = vpop.f32.mrf.mxu0
    %v1301 = vadd.f32 %v1182, %v1300
    %v1302 = vpop.f32.mrf.mxu0
    %v1303 = vadd.f32 %v1182, %v1302
    %1304 = vmatmul.bf16.gmra.mxu0 %v1252
    %v1305 = vpop.f32.mrf.mxu0
    %v1306 = vadd.f32 %v1182, %v1305
    %v1307 = vpop.f32.mrf.mxu0
    %v1308 = vadd.f32 %v1182, %v1307
    %1309 = vmatmul.bf16.gmra.mxu0 %v1255
    %v1310 = vpop.f32.mrf.mxu0
    %v1311 = vadd.f32 %v1182, %v1310
    %v1312 = vpop.f32.mrf.mxu0
    %v1313 = vadd.f32 %v1182, %v1312
    %1314 = vdwg.mxu0
    %v1315 = vpack.c.bf16 %v1296, %v1267
    %v1316 = vpack.c.bf16 %v1298, %v1269
    %v1317 = vpack.c.bf16 %v1301, %v1272
    %v1318 = vpack.c.bf16 %v1303, %v1274
    %v1319 = vpack.c.bf16 %v1306, %v1277
    %v1320 = vpack.c.bf16 %v1308, %v1279
    %v1321 = vpack.c.bf16 %v1311, %v1282
    %v1322 = vpack.c.bf16 %v1313, %v1284
    %1323 = vst [vmem:[#allocation2] sm:$0xff] %v1315
    %1324 = vst [vmem:[#allocation2 + $0x8] sm:$0xff] %v1316
    %1325 = vst [vmem:[#allocation2 + $0x10] sm:$0xff] %v1317
    %1326 = vst [vmem:[#allocation2 + $0x18] sm:$0xff] %v1318
    %1327 = vst [vmem:[#allocation2 + $0x20] sm:$0xff] %v1319
    %1328 = vst [vmem:[#allocation2 + $0x28] sm:$0xff] %v1320
    %1329 = vst [vmem:[#allocation2 + $0x30] sm:$0xff] %v1321
    %1330 = vst [vmem:[#allocation2 + $0x38] sm:$0xff] %v1322
    %v1331 = vld [vmem:[#allocation2] sm:$0xff]
    %v1332 = vld [vmem:[%s295] sm:$0xff]
    %v1333 = vsel %vm297, %v1331, %v1332
    %v1334 = vunpack.c.l.bf16 %v1333
    %v1335 = vunpack.c.h.bf16 %v1333
    %v1344 = vunpack.c.l.b16 %v1171
    %v1345 = vunpack.c.h.b16 %v1171
    %v1346 = vunpack.c.l.b16 %v1172
    %v1347 = vunpack.c.h.b16 %v1172
    %v1348 = vunpack.c.l.b16 %v1173
    %v1349 = vunpack.c.h.b16 %v1173
    %v1350 = vunpack.c.l.b16 %v1174
    %v1351 = vunpack.c.h.b16 %v1174
    %v1352 = vunpack.c.l.b16 %v1175
    %v1353 = vunpack.c.h.b16 %v1175
    %v1354 = vunpack.c.l.b16 %v1176
    %v1355 = vunpack.c.h.b16 %v1176
    %v1356 = vunpack.c.l.b16 %v1177
    %v1357 = vunpack.c.h.b16 %v1177
    %v1358 = vunpack.c.l.b16 %v1178
    %v1359 = vunpack.c.h.b16 %v1178
    %v1360 = vpack.c.b16 %v1346, %v1344
    %v1361 = vpack.c.b16 %v1347, %v1345
    %v1362 = vpack.c.b16 %v1350, %v1348
    %v1363 = vpack.c.b16 %v1351, %v1349
    %v1364 = vpack.c.b16 %v1354, %v1352
    %v1365 = vpack.c.b16 %v1355, %v1353
    %v1366 = vpack.c.b16 %v1358, %v1356
    %v1367 = vpack.c.b16 %v1359, %v1357
    %1376 = vmatpush.bf16.msra.mxu0 0
    %1377 = vmatpush.bf16.msra.mxu0 0
    %1378 = vmatpush.bf16.msra.mxu0 0
    %1379 = vmatpush.bf16.msra.mxu0 0
    %1380 = vmatpush.bf16.msra.mxu0 %v1366
    %1381 = vmatpush.bf16.msra.mxu0 %v1364
    %1382 = vmatpush.bf16.msra.mxu0 %v1362
    %1383 = vmatpush.bf16.msra.mxu0 %v1360
    %1384 = vmatmul.bf16.gmra.mxu0 %v349
    %v1385 = vpop.f32.mrf.mxu0
    %v1386 = vadd.f32 %v1334, %v1385
    %v1387 = vpop.f32.mrf.mxu0
    %1388 = vdwg.mxu0
    %1389 = vmatpush.bf16.msra.mxu0 0
    %1390 = vmatpush.bf16.msra.mxu0 0
    %1391 = vmatpush.bf16.msra.mxu0 0
    %1392 = vmatpush.bf16.msra.mxu0 0
    %1393 = vmatpush.bf16.msra.mxu0 %v1367
    %1394 = vmatpush.bf16.msra.mxu0 %v1365
    %1395 = vmatpush.bf16.msra.mxu0 %v1363
    %1396 = vmatpush.bf16.msra.mxu0 %v1361
    %1397 = vmatmul.bf16.gmra.mxu0 %v349
    %v1398 = vpop.f32.mrf.mxu0
    %v1399 = vadd.f32 %v1335, %v1398
    %v1400 = vpop.f32.mrf.mxu0
    %1401 = vdwg.mxu0
    %v1402 = vxor.u32 %v1386, 2147483648
    %v1403 = vxor.u32 %v1399, 2147483648
    %v1404 = vmul.f32 %v1402, 1.442695
    %v1405 = vpow.pop %v1404
    %v1406 = vmul.f32 %v1403, 1.442695
    %v1407 = vpow.pop %v1406
    %v1408 = vadd.f32 %v1405, 1.0
    %v1409 = vadd.f32 %v1407, 1.0
    %v1410 = vrcp.pop %v1408
    %v1411 = vmul.f32 %v1408, %v1410
    %v1412 = vsub.f32 1.0, %v1411
    %v1413 = vmul.f32 %v1410, %v1412
    %v1414 = vadd.f32 %v1410, %v1413
    %vm1415 = vweird.f32 %v1408
    %vm1416 = vweird.f32 %v1410
    %vm1417 = vmor %vm1415, %vm1416
    %v1418 = vsel %vm1417, %v1410, %v1414
    %v1419 = vand.u32 2147483647, %v1408
    %vm1420 = vcmp.eq.f32.partialorder %v1419, 8.507059e+37
    %v1421 = vand.u32 %v1408, 2147483648
    %v1422 = vor.u32 1.1754944e-38, %v1421
    %v1423 = vsel %vm1420, %v1422, %v1418
    %v1424 = vmul.f32 1.0, %v1423
    %v1425 = vrcp.pop %v1409
    %v1426 = vmul.f32 %v1409, %v1425
    %v1427 = vsub.f32 1.0, %v1426
    %v1428 = vmul.f32 %v1425, %v1427
    %v1429 = vadd.f32 %v1425, %v1428
    %vm1430 = vweird.f32 %v1409
    %vm1431 = vweird.f32 %v1425
    %vm1432 = vmor %vm1430, %vm1431
    %v1433 = vsel %vm1432, %v1425, %v1429
    %v1434 = vand.u32 2147483647, %v1409
    %vm1435 = vcmp.eq.f32.partialorder %v1434, 8.507059e+37
    %v1436 = vand.u32 %v1409, 2147483648
    %v1437 = vor.u32 1.1754944e-38, %v1436
    %v1438 = vsel %vm1435, %v1437, %v1433
    %v1439 = vmul.f32 1.0, %v1438
    %v1440 = vtanh.pop %v1399
    %v1441 = vmul.f32 %v1424, 0.0
    %v1442 = vmul.f32 %v1424, %v1440
    %1444 = vrot.lane.b32.xlu0 %v1442, 64
    %v1445 = vpop.permute.xlu0 %1444
    %v1447 = vadd.f32 %v1441, %v1445
    %v1448 = vtanh.pop %v1447
    %v1449 = vmul.f32 %v1439, %v1448
    %1451 = vrot.lane.b32.xlu0 %v1449, 64
    %v1452 = vpop.permute.xlu0 %1451
    %v1454 = vsel %vm304, %v1452, 0.0
    %1456 = vrot.lane.b32.xlu0 %v1447, 64
    %v1457 = vpop.permute.xlu0 %1456
    %v1459 = vsel %vm304, %v1457, 0.0
    %v1460 = vpack.c.bf16 %v1454, %v1454
    %v1461 = vld [vmem:[%s441] sm:$0xff]
    %v1462 = vld [vmem:[%s443] sm:$0xff]
    %v1463 = vsel %vm297, %v1461, %v1462
    %v1464 = vunpack.c.l.bf16 %v1463
    %v1465 = vunpack.c.h.bf16 %v1463
    %v1467 = vsel %vm347, %v1460, 0
    %1469 = vmatpush.bf16.msra.mxu0 0
    %1470 = vmatpush.bf16.msra.mxu0 0
    %1471 = vmatpush.bf16.msra.mxu0 0
    %1472 = vmatpush.bf16.msra.mxu0 0
    %1473 = vmatpush.bf16.msra.mxu0 %v1366
    %1474 = vmatpush.bf16.msra.mxu0 %v1364
    %1475 = vmatpush.bf16.msra.mxu0 %v1362
    %1476 = vmatpush.bf16.msra.mxu0 %v1360
    %1477 = vmatmul.bf16.gmra.mxu0 %v1467
    %v1478 = vpop.f32.mrf.mxu0
    %v1479 = vadd.f32 %v1464, %v1478
    %v1480 = vpop.f32.mrf.mxu0
    %1481 = vdwg.mxu0
    %1482 = vmatpush.bf16.msra.mxu0 0
    %1483 = vmatpush.bf16.msra.mxu0 0
    %1484 = vmatpush.bf16.msra.mxu0 0
    %1485 = vmatpush.bf16.msra.mxu0 0
    %1486 = vmatpush.bf16.msra.mxu0 %v1367
    %1487 = vmatpush.bf16.msra.mxu0 %v1365
    %1488 = vmatpush.bf16.msra.mxu0 %v1363
    %1489 = vmatpush.bf16.msra.mxu0 %v1361
    %1490 = vmatmul.bf16.gmra.mxu0 %v1467
    %v1491 = vpop.f32.mrf.mxu0
    %v1492 = vadd.f32 %v1465, %v1491
    %v1493 = vpop.f32.mrf.mxu0
    %1494 = vdwg.mxu0
    %v1495 = vxor.u32 %v1479, 2147483648
    %v1496 = vxor.u32 %v1492, 2147483648
    %v1497 = vmul.f32 %v1495, 1.442695
    %v1498 = vpow.pop %v1497
    %v1499 = vmul.f32 %v1496, 1.442695
    %v1500 = vpow.pop %v1499
    %v1501 = vadd.f32 %v1498, 1.0
    %v1502 = vadd.f32 %v1500, 1.0
    %v1503 = vrcp.pop %v1501
    %v1504 = vmul.f32 %v1501, %v1503
    %v1505 = vsub.f32 1.0, %v1504
    %v1506 = vmul.f32 %v1503, %v1505
    %v1507 = vadd.f32 %v1503, %v1506
    %vm1508 = vweird.f32 %v1501
    %vm1509 = vweird.f32 %v1503
    %vm1510 = vmor %vm1508, %vm1509
    %v1511 = vsel %vm1510, %v1503, %v1507
    %v1512 = vand.u32 2147483647, %v1501
    %vm1513 = vcmp.eq.f32.partialorder %v1512, 8.507059e+37
    %v1514 = vand.u32 %v1501, 2147483648
    %v1515 = vor.u32 1.1754944e-38, %v1514
    %v1516 = vsel %vm1513, %v1515, %v1511
    %v1517 = vmul.f32 1.0, %v1516
    %v1518 = vrcp.pop %v1502
    %v1519 = vmul.f32 %v1502, %v1518
    %v1520 = vsub.f32 1.0, %v1519
    %v1521 = vmul.f32 %v1518, %v1520
    %v1522 = vadd.f32 %v1518, %v1521
    %vm1523 = vweird.f32 %v1502
    %vm1524 = vweird.f32 %v1518
    %vm1525 = vmor %vm1523, %vm1524
    %v1526 = vsel %vm1525, %v1518, %v1522
    %v1527 = vand.u32 2147483647, %v1502
    %vm1528 = vcmp.eq.f32.partialorder %v1527, 8.507059e+37
    %v1529 = vand.u32 %v1502, 2147483648
    %v1530 = vor.u32 1.1754944e-38, %v1529
    %v1531 = vsel %vm1528, %v1530, %v1526
    %v1532 = vmul.f32 1.0, %v1531
    %v1533 = vtanh.pop %v1492
    %1535 = vrot.lane.b32.xlu0 %v1459, 64
    %v1536 = vpop.permute.xlu0 %1535
    %v1538 = vmul.f32 %v1517, %v1536
    %v1539 = vmul.f32 %v1517, %v1533
    %1541 = vrot.lane.b32.xlu0 %v1539, 64
    %v1542 = vpop.permute.xlu0 %1541
    %v1544 = vadd.f32 %v1538, %v1542
    %v1545 = vtanh.pop %v1544
    %v1546 = vmul.f32 %v1532, %v1545
    %1548 = vrot.lane.b32.xlu0 %v1546, 64
    %v1549 = vpop.permute.xlu0 %1548
    %v1551 = vsel %vm447, %v1549, %v1454
    %1553 = vrot.lane.b32.xlu0 %v1544, 64
    %v1554 = vpop.permute.xlu0 %1553
    %v1556 = vsel %vm447, %v1554, %v1459
    %v1557 = vpack.c.bf16 %v1551, %v1551
    %v1558 = vld [vmem:[%s546] sm:$0xff]
    %v1559 = vld [vmem:[%s548] sm:$0xff]
    %v1560 = vsel %vm297, %v1558, %v1559
    %v1561 = vunpack.c.l.bf16 %v1560
    %v1562 = vunpack.c.h.bf16 %v1560
    %v1564 = vsel %vm347, %v1557, 0
    %1566 = vmatpush.bf16.msra.mxu0 0
    %1567 = vmatpush.bf16.msra.mxu0 0
    %1568 = vmatpush.bf16.msra.mxu0 0
    %1569 = vmatpush.bf16.msra.mxu0 0
    %1570 = vmatpush.bf16.msra.mxu0 %v1366
    %1571 = vmatpush.bf16.msra.mxu0 %v1364
    %1572 = vmatpush.bf16.msra.mxu0 %v1362
    %1573 = vmatpush.bf16.msra.mxu0 %v1360
    %1574 = vmatmul.bf16.gmra.mxu0 %v1564
    %v1575 = vpop.f32.mrf.mxu0
    %v1576 = vadd.f32 %v1561, %v1575
    %v1577 = vpop.f32.mrf.mxu0
    %1578 = vdwg.mxu0
    %1579 = vmatpush.bf16.msra.mxu0 0
    %1580 = vmatpush.bf16.msra.mxu0 0
    %1581 = vmatpush.bf16.msra.mxu0 0
    %1582 = vmatpush.bf16.msra.mxu0 0
    %1583 = vmatpush.bf16.msra.mxu0 %v1367
    %1584 = vmatpush.bf16.msra.mxu0 %v1365
    %1585 = vmatpush.bf16.msra.mxu0 %v1363
    %1586 = vmatpush.bf16.msra.mxu0 %v1361
    %1587 = vmatmul.bf16.gmra.mxu0 %v1564
    %v1588 = vpop.f32.mrf.mxu0
    %v1589 = vadd.f32 %v1562, %v1588
    %v1590 = vpop.f32.mrf.mxu0
    %1591 = vdwg.mxu0
    %v1592 = vxor.u32 %v1576, 2147483648
    %v1593 = vxor.u32 %v1589, 2147483648
    %v1594 = vmul.f32 %v1592, 1.442695
    %v1595 = vpow.pop %v1594
    %v1596 = vmul.f32 %v1593, 1.442695
    %v1597 = vpow.pop %v1596
    %v1598 = vadd.f32 %v1595, 1.0
    %v1599 = vadd.f32 %v1597, 1.0
    %v1600 = vrcp.pop %v1598
    %v1601 = vmul.f32 %v1598, %v1600
    %v1602 = vsub.f32 1.0, %v1601
    %v1603 = vmul.f32 %v1600, %v1602
    %v1604 = vadd.f32 %v1600, %v1603
    %vm1605 = vweird.f32 %v1598
    %vm1606 = vweird.f32 %v1600
    %vm1607 = vmor %vm1605, %vm1606
    %v1608 = vsel %vm1607, %v1600, %v1604
    %v1609 = vand.u32 2147483647, %v1598
    %vm1610 = vcmp.eq.f32.partialorder %v1609, 8.507059e+37
    %v1611 = vand.u32 %v1598, 2147483648
    %v1612 = vor.u32 1.1754944e-38, %v1611
    %v1613 = vsel %vm1610, %v1612, %v1608
    %v1614 = vmul.f32 1.0, %v1613
    %v1615 = vrcp.pop %v1599
    %v1616 = vmul.f32 %v1599, %v1615
    %v1617 = vsub.f32 1.0, %v1616
    %v1618 = vmul.f32 %v1615, %v1617
    %v1619 = vadd.f32 %v1615, %v1618
    %vm1620 = vweird.f32 %v1599
    %vm1621 = vweird.f32 %v1615
    %vm1622 = vmor %vm1620, %vm1621
    %v1623 = vsel %vm1622, %v1615, %v1619
    %v1624 = vand.u32 2147483647, %v1599
    %vm1625 = vcmp.eq.f32.partialorder %v1624, 8.507059e+37
    %v1626 = vand.u32 %v1599, 2147483648
    %v1627 = vor.u32 1.1754944e-38, %v1626
    %v1628 = vsel %vm1625, %v1627, %v1623
    %v1629 = vmul.f32 1.0, %v1628
    %v1630 = vtanh.pop %v1589
    %1632 = vrot.lane.b32.xlu0 %v1556, 64
    %v1633 = vpop.permute.xlu0 %1632
    %v1635 = vmul.f32 %v1614, %v1633
    %v1636 = vmul.f32 %v1614, %v1630
    %1638 = vrot.lane.b32.xlu0 %v1636, 64
    %v1639 = vpop.permute.xlu0 %1638
    %v1641 = vadd.f32 %v1635, %v1639
    %v1642 = vtanh.pop %v1641
    %v1643 = vmul.f32 %v1629, %v1642
    %1645 = vrot.lane.b32.xlu0 %v1643, 64
    %v1646 = vpop.permute.xlu0 %1645
    %v1648 = vsel %vm552, %v1646, %v1551
    %1650 = vrot.lane.b32.xlu0 %v1641, 64
    %v1651 = vpop.permute.xlu0 %1650
    %v1653 = vsel %vm552, %v1651, %v1556
    %v1654 = vpack.c.bf16 %v1648, %v1648
    %v1655 = vld [vmem:[%s651] sm:$0xff]
    %v1656 = vld [vmem:[%s653] sm:$0xff]
    %v1657 = vsel %vm297, %v1655, %v1656
    %v1658 = vunpack.c.l.bf16 %v1657
    %v1659 = vunpack.c.h.bf16 %v1657
    %v1661 = vsel %vm347, %v1654, 0
    %1663 = vmatpush.bf16.msra.mxu0 0
    %1664 = vmatpush.bf16.msra.mxu0 0
    %1665 = vmatpush.bf16.msra.mxu0 0
    %1666 = vmatpush.bf16.msra.mxu0 0
    %1667 = vmatpush.bf16.msra.mxu0 %v1366
    %1668 = vmatpush.bf16.msra.mxu0 %v1364
    %1669 = vmatpush.bf16.msra.mxu0 %v1362
    %1670 = vmatpush.bf16.msra.mxu0 %v1360
    %1671 = vmatmul.bf16.gmra.mxu0 %v1661
    %v1672 = vpop.f32.mrf.mxu0
    %v1673 = vadd.f32 %v1658, %v1672
    %v1674 = vpop.f32.mrf.mxu0
    %1675 = vdwg.mxu0
    %1676 = vmatpush.bf16.msra.mxu0 0
    %1677 = vmatpush.bf16.msra.mxu0 0
    %1678 = vmatpush.bf16.msra.mxu0 0
    %1679 = vmatpush.bf16.msra.mxu0 0
    %1680 = vmatpush.bf16.msra.mxu0 %v1367
    %1681 = vmatpush.bf16.msra.mxu0 %v1365
    %1682 = vmatpush.bf16.msra.mxu0 %v1363
    %1683 = vmatpush.bf16.msra.mxu0 %v1361
    %1684 = vmatmul.bf16.gmra.mxu0 %v1661
    %v1685 = vpop.f32.mrf.mxu0
    %v1686 = vadd.f32 %v1659, %v1685
    %v1687 = vpop.f32.mrf.mxu0
    %1688 = vdwg.mxu0
    %v1689 = vxor.u32 %v1673, 2147483648
    %v1690 = vxor.u32 %v1686, 2147483648
    %v1691 = vmul.f32 %v1689, 1.442695
    %v1692 = vpow.pop %v1691
    %v1693 = vmul.f32 %v1690, 1.442695
    %v1694 = vpow.pop %v1693
    %v1695 = vadd.f32 %v1692, 1.0
    %v1696 = vadd.f32 %v1694, 1.0
    %v1697 = vrcp.pop %v1695
    %v1698 = vmul.f32 %v1695, %v1697
    %v1699 = vsub.f32 1.0, %v1698
    %v1700 = vmul.f32 %v1697, %v1699
    %v1701 = vadd.f32 %v1697, %v1700
    %vm1702 = vweird.f32 %v1695
    %vm1703 = vweird.f32 %v1697
    %vm1704 = vmor %vm1702, %vm1703
    %v1705 = vsel %vm1704, %v1697, %v1701
    %v1706 = vand.u32 2147483647, %v1695
    %vm1707 = vcmp.eq.f32.partialorder %v1706, 8.507059e+37
    %v1708 = vand.u32 %v1695, 2147483648
    %v1709 = vor.u32 1.1754944e-38, %v1708
    %v1710 = vsel %vm1707, %v1709, %v1705
    %v1711 = vmul.f32 1.0, %v1710
    %v1712 = vrcp.pop %v1696
    %v1713 = vmul.f32 %v1696, %v1712
    %v1714 = vsub.f32 1.0, %v1713
    %v1715 = vmul.f32 %v1712, %v1714
    %v1716 = vadd.f32 %v1712, %v1715
    %vm1717 = vweird.f32 %v1696
    %vm1718 = vweird.f32 %v1712
    %vm1719 = vmor %vm1717, %vm1718
    %v1720 = vsel %vm1719, %v1712, %v1716
    %v1721 = vand.u32 2147483647, %v1696
    %vm1722 = vcmp.eq.f32.partialorder %v1721, 8.507059e+37
    %v1723 = vand.u32 %v1696, 2147483648
    %v1724 = vor.u32 1.1754944e-38, %v1723
    %v1725 = vsel %vm1722, %v1724, %v1720
    %v1726 = vmul.f32 1.0, %v1725
    %v1727 = vtanh.pop %v1686
    %1729 = vrot.lane.b32.xlu0 %v1653, 64
    %v1730 = vpop.permute.xlu0 %1729
    %v1732 = vmul.f32 %v1711, %v1730
    %v1733 = vmul.f32 %v1711, %v1727
    %1735 = vrot.lane.b32.xlu0 %v1733, 64
    %v1736 = vpop.permute.xlu0 %1735
    %v1738 = vadd.f32 %v1732, %v1736
    %v1739 = vtanh.pop %v1738
    %v1740 = vmul.f32 %v1726, %v1739
    %1742 = vrot.lane.b32.xlu0 %v1740, 64
    %v1743 = vpop.permute.xlu0 %1742
    %v1745 = vsel %vm657, %v1743, %v1648
    %1747 = vrot.lane.b32.xlu0 %v1738, 64
    %v1748 = vpop.permute.xlu0 %1747
    %v1750 = vsel %vm657, %v1748, %v1653
    %v1751 = vpack.c.bf16 %v1745, %v1745
    %v1752 = vsel %vm297, %v1656, %v1655
    %v1753 = vunpack.c.l.bf16 %v1752
    %v1754 = vunpack.c.h.bf16 %v1752
    %v1756 = vsel %vm347, %v1751, 0
    %1758 = vmatpush.bf16.msra.mxu0 0
    %1759 = vmatpush.bf16.msra.mxu0 0
    %1760 = vmatpush.bf16.msra.mxu0 0
    %1761 = vmatpush.bf16.msra.mxu0 0
    %1762 = vmatpush.bf16.msra.mxu0 %v1366
    %1763 = vmatpush.bf16.msra.mxu0 %v1364
    %1764 = vmatpush.bf16.msra.mxu0 %v1362
    %1765 = vmatpush.bf16.msra.mxu0 %v1360
    %1766 = vmatmul.bf16.gmra.mxu0 %v1756
    %v1767 = vpop.f32.mrf.mxu0
    %v1768 = vadd.f32 %v1753, %v1767
    %v1769 = vpop.f32.mrf.mxu0
    %1770 = vdwg.mxu0
    %1771 = vmatpush.bf16.msra.mxu0 0
    %1772 = vmatpush.bf16.msra.mxu0 0
    %1773 = vmatpush.bf16.msra.mxu0 0
    %1774 = vmatpush.bf16.msra.mxu0 0
    %1775 = vmatpush.bf16.msra.mxu0 %v1367
    %1776 = vmatpush.bf16.msra.mxu0 %v1365
    %1777 = vmatpush.bf16.msra.mxu0 %v1363
    %1778 = vmatpush.bf16.msra.mxu0 %v1361
    %1779 = vmatmul.bf16.gmra.mxu0 %v1756
    %v1780 = vpop.f32.mrf.mxu0
    %v1781 = vadd.f32 %v1754, %v1780
    %v1782 = vpop.f32.mrf.mxu0
    %1783 = vdwg.mxu0
    %v1784 = vxor.u32 %v1768, 2147483648
    %v1785 = vxor.u32 %v1781, 2147483648
    %v1786 = vmul.f32 %v1784, 1.442695
    %v1787 = vpow.pop %v1786
    %v1788 = vmul.f32 %v1785, 1.442695
    %v1789 = vpow.pop %v1788
    %v1790 = vadd.f32 %v1787, 1.0
    %v1791 = vadd.f32 %v1789, 1.0
    %v1792 = vrcp.pop %v1790
    %v1793 = vmul.f32 %v1790, %v1792
    %v1794 = vsub.f32 1.0, %v1793
    %v1795 = vmul.f32 %v1792, %v1794
    %v1796 = vadd.f32 %v1792, %v1795
    %vm1797 = vweird.f32 %v1790
    %vm1798 = vweird.f32 %v1792
    %vm1799 = vmor %vm1797, %vm1798
    %v1800 = vsel %vm1799, %v1792, %v1796
    %v1801 = vand.u32 2147483647, %v1790
    %vm1802 = vcmp.eq.f32.partialorder %v1801, 8.507059e+37
    %v1803 = vand.u32 %v1790, 2147483648
    %v1804 = vor.u32 1.1754944e-38, %v1803
    %v1805 = vsel %vm1802, %v1804, %v1800
    %v1806 = vmul.f32 1.0, %v1805
    %v1807 = vrcp.pop %v1791
    %v1808 = vmul.f32 %v1791, %v1807
    %v1809 = vsub.f32 1.0, %v1808
    %v1810 = vmul.f32 %v1807, %v1809
    %v1811 = vadd.f32 %v1807, %v1810
    %vm1812 = vweird.f32 %v1791
    %vm1813 = vweird.f32 %v1807
    %vm1814 = vmor %vm1812, %vm1813
    %v1815 = vsel %vm1814, %v1807, %v1811
    %v1816 = vand.u32 2147483647, %v1791
    %vm1817 = vcmp.eq.f32.partialorder %v1816, 8.507059e+37
    %v1818 = vand.u32 %v1791, 2147483648
    %v1819 = vor.u32 1.1754944e-38, %v1818
    %v1820 = vsel %vm1817, %v1819, %v1815
    %v1821 = vmul.f32 1.0, %v1820
    %v1822 = vtanh.pop %v1781
    %1824 = vrot.lane.b32.xlu0 %v1750, 64
    %v1825 = vpop.permute.xlu0 %1824
    %v1827 = vmul.f32 %v1806, %v1825
    %v1828 = vmul.f32 %v1806, %v1822
    %1830 = vrot.lane.b32.xlu0 %v1828, 64
    %v1831 = vpop.permute.xlu0 %1830
    %v1833 = vadd.f32 %v1827, %v1831
    %v1834 = vtanh.pop %v1833
    %v1835 = vmul.f32 %v1821, %v1834
    %1837 = vrot.lane.b32.xlu0 %v1835, 64
    %v1838 = vpop.permute.xlu0 %1837
    %v1840 = vsel %vm760, %v1838, %v1745
    %1842 = vrot.lane.b32.xlu0 %v1833, 64
    %v1843 = vpop.permute.xlu0 %1842
    %v1845 = vsel %vm760, %v1843, %v1750
    %v1846 = vpack.c.bf16 %v1840, %v1840
    %v1847 = vsel %vm297, %v1559, %v1558
    %v1848 = vunpack.c.l.bf16 %v1847
    %v1849 = vunpack.c.h.bf16 %v1847
    %v1851 = vsel %vm347, %v1846, 0
    %1853 = vmatpush.bf16.msra.mxu0 0
    %1854 = vmatpush.bf16.msra.mxu0 0
    %1855 = vmatpush.bf16.msra.mxu0 0
    %1856 = vmatpush.bf16.msra.mxu0 0
    %1857 = vmatpush.bf16.msra.mxu0 %v1366
    %1858 = vmatpush.bf16.msra.mxu0 %v1364
    %1859 = vmatpush.bf16.msra.mxu0 %v1362
    %1860 = vmatpush.bf16.msra.mxu0 %v1360
    %1861 = vmatmul.bf16.gmra.mxu0 %v1851
    %v1862 = vpop.f32.mrf.mxu0
    %v1863 = vadd.f32 %v1848, %v1862
    %v1864 = vpop.f32.mrf.mxu0
    %1865 = vdwg.mxu0
    %1866 = vmatpush.bf16.msra.mxu0 0
    %1867 = vmatpush.bf16.msra.mxu0 0
    %1868 = vmatpush.bf16.msra.mxu0 0
    %1869 = vmatpush.bf16.msra.mxu0 0
    %1870 = vmatpush.bf16.msra.mxu0 %v1367
    %1871 = vmatpush.bf16.msra.mxu0 %v1365
    %1872 = vmatpush.bf16.msra.mxu0 %v1363
    %1873 = vmatpush.bf16.msra.mxu0 %v1361
    %1874 = vmatmul.bf16.gmra.mxu0 %v1851
    %v1875 = vpop.f32.mrf.mxu0
    %v1876 = vadd.f32 %v1849, %v1875
    %v1877 = vpop.f32.mrf.mxu0
    %1878 = vdwg.mxu0
    %v1879 = vxor.u32 %v1863, 2147483648
    %v1880 = vxor.u32 %v1876, 2147483648
    %v1881 = vmul.f32 %v1879, 1.442695
    %v1882 = vpow.pop %v1881
    %v1883 = vmul.f32 %v1880, 1.442695
    %v1884 = vpow.pop %v1883
    %v1885 = vadd.f32 %v1882, 1.0
    %v1886 = vadd.f32 %v1884, 1.0
    %v1887 = vrcp.pop %v1885
    %v1888 = vmul.f32 %v1885, %v1887
    %v1889 = vsub.f32 1.0, %v1888
    %v1890 = vmul.f32 %v1887, %v1889
    %v1891 = vadd.f32 %v1887, %v1890
    %vm1892 = vweird.f32 %v1885
    %vm1893 = vweird.f32 %v1887
    %vm1894 = vmor %vm1892, %vm1893
    %v1895 = vsel %vm1894, %v1887, %v1891
    %v1896 = vand.u32 2147483647, %v1885
    %vm1897 = vcmp.eq.f32.partialorder %v1896, 8.507059e+37
    %v1898 = vand.u32 %v1885, 2147483648
    %v1899 = vor.u32 1.1754944e-38, %v1898
    %v1900 = vsel %vm1897, %v1899, %v1895
    %v1901 = vmul.f32 1.0, %v1900
    %v1902 = vrcp.pop %v1886
    %v1903 = vmul.f32 %v1886, %v1902
    %v1904 = vsub.f32 1.0, %v1903
    %v1905 = vmul.f32 %v1902, %v1904
    %v1906 = vadd.f32 %v1902, %v1905
    %vm1907 = vweird.f32 %v1886
    %vm1908 = vweird.f32 %v1902
    %vm1909 = vmor %vm1907, %vm1908
    %v1910 = vsel %vm1909, %v1902, %v1906
    %v1911 = vand.u32 2147483647, %v1886
    %vm1912 = vcmp.eq.f32.partialorder %v1911, 8.507059e+37
    %v1913 = vand.u32 %v1886, 2147483648
    %v1914 = vor.u32 1.1754944e-38, %v1913
    %v1915 = vsel %vm1912, %v1914, %v1910
    %v1916 = vmul.f32 1.0, %v1915
    %v1917 = vtanh.pop %v1876
    %1919 = vrot.lane.b32.xlu0 %v1845, 64
    %v1920 = vpop.permute.xlu0 %1919
    %v1922 = vmul.f32 %v1901, %v1920
    %v1923 = vmul.f32 %v1901, %v1917
    %1925 = vrot.lane.b32.xlu0 %v1923, 64
    %v1926 = vpop.permute.xlu0 %1925
    %v1928 = vadd.f32 %v1922, %v1926
    %v1929 = vtanh.pop %v1928
    %v1930 = vmul.f32 %v1916, %v1929
    %1932 = vrot.lane.b32.xlu0 %v1930, 64
    %v1933 = vpop.permute.xlu0 %1932
    %v1935 = vsel %vm861, %v1933, %v1840
    %1937 = vrot.lane.b32.xlu0 %v1928, 64
    %v1938 = vpop.permute.xlu0 %1937
    %v1940 = vsel %vm861, %v1938, %v1845
    %v1941 = vpack.c.bf16 %v1935, %v1935
    %v1942 = vsel %vm297, %v1462, %v1461
    %v1943 = vunpack.c.l.bf16 %v1942
    %v1944 = vunpack.c.h.bf16 %v1942
    %v1946 = vsel %vm347, %v1941, 0
    %1948 = vmatpush.bf16.msra.mxu0 0
    %1949 = vmatpush.bf16.msra.mxu0 0
    %1950 = vmatpush.bf16.msra.mxu0 0
    %1951 = vmatpush.bf16.msra.mxu0 0
    %1952 = vmatpush.bf16.msra.mxu0 %v1366
    %1953 = vmatpush.bf16.msra.mxu0 %v1364
    %1954 = vmatpush.bf16.msra.mxu0 %v1362
    %1955 = vmatpush.bf16.msra.mxu0 %v1360
    %1956 = vmatmul.bf16.gmra.mxu0 %v1946
    %v1957 = vpop.f32.mrf.mxu0
    %v1958 = vadd.f32 %v1943, %v1957
    %v1959 = vpop.f32.mrf.mxu0
    %1960 = vdwg.mxu0
    %1961 = vmatpush.bf16.msra.mxu0 0
    %1962 = vmatpush.bf16.msra.mxu0 0
    %1963 = vmatpush.bf16.msra.mxu0 0
    %1964 = vmatpush.bf16.msra.mxu0 0
    %1965 = vmatpush.bf16.msra.mxu0 %v1367
    %1966 = vmatpush.bf16.msra.mxu0 %v1365
    %1967 = vmatpush.bf16.msra.mxu0 %v1363
    %1968 = vmatpush.bf16.msra.mxu0 %v1361
    %1969 = vmatmul.bf16.gmra.mxu0 %v1946
    %v1970 = vpop.f32.mrf.mxu0
    %v1971 = vadd.f32 %v1944, %v1970
    %v1972 = vpop.f32.mrf.mxu0
    %1973 = vdwg.mxu0
    %v1974 = vxor.u32 %v1958, 2147483648
    %v1975 = vxor.u32 %v1971, 2147483648
    %v1976 = vmul.f32 %v1974, 1.442695
    %v1977 = vpow.pop %v1976
    %v1978 = vmul.f32 %v1975, 1.442695
    %v1979 = vpow.pop %v1978
    %v1980 = vadd.f32 %v1977, 1.0
    %v1981 = vadd.f32 %v1979, 1.0
    %v1982 = vrcp.pop %v1980
    %v1983 = vmul.f32 %v1980, %v1982
    %v1984 = vsub.f32 1.0, %v1983
    %v1985 = vmul.f32 %v1982, %v1984
    %v1986 = vadd.f32 %v1982, %v1985
    %vm1987 = vweird.f32 %v1980
    %vm1988 = vweird.f32 %v1982
    %vm1989 = vmor %vm1987, %vm1988
    %v1990 = vsel %vm1989, %v1982, %v1986
    %v1991 = vand.u32 2147483647, %v1980
    %vm1992 = vcmp.eq.f32.partialorder %v1991, 8.507059e+37
    %v1993 = vand.u32 %v1980, 2147483648
    %v1994 = vor.u32 1.1754944e-38, %v1993
    %v1995 = vsel %vm1992, %v1994, %v1990
    %v1996 = vmul.f32 1.0, %v1995
    %v1997 = vrcp.pop %v1981
    %v1998 = vmul.f32 %v1981, %v1997
    %v1999 = vsub.f32 1.0, %v1998
    %v2000 = vmul.f32 %v1997, %v1999
    %v2001 = vadd.f32 %v1997, %v2000
    %vm2002 = vweird.f32 %v1981
    %vm2003 = vweird.f32 %v1997
    %vm2004 = vmor %vm2002, %vm2003
    %v2005 = vsel %vm2004, %v1997, %v2001
    %v2006 = vand.u32 2147483647, %v1981
    %vm2007 = vcmp.eq.f32.partialorder %v2006, 8.507059e+37
    %v2008 = vand.u32 %v1981, 2147483648
    %v2009 = vor.u32 1.1754944e-38, %v2008
    %v2010 = vsel %vm2007, %v2009, %v2005
    %v2011 = vmul.f32 1.0, %v2010
    %v2012 = vtanh.pop %v1971
    %2014 = vrot.lane.b32.xlu0 %v1940, 64
    %v2015 = vpop.permute.xlu0 %2014
    %v2017 = vmul.f32 %v1996, %v2015
    %v2018 = vmul.f32 %v1996, %v2012
    %2020 = vrot.lane.b32.xlu0 %v2018, 64
    %v2021 = vpop.permute.xlu0 %2020
    %v2023 = vadd.f32 %v2017, %v2021
    %v2024 = vtanh.pop %v2023
    %v2025 = vmul.f32 %v2011, %v2024
    %2027 = vrot.lane.b32.xlu0 %v2025, 64
    %v2028 = vpop.permute.xlu0 %2027
    %v2030 = vsel %vm962, %v2028, %v1935
    %2032 = vrot.lane.b32.xlu0 %v2023, 64
    %v2033 = vpop.permute.xlu0 %2032
    %v2035 = vsel %vm962, %v2033, %v1940
    %v2036 = vpack.c.bf16 %v2030, %v2030
    %v2037 = vsel %vm297, %v1332, %v1331
    %v2038 = vunpack.c.l.bf16 %v2037
    %v2039 = vunpack.c.h.bf16 %v2037
    %v2041 = vsel %vm347, %v2036, 0
    %2043 = vmatpush.bf16.msra.mxu0 0
    %2044 = vmatpush.bf16.msra.mxu0 0
    %2045 = vmatpush.bf16.msra.mxu0 0
    %2046 = vmatpush.bf16.msra.mxu0 0
    %2047 = vmatpush.bf16.msra.mxu0 %v1366
    %2048 = vmatpush.bf16.msra.mxu0 %v1364
    %2049 = vmatpush.bf16.msra.mxu0 %v1362
    %2050 = vmatpush.bf16.msra.mxu0 %v1360
    %2051 = vmatmul.bf16.gmra.mxu0 %v2041
    %v2052 = vpop.f32.mrf.mxu0
    %v2053 = vadd.f32 %v2038, %v2052
    %v2054 = vpop.f32.mrf.mxu0
    %2055 = vdwg.mxu0
    %2056 = vmatpush.bf16.msra.mxu0 0
    %2057 = vmatpush.bf16.msra.mxu0 0
    %2058 = vmatpush.bf16.msra.mxu0 0
    %2059 = vmatpush.bf16.msra.mxu0 0
    %2060 = vmatpush.bf16.msra.mxu0 %v1367
    %2061 = vmatpush.bf16.msra.mxu0 %v1365
    %2062 = vmatpush.bf16.msra.mxu0 %v1363
    %2063 = vmatpush.bf16.msra.mxu0 %v1361
    %2064 = vmatmul.bf16.gmra.mxu0 %v2041
    %v2065 = vpop.f32.mrf.mxu0
    %v2066 = vadd.f32 %v2039, %v2065
    %v2067 = vpop.f32.mrf.mxu0
    %2068 = vdwg.mxu0
    %v2069 = vxor.u32 %v2053, 2147483648
    %v2070 = vxor.u32 %v2066, 2147483648
    %v2071 = vmul.f32 %v2069, 1.442695
    %v2072 = vpow.pop %v2071
    %v2073 = vmul.f32 %v2070, 1.442695
    %v2074 = vpow.pop %v2073
    %v2075 = vadd.f32 %v2072, 1.0
    %v2076 = vadd.f32 %v2074, 1.0
    %v2077 = vrcp.pop %v2075
    %v2078 = vmul.f32 %v2075, %v2077
    %v2079 = vsub.f32 1.0, %v2078
    %v2080 = vmul.f32 %v2077, %v2079
    %v2081 = vadd.f32 %v2077, %v2080
    %vm2082 = vweird.f32 %v2075
    %vm2083 = vweird.f32 %v2077
    %vm2084 = vmor %vm2082, %vm2083
    %v2085 = vsel %vm2084, %v2077, %v2081
    %v2086 = vand.u32 2147483647, %v2075
    %vm2087 = vcmp.eq.f32.partialorder %v2086, 8.507059e+37
    %v2088 = vand.u32 %v2075, 2147483648
    %v2089 = vor.u32 1.1754944e-38, %v2088
    %v2090 = vsel %vm2087, %v2089, %v2085
    %v2091 = vmul.f32 1.0, %v2090
    %v2092 = vrcp.pop %v2076
    %v2093 = vmul.f32 %v2076, %v2092
    %v2094 = vsub.f32 1.0, %v2093
    %v2095 = vmul.f32 %v2092, %v2094
    %v2096 = vadd.f32 %v2092, %v2095
    %vm2097 = vweird.f32 %v2076
    %vm2098 = vweird.f32 %v2092
    %vm2099 = vmor %vm2097, %vm2098
    %v2100 = vsel %vm2099, %v2092, %v2096
    %v2101 = vand.u32 2147483647, %v2076
    %vm2102 = vcmp.eq.f32.partialorder %v2101, 8.507059e+37
    %v2103 = vand.u32 %v2076, 2147483648
    %v2104 = vor.u32 1.1754944e-38, %v2103
    %v2105 = vsel %vm2102, %v2104, %v2100
    %v2106 = vmul.f32 1.0, %v2105
    %v2107 = vtanh.pop %v2066
    %2109 = vrot.lane.b32.xlu0 %v2035, 64
    %v2110 = vpop.permute.xlu0 %2109
    %v2112 = vmul.f32 %v2091, %v2110
    %v2113 = vmul.f32 %v2091, %v2107
    %2115 = vrot.lane.b32.xlu0 %v2113, 64
    %v2116 = vpop.permute.xlu0 %2115
    %v2118 = vadd.f32 %v2112, %v2116
    %v2119 = vtanh.pop %v2118
    %v2120 = vmul.f32 %v2106, %v2119
    %2122 = vrot.lane.b32.xlu0 %v2120, 64
    %v2123 = vpop.permute.xlu0 %2122
    %v2125 = vsel %vm1063, %v2123, %v2030
    %v2126 = vpack.c.bf16 %v2125, %v2125
    %v2127 = vld [vmem:[%s8] sm:$0xf]
    %v2128 = vld [vmem:[%s8 + $0x4] sm:$0xf]
    %v2129 = vld [vmem:[%s8 + $0x8] sm:$0xf]
    %v2130 = vld [vmem:[%s8 + $0xc] sm:$0xf]
    %v2131 = vld [vmem:[%s8 + $0x10] sm:$0xf]
    %v2132 = vld [vmem:[%s8 + $0x14] sm:$0xf]
    %v2133 = vld [vmem:[%s8 + $0x18] sm:$0xf]
    %v2134 = vld [vmem:[%s8 + $0x1c] sm:$0xf]
    %v2135 = vld [vmem:[%s9] sm:$0x1]
    %v2137 = vperm.slane %v2135, 0
    %v2147 = vunpack.c.l.b16 %v2127
    %v2148 = vunpack.c.l.b16 %v2128
    %v2149 = vunpack.c.l.b16 %v2129
    %v2150 = vunpack.c.l.b16 %v2130
    %v2151 = vunpack.c.l.b16 %v2131
    %v2152 = vunpack.c.l.b16 %v2132
    %v2153 = vunpack.c.l.b16 %v2133
    %v2154 = vunpack.c.l.b16 %v2134
    %v2155 = vpack.c.b16 %v2148, %v2147
    %v2156 = vpack.c.b16 %v2150, %v2149
    %v2157 = vpack.c.b16 %v2152, %v2151
    %v2158 = vpack.c.b16 %v2154, %v2153
    %v2164 = vsel %vm347, %v2126, 0
    %2166 = vmatpush.bf16.msra.mxu0 0
    %2167 = vmatpush.bf16.msra.mxu0 0
    %2168 = vmatpush.bf16.msra.mxu0 0
    %2169 = vmatpush.bf16.msra.mxu0 0
    %2170 = vmatpush.bf16.msra.mxu0 %v2158
    %2171 = vmatpush.bf16.msra.mxu0 %v2157
    %2172 = vmatpush.bf16.msra.mxu0 %v2156
    %2173 = vmatpush.bf16.msra.mxu0 %v2155
    %2174 = vmatmul.bf16.gmra.mxu0 %v2164
    %v2175 = vpop.f32.mrf.mxu0
    %v2176 = vadd.f32 %v2137, %v2175
    %v2177 = vpop.f32.mrf.mxu0
    %2178 = vdwg.mxu0
    %2179 = vst [vmem:[#allocation13] sm:$0xff] %v2176
    // Predicated region
    $region62: #{tpu_custom_call.1} parent=1 // pred_check
      _
    $region63: #{tpu_custom_call.1} parent=1 // pred_check_branch
      %2181 = sbr.rel (0) target = $region65
    $region64: #{tpu_custom_call.1} parent=1 // pred_region
      %2183 = vsyncadd [#allocation6], 0
      %s2185 = sshll.u32 [#allocation13], 4
      %s2186 = int_to_ptr.vmem [resolvable:$true] %s2185
      %s2187 = sshll.u32 %s10, 4
      %s2188 = int_to_ptr.hbm [resolvable:$true] %s2187
      %2190 = dma.vmem_to_hbm [thread:$0]  %s2186, 128, %s2188, [#allocation6]
    $region65: #{tpu_custom_call.1} parent=1 // pred_fallthru
      _
    // Predicated region
    $region66: #{tpu_custom_call.1} parent=1 // pred_check
      _
    $region67: #{tpu_custom_call.1} parent=1 // pred_check_branch
      %2192 = sbr.rel (0) target = $region69
    $region68: #{tpu_custom_call.1} parent=1 // pred_region
      %2194 = dma.done [#allocation6], 128
    $region69: #{tpu_custom_call.1} parent=1 // pred_fallthru
      _
    %2195 = vsyncpa [#allocation5], 1
    %2196 = vsyncpa [#allocation8], 1
    %2197 = vsyncpa [#allocation11], 1
    %2198 = vsyncpa [#allocation6], 1

</llo_original>
